<compile_context>
chip_gen: v6e
topology: v6e:2x2x1
jax: 0.10.0
libtpu: 0.0.40
codegen_flags: <defaults>
</compile_context>

<pallas_src>
import math

import jax
import jax.numpy as jnp
from jax import lax
from jax.experimental import pallas as pl
from jax.experimental.pallas import tpu as pltpu


def _qgelu(x):
    return x * jax.nn.sigmoid(1.702 * x)


def _layernorm(x, w, b, eps=1e-5):
    x = x.astype(jnp.float32)
    mu = jnp.mean(x, axis=-1, keepdims=True)
    var = jnp.mean(jnp.square(x - mu), axis=-1, keepdims=True)
    return (x - mu) * lax.rsqrt(var + eps) * w + b


def _make_fused_kernel(B, F, P2, M, E, n_head, scale, pca_iters):
    S = 2 * F + 1
    BF = B * F
    Dh = M // n_head
    inv_sqrt_d = 1.0 / math.sqrt(Dh)

    def kernel(x_ref, kbias_ref,
               w_down, b_down, cc, pos,
               lnp_w, lnp_b, ln1_w, ln1_b,
               w_qkv, b_qkv, w_o, b_o,
               ln2_w, ln2_b, w_fc, b_fc, w_pj, b_pj,
               w_up, b_up, o_ref):
        f32 = jnp.float32

        # ---- 1. down projection + QuickGELU over ALL tokens in one MXU pass ----
        x2d = x_ref[...].astype(f32)                                     # (N*BF, E)
        down = _qgelu(jnp.dot(x2d, w_down[...], preferred_element_type=f32)
                      + b_down[...])                                     # (N*BF, M)
        cls_down = down[:BF]                                             # (BF, M)
        patch2d = down[BF:]                                              # (P2*BF, M)
        patch3 = patch2d.reshape(P2, BF, M)                              # (P2, BF, M)

        # ---- 2. PCA pooling: rank-1, matrix-free power iteration --------------
        # Per (b,f): A = patch3[:, bf, :].T  (M x P2); columns centered exactly as
        # torch.pca_lowrank(center=True); pooled = A @ v (uncentered A, as torch).
        # TODO(synk): torch.pca_lowrank is a *randomized* rank-1 SVD (niter=2); we
        #             use a deterministic power iteration (sign is arbitrary, as in
        #             the reference).
        col_mean = jnp.mean(patch3, axis=-1, keepdims=True)              # (P2, BF, 1)
        centered = patch3 - col_mean                                     # (P2, BF, M)
        v = jnp.full((P2, BF, 1), 1.0 / math.sqrt(P2), f32)
        for _ in range(pca_iters):
            u = jnp.sum(centered * v, axis=0)                            # (BF, M)
            v = jnp.sum(centered * u[None, :, :], axis=-1, keepdims=True)
            nrm = jnp.sum(v * v, axis=0, keepdims=True)                  # (1, BF, 1)
            v = v * lax.rsqrt(nrm + 1e-12)
        patch_pca = jnp.sum(patch3 * v, axis=0)                          # (BF, M)

        # ---- 3. temporal sequence: [cc, cls, patch_pca] per batch, +pos, ln_pre --
        pieces = []
        for b in range(B):
            pieces += [cc[...],
                       cls_down[b * F:(b + 1) * F],
                       patch_pca[b * F:(b + 1) * F]]
        seq = jnp.concatenate(pieces, axis=0)                            # (B*S, M)
        pos_all = jnp.concatenate([pos[...]] * B, axis=0)                # (B*S, M)
        xs = _layernorm(seq + pos_all, lnp_w[...], lnp_b[...])           # ln_pre

        # ---- 4. adapter transformer block (pre-LN MHA + MLP, residuals) --------
        lnx = _layernorm(xs, ln1_w[...], ln1_b[...])
        qkv = jnp.dot(lnx, w_qkv[...], preferred_element_type=f32) + b_qkv[...]
        q, k, vv = qkv[:, :M], qkv[:, M:2 * M], qkv[:, 2 * M:3 * M]

        lane = lax.broadcasted_iota(jnp.int32, (1, M), 1)
        kbias = kbias_ref[...].astype(f32)                               # (B, S)
        ao_rows = []
        for b in range(B):
            qb = q[b * S:(b + 1) * S]
            kb = k[b * S:(b + 1) * S]
            vb = vv[b * S:(b + 1) * S]
            kbias_b = kbias[b:b + 1, :]                                  # (1, S)
            ao_b = jnp.zeros((S, M), f32)
            for h in range(n_head):
                # head selection via lane masks -> no lane-slice / concatenate
                hmask = ((lane >= h * Dh) & (lane < (h + 1) * Dh)).astype(f32)
                s = lax.dot_general(qb * hmask, kb, (((1,), (1,)), ((), ())),
                                    preferred_element_type=f32) * inv_sqrt_d
                s = s + kbias_b
                s = s - jnp.max(s, axis=-1, keepdims=True)
                e = jnp.exp(s)
                p = e * pl.reciprocal(jnp.sum(e, axis=-1, keepdims=True),
                                      approx=True)
                ao_b = ao_b + jnp.dot(p, vb * hmask, preferred_element_type=f32)
            ao_rows.append(ao_b)
        ao = jnp.concatenate(ao_rows, axis=0)                            # (B*S, M)
        xs = xs + jnp.dot(ao, w_o[...], preferred_element_type=f32) + b_o[...]

        h1 = _qgelu(jnp.dot(_layernorm(xs, ln2_w[...], ln2_b[...]), w_fc[...],
                            preferred_element_type=f32) + b_fc[...])
        xs = xs + jnp.dot(h1, w_pj[...], preferred_element_type=f32) + b_pj[...]
        seq_out = _qgelu(xs)                                             # (B*S, M)

        # ---- 5. up projection + bias + scale; lane-dense (N*BF, E) output ------
        cls_rows = [seq_out[b * S + 1: b * S + 1 + F] for b in range(B)]
        up_in = jnp.concatenate(cls_rows + [patch2d], axis=0)            # (N*BF, M)
        delta = scale * (jnp.dot(up_in, w_up[...], preferred_element_type=f32)
                         + b_up[...])                                    # (N*BF, E)
        o_ref[...] = delta.astype(o_ref.dtype)

    return kernel


def video_adapter_forward(x, casual_mask, params, *, n_head=2, scale=0.1,
                          pca_iters=4):
    """x: (tokens, B*F, E)  casual_mask: (B, F)  ->  delta_x: (tokens, B*F, E)."""
    N, BF, E = x.shape
    B, F = casual_mask.shape
    assert BF == B * F
    P2 = N - 1
    M = params["w_down"].shape[1]
    S = 2 * F + 1

    x2d = x.reshape(N * BF, E)                       # contiguous -> free reshape
    pos = params["pos_emb"][:S]                      # (S, M)
    mask = jnp.concatenate(
        [jnp.ones((B, 1), x.dtype), jnp.tile(casual_mask.astype(x.dtype), (1, 2))],
        axis=1)                                      # (B, S)
    key_bias = (1.0 - mask) * (-1.0e6)               # additive key mask

    operands = [
        x2d, key_bias,
        params["w_down"], params["b_down"], params["cc"], pos,
        params["ln_pre_w"], params["ln_pre_b"], params["ln1_w"], params["ln1_b"],
        params["w_qkv"], params["b_qkv"], params["wo"], params["bo"],
        params["ln2_w"], params["ln2_b"],
        params["w_fc"], params["b_fc"], params["w_pj"], params["b_pj"],
        params["w_up"], params["b_up"],
    ]

    def fspec(shape):
        nd = len(shape)
        return pl.BlockSpec(shape, lambda i, _nd=nd: (0,) * _nd)

    kernel = _make_fused_kernel(B, F, P2, M, E, n_head, scale, pca_iters)
    delta2d = pl.pallas_call(
        kernel,
        out_shape=jax.ShapeDtypeStruct((N * BF, E), x.dtype),
        grid=(1,),
        in_specs=[fspec(op.shape) for op in operands],
        out_specs=fspec((N * BF, E)),
        compiler_params=pltpu.CompilerParams(dimension_semantics=("arbitrary",)),
    )(*operands)
    return delta2d.reshape(N, BF, E)


# ---------------------------------------------------------------------------
# Deterministic parameter construction (shapes follow VideoAdapter.__init__)
# ---------------------------------------------------------------------------
def make_params(key, E, M, seq_len):
    ks = jax.random.split(key, 10)
    attn_std = E ** (-0.5)
    proj_std = (2 * E) ** (-0.5)
    fc_std = (2 * E) ** (-0.5)
    bound = 1.0 / math.sqrt(E)
    f32 = jnp.float32
    # NOTE: the reference init zeroes up.weight/up.bias (output would be identically
    # 0); small deterministic values are used instead so the output is non-trivial.
    return {
        "w_down": jax.random.uniform(ks[0], (E, M), f32, -bound, bound),
        "b_down": jnp.zeros((1, M), f32),
        "w_up": 0.02 * jax.random.normal(ks[1], (M, E), f32),
        "b_up": 0.02 * jax.random.normal(ks[2], (1, E), f32),
        "pos_emb": 0.01 * jax.random.normal(ks[3], (seq_len * 2 + 1, M), f32),
        "cc": (M ** -0.5) * jax.random.normal(ks[4], (1, M), f32),
        "ln_pre_w": jnp.ones((1, M), f32), "ln_pre_b": jnp.zeros((1, M), f32),
        "ln1_w": jnp.ones((1, M), f32), "ln1_b": jnp.zeros((1, M), f32),
        "ln2_w": jnp.ones((1, M), f32), "ln2_b": jnp.zeros((1, M), f32),
        # merged (q|k|v) in-proj, stored transposed for right-multiplication
        "w_qkv": attn_std * jax.random.normal(ks[5], (M, 3 * M), f32),
        "b_qkv": jnp.zeros((1, 3 * M), f32),
        "wo": proj_std * jax.random.normal(ks[6], (M, M), f32),
        "bo": jnp.zeros((1, M), f32),
        "w_fc": fc_std * jax.random.normal(ks[7], (M, 4 * M), f32),
        "b_fc": jnp.zeros((1, 4 * M), f32),
        "w_pj": proj_std * jax.random.normal(ks[8], (4 * M, M), f32),
        "b_pj": jnp.zeros((1, M), f32),
    }


if __name__ == "__main__":
    E, M, n_head, seq_len, scale = 128, 32, 2, 12, 0.1
    B, F, patch_num = 2, 4, 4
    N = patch_num * patch_num + 1                  # tokens = 17

    key = jax.random.PRNGKey(0)
    kx, kp = jax.random.split(key)
    x = jax.random.normal(kx, (N, B * F, E), jnp.float32)          # (17, 8, 128)
    casual_mask = jnp.array([[1, 1, 1, 1], [1, 1, 1, 0]], jnp.float32)
    params = make_params(kp, E, M, seq_len)

    fwd = jax.jit(lambda xx, mm, pp: video_adapter_forward(
        xx, mm, pp, n_head=n_head, scale=scale))
    delta_x = fwd(x, casual_mask, params)
    jax.block_until_ready(delta_x)

    assert delta_x.shape == (N, B * F, E), delta_x.shape
    assert bool(jnp.all(jnp.isfinite(delta_x)))
    print("KERNEL_OK")
</pallas_src>

<mosaic_0001>
module attributes {stable_mosaic.version = 11 : i64} {
  func.func @kernel(%arg0: i32, %arg1: memref<136x128xf32, #tpu.memory_space<vmem>>, %arg2: memref<2x9xf32, #tpu.memory_space<vmem>>, %arg3: memref<128x32xf32, #tpu.memory_space<vmem>>, %arg4: memref<1x32xf32, #tpu.memory_space<vmem>>, %arg5: memref<1x32xf32, #tpu.memory_space<vmem>>, %arg6: memref<9x32xf32, #tpu.memory_space<vmem>>, %arg7: memref<1x32xf32, #tpu.memory_space<vmem>>, %arg8: memref<1x32xf32, #tpu.memory_space<vmem>>, %arg9: memref<1x32xf32, #tpu.memory_space<vmem>>, %arg10: memref<1x32xf32, #tpu.memory_space<vmem>>, %arg11: memref<32x96xf32, #tpu.memory_space<vmem>>, %arg12: memref<1x96xf32, #tpu.memory_space<vmem>>, %arg13: memref<32x32xf32, #tpu.memory_space<vmem>>, %arg14: memref<1x32xf32, #tpu.memory_space<vmem>>, %arg15: memref<1x32xf32, #tpu.memory_space<vmem>>, %arg16: memref<1x32xf32, #tpu.memory_space<vmem>>, %arg17: memref<32x128xf32, #tpu.memory_space<vmem>>, %arg18: memref<1x128xf32, #tpu.memory_space<vmem>>, %arg19: memref<128x32xf32, #tpu.memory_space<vmem>>, %arg20: memref<1x32xf32, #tpu.memory_space<vmem>>, %arg21: memref<32x128xf32, #tpu.memory_space<vmem>>, %arg22: memref<1x128xf32, #tpu.memory_space<vmem>>, %arg23: memref<136x128xf32, #tpu.memory_space<vmem>>) attributes {dimension_semantics = [#tpu.dimension_semantics<arbitrary>], iteration_bounds = array<i64: 1>, scalar_prefetch = 0 : i64, scratch_operands = 0 : i64, tpu.core_type = #tpu.core_type<tc>, window_params = [{pipeline_mode = #tpu.pipeline_mode<synchronous>, transform_indices = @transform_0, window_bounds = array<i64: 136, 128>}, {pipeline_mode = #tpu.pipeline_mode<synchronous>, transform_indices = @transform_1, window_bounds = array<i64: 2, 9>}, {pipeline_mode = #tpu.pipeline_mode<synchronous>, transform_indices = @transform_2, window_bounds = array<i64: 128, 32>}, {pipeline_mode = #tpu.pipeline_mode<synchronous>, transform_indices = @transform_3, window_bounds = array<i64: 1, 32>}, {pipeline_mode = #tpu.pipeline_mode<synchronous>, transform_indices = @transform_4, window_bounds = array<i64: 1, 32>}, {pipeline_mode = #tpu.pipeline_mode<synchronous>, transform_indices = @transform_5, window_bounds = array<i64: 9, 32>}, {pipeline_mode = #tpu.pipeline_mode<synchronous>, transform_indices = @transform_6, window_bounds = array<i64: 1, 32>}, {pipeline_mode = #tpu.pipeline_mode<synchronous>, transform_indices = @transform_7, window_bounds = array<i64: 1, 32>}, {pipeline_mode = #tpu.pipeline_mode<synchronous>, transform_indices = @transform_8, window_bounds = array<i64: 1, 32>}, {pipeline_mode = #tpu.pipeline_mode<synchronous>, transform_indices = @transform_9, window_bounds = array<i64: 1, 32>}, {pipeline_mode = #tpu.pipeline_mode<synchronous>, transform_indices = @transform_10, window_bounds = array<i64: 32, 96>}, {pipeline_mode = #tpu.pipeline_mode<synchronous>, transform_indices = @transform_11, window_bounds = array<i64: 1, 96>}, {pipeline_mode = #tpu.pipeline_mode<synchronous>, transform_indices = @transform_12, window_bounds = array<i64: 32, 32>}, {pipeline_mode = #tpu.pipeline_mode<synchronous>, transform_indices = @transform_13, window_bounds = array<i64: 1, 32>}, {pipeline_mode = #tpu.pipeline_mode<synchronous>, transform_indices = @transform_14, window_bounds = array<i64: 1, 32>}, {pipeline_mode = #tpu.pipeline_mode<synchronous>, transform_indices = @transform_15, window_bounds = array<i64: 1, 32>}, {pipeline_mode = #tpu.pipeline_mode<synchronous>, transform_indices = @transform_16, window_bounds = array<i64: 32, 128>}, {pipeline_mode = #tpu.pipeline_mode<synchronous>, transform_indices = @transform_17, window_bounds = array<i64: 1, 128>}, {pipeline_mode = #tpu.pipeline_mode<synchronous>, transform_indices = @transform_18, window_bounds = array<i64: 128, 32>}, {pipeline_mode = #tpu.pipeline_mode<synchronous>, transform_indices = @transform_19, window_bounds = array<i64: 1, 32>}, {pipeline_mode = #tpu.pipeline_mode<synchronous>, transform_indices = @transform_20, window_bounds = array<i64: 32, 128>}, {pipeline_mode = #tpu.pipeline_mode<synchronous>, transform_indices = @transform_21, window_bounds = array<i64: 1, 128>}, {pipeline_mode = #tpu.pipeline_mode<synchronous>, transform_indices = @transform_22, window_bounds = array<i64: 136, 128>}]} {
    %c0 = arith.constant 0 : index
    %c0_0 = arith.constant 0 : index
    %0 = vector.load %arg1[%c0, %c0_0] : memref<136x128xf32, #tpu.memory_space<vmem>>, vector<136x128xf32>
    %c0_1 = arith.constant 0 : index
    %c0_2 = arith.constant 0 : index
    %1 = vector.load %arg3[%c0_1, %c0_2] : memref<128x32xf32, #tpu.memory_space<vmem>>, vector<128x32xf32>
    %cst = arith.constant dense<0.000000e+00> : vector<136x32xf32>
    %2 = tpu.matmul %0, %1, %cst {dimension_numbers = #tpu.dot_dimension_numbers<[1], [0], [0], [1], [0, 0, 1, 1], [], []>} : vector<136x128xf32>, vector<128x32xf32>, vector<136x32xf32> -> vector<136x32xf32>
    %c0_3 = arith.constant 0 : index
    %c0_4 = arith.constant 0 : index
    %3 = vector.load %arg4[%c0_3, %c0_4] : memref<1x32xf32, #tpu.memory_space<vmem>>, vector<1x32xf32>
    %4 = vector.broadcast %3 : vector<1x32xf32> to vector<136x32xf32>
    %5 = arith.addf %2, %4 : vector<136x32xf32>
    %cst_5 = arith.constant 1.702000e+00 : f32
    %6 = vector.broadcast %cst_5 : f32 to vector<136x32xf32>
    %7 = arith.mulf %6, %5 : vector<136x32xf32>
    %8 = arith.negf %7 : vector<136x32xf32>
    %9 = math.exp %8 : vector<136x32xf32>
    %cst_6 = arith.constant 1.000000e+00 : f32
    %10 = vector.broadcast %cst_6 : f32 to vector<136x32xf32>
    %11 = arith.addf %10, %9 : vector<136x32xf32>
    %12 = arith.divf %10, %11 : vector<136x32xf32>
    %13 = arith.mulf %5, %12 : vector<136x32xf32>
    %14 = vector.extract_strided_slice %13 {offsets = [0, 0], sizes = [8, 32], strides = [1, 1]} : vector<136x32xf32> to vector<8x32xf32>
    %15 = vector.extract_strided_slice %13 {offsets = [8, 0], sizes = [128, 32], strides = [1, 1]} : vector<136x32xf32> to vector<128x32xf32>
    %16 = vector.shape_cast %15 : vector<128x32xf32> to vector<16x8x32xf32>
    %cst_7 = arith.constant dense<0.000000e+00> : vector<16x8xf32>
    %17 = vector.multi_reduction <add>, %16, %cst_7 [2] : vector<16x8x32xf32> to vector<16x8xf32>
    %18 = vector.shape_cast %17 : vector<16x8xf32> to vector<16x8x1xf32>
    %cst_8 = arith.constant 3.200000e+01 : f32
    %19 = vector.broadcast %cst_8 : f32 to vector<16x8x1xf32>
    %20 = arith.divf %18, %19 : vector<16x8x1xf32>
    %21 = vector.broadcast %20 : vector<16x8x1xf32> to vector<16x8x32xf32>
    %22 = arith.subf %16, %21 : vector<16x8x32xf32>
    %cst_9 = arith.constant 2.500000e-01 : f32
    %23 = vector.broadcast %cst_9 : f32 to vector<16x8x1xf32>
    %24 = vector.broadcast %23 : vector<16x8x1xf32> to vector<16x8x32xf32>
    %25 = arith.mulf %22, %24 : vector<16x8x32xf32>
    %cst_10 = arith.constant dense<0.000000e+00> : vector<8x32xf32>
    %26 = vector.multi_reduction <add>, %25, %cst_10 [0] : vector<16x8x32xf32> to vector<8x32xf32>
    %27 = vector.shape_cast %26 : vector<8x32xf32> to vector<1x8x32xf32>
    %28 = vector.broadcast %27 : vector<1x8x32xf32> to vector<16x8x32xf32>
    %29 = arith.mulf %22, %28 : vector<16x8x32xf32>
    %cst_11 = arith.constant dense<0.000000e+00> : vector<16x8xf32>
    %30 = vector.multi_reduction <add>, %29, %cst_11 [2] : vector<16x8x32xf32> to vector<16x8xf32>
    %31 = vector.shape_cast %30 : vector<16x8xf32> to vector<16x8x1xf32>
    %32 = arith.mulf %31, %31 : vector<16x8x1xf32>
    %cst_12 = arith.constant dense<0.000000e+00> : vector<8x1xf32>
    %33 = vector.multi_reduction <add>, %32, %cst_12 [0] : vector<16x8x1xf32> to vector<8x1xf32>
    %34 = vector.shape_cast %33 : vector<8x1xf32> to vector<1x8x1xf32>
    %cst_13 = arith.constant 9.99999996E-13 : f32
    %35 = vector.broadcast %cst_13 : f32 to vector<1x8x1xf32>
    %36 = arith.addf %34, %35 : vector<1x8x1xf32>
    %37 = math.rsqrt %36 : vector<1x8x1xf32>
    %38 = vector.broadcast %37 : vector<1x8x1xf32> to vector<16x8x1xf32>
    %39 = arith.mulf %31, %38 : vector<16x8x1xf32>
    %40 = vector.broadcast %39 : vector<16x8x1xf32> to vector<16x8x32xf32>
    %41 = arith.mulf %22, %40 : vector<16x8x32xf32>
    %cst_14 = arith.constant dense<0.000000e+00> : vector<8x32xf32>
    %42 = vector.multi_reduction <add>, %41, %cst_14 [0] : vector<16x8x32xf32> to vector<8x32xf32>
    %43 = vector.shape_cast %42 : vector<8x32xf32> to vector<1x8x32xf32>
    %44 = vector.broadcast %43 : vector<1x8x32xf32> to vector<16x8x32xf32>
    %45 = arith.mulf %22, %44 : vector<16x8x32xf32>
    %cst_15 = arith.constant dense<0.000000e+00> : vector<16x8xf32>
    %46 = vector.multi_reduction <add>, %45, %cst_15 [2] : vector<16x8x32xf32> to vector<16x8xf32>
    %47 = vector.shape_cast %46 : vector<16x8xf32> to vector<16x8x1xf32>
    %48 = arith.mulf %47, %47 : vector<16x8x1xf32>
    %cst_16 = arith.constant dense<0.000000e+00> : vector<8x1xf32>
    %49 = vector.multi_reduction <add>, %48, %cst_16 [0] : vector<16x8x1xf32> to vector<8x1xf32>
    %50 = vector.shape_cast %49 : vector<8x1xf32> to vector<1x8x1xf32>
    %cst_17 = arith.constant 9.99999996E-13 : f32
    %51 = vector.broadcast %cst_17 : f32 to vector<1x8x1xf32>
    %52 = arith.addf %50, %51 : vector<1x8x1xf32>
    %53 = math.rsqrt %52 : vector<1x8x1xf32>
    %54 = vector.broadcast %53 : vector<1x8x1xf32> to vector<16x8x1xf32>
    %55 = arith.mulf %47, %54 : vector<16x8x1xf32>
    %56 = vector.broadcast %55 : vector<16x8x1xf32> to vector<16x8x32xf32>
    %57 = arith.mulf %22, %56 : vector<16x8x32xf32>
    %cst_18 = arith.constant dense<0.000000e+00> : vector<8x32xf32>
    %58 = vector.multi_reduction <add>, %57, %cst_18 [0] : vector<16x8x32xf32> to vector<8x32xf32>
    %59 = vector.shape_cast %58 : vector<8x32xf32> to vector<1x8x32xf32>
    %60 = vector.broadcast %59 : vector<1x8x32xf32> to vector<16x8x32xf32>
    %61 = arith.mulf %22, %60 : vector<16x8x32xf32>
    %cst_19 = arith.constant dense<0.000000e+00> : vector<16x8xf32>
    %62 = vector.multi_reduction <add>, %61, %cst_19 [2] : vector<16x8x32xf32> to vector<16x8xf32>
    %63 = vector.shape_cast %62 : vector<16x8xf32> to vector<16x8x1xf32>
    %64 = arith.mulf %63, %63 : vector<16x8x1xf32>
    %cst_20 = arith.constant dense<0.000000e+00> : vector<8x1xf32>
    %65 = vector.multi_reduction <add>, %64, %cst_20 [0] : vector<16x8x1xf32> to vector<8x1xf32>
    %66 = vector.shape_cast %65 : vector<8x1xf32> to vector<1x8x1xf32>
    %cst_21 = arith.constant 9.99999996E-13 : f32
    %67 = vector.broadcast %cst_21 : f32 to vector<1x8x1xf32>
    %68 = arith.addf %66, %67 : vector<1x8x1xf32>
    %69 = math.rsqrt %68 : vector<1x8x1xf32>
    %70 = vector.broadcast %69 : vector<1x8x1xf32> to vector<16x8x1xf32>
    %71 = arith.mulf %63, %70 : vector<16x8x1xf32>
    %72 = vector.broadcast %71 : vector<16x8x1xf32> to vector<16x8x32xf32>
    %73 = arith.mulf %22, %72 : vector<16x8x32xf32>
    %cst_22 = arith.constant dense<0.000000e+00> : vector<8x32xf32>
    %74 = vector.multi_reduction <add>, %73, %cst_22 [0] : vector<16x8x32xf32> to vector<8x32xf32>
    %75 = vector.shape_cast %74 : vector<8x32xf32> to vector<1x8x32xf32>
    %76 = vector.broadcast %75 : vector<1x8x32xf32> to vector<16x8x32xf32>
    %77 = arith.mulf %22, %76 : vector<16x8x32xf32>
    %cst_23 = arith.constant dense<0.000000e+00> : vector<16x8xf32>
    %78 = vector.multi_reduction <add>, %77, %cst_23 [2] : vector<16x8x32xf32> to vector<16x8xf32>
    %79 = vector.shape_cast %78 : vector<16x8xf32> to vector<16x8x1xf32>
    %80 = arith.mulf %79, %79 : vector<16x8x1xf32>
    %cst_24 = arith.constant dense<0.000000e+00> : vector<8x1xf32>
    %81 = vector.multi_reduction <add>, %80, %cst_24 [0] : vector<16x8x1xf32> to vector<8x1xf32>
    %82 = vector.shape_cast %81 : vector<8x1xf32> to vector<1x8x1xf32>
    %cst_25 = arith.constant 9.99999996E-13 : f32
    %83 = vector.broadcast %cst_25 : f32 to vector<1x8x1xf32>
    %84 = arith.addf %82, %83 : vector<1x8x1xf32>
    %85 = math.rsqrt %84 : vector<1x8x1xf32>
    %86 = vector.broadcast %85 : vector<1x8x1xf32> to vector<16x8x1xf32>
    %87 = arith.mulf %79, %86 : vector<16x8x1xf32>
    %88 = vector.broadcast %87 : vector<16x8x1xf32> to vector<16x8x32xf32>
    %89 = arith.mulf %16, %88 : vector<16x8x32xf32>
    %cst_26 = arith.constant dense<0.000000e+00> : vector<8x32xf32>
    %90 = vector.multi_reduction <add>, %89, %cst_26 [0] : vector<16x8x32xf32> to vector<8x32xf32>
    %c0_27 = arith.constant 0 : index
    %c0_28 = arith.constant 0 : index
    %91 = vector.load %arg5[%c0_27, %c0_28] : memref<1x32xf32, #tpu.memory_space<vmem>>, vector<1x32xf32>
    %92 = vector.extract_strided_slice %14 {offsets = [0, 0], sizes = [4, 32], strides = [1, 1]} : vector<8x32xf32> to vector<4x32xf32>
    %93 = vector.extract_strided_slice %90 {offsets = [0, 0], sizes = [4, 32], strides = [1, 1]} : vector<8x32xf32> to vector<4x32xf32>
    %c0_29 = arith.constant 0 : index
    %c0_30 = arith.constant 0 : index
    %94 = vector.load %arg5[%c0_29, %c0_30] : memref<1x32xf32, #tpu.memory_space<vmem>>, vector<1x32xf32>
    %95 = vector.extract_strided_slice %14 {offsets = [4, 0], sizes = [4, 32], strides = [1, 1]} : vector<8x32xf32> to vector<4x32xf32>
    %96 = vector.extract_strided_slice %90 {offsets = [4, 0], sizes = [4, 32], strides = [1, 1]} : vector<8x32xf32> to vector<4x32xf32>
    %97 = tpu.concatenate %91, %92, %93, %94, %95, %96 in 0 : vector<1x32xf32>, vector<4x32xf32>, vector<4x32xf32>, vector<1x32xf32>, vector<4x32xf32>, vector<4x32xf32> -> vector<18x32xf32>
    %c0_31 = arith.constant 0 : index
    %c0_32 = arith.constant 0 : index
    %98 = vector.load %arg6[%c0_31, %c0_32] : memref<9x32xf32, #tpu.memory_space<vmem>>, vector<9x32xf32>
    %99 = tpu.concatenate %98, %98 in 0 : vector<9x32xf32>, vector<9x32xf32> -> vector<18x32xf32>
    %100 = arith.addf %97, %99 : vector<18x32xf32>
    %c0_33 = arith.constant 0 : index
    %c0_34 = arith.constant 0 : index
    %101 = vector.load %arg7[%c0_33, %c0_34] : memref<1x32xf32, #tpu.memory_space<vmem>>, vector<1x32xf32>
    %c0_35 = arith.constant 0 : index
    %c0_36 = arith.constant 0 : index
    %102 = vector.load %arg8[%c0_35, %c0_36] : memref<1x32xf32, #tpu.memory_space<vmem>>, vector<1x32xf32>
    %cst_37 = arith.constant dense<0.000000e+00> : vector<18xf32>
    %103 = vector.multi_reduction <add>, %100, %cst_37 [1] : vector<18x32xf32> to vector<18xf32>
    %104 = vector.shape_cast %103 : vector<18xf32> to vector<18x1xf32>
    %cst_38 = arith.constant 3.200000e+01 : f32
    %105 = vector.broadcast %cst_38 : f32 to vector<18x1xf32>
    %106 = arith.divf %104, %105 : vector<18x1xf32>
    %107 = vector.broadcast %106 : vector<18x1xf32> to vector<18x32xf32>
    %108 = arith.subf %100, %107 : vector<18x32xf32>
    %109 = arith.mulf %108, %108 : vector<18x32xf32>
    %cst_39 = arith.constant dense<0.000000e+00> : vector<18xf32>
    %110 = vector.multi_reduction <add>, %109, %cst_39 [1] : vector<18x32xf32> to vector<18xf32>
    %111 = vector.shape_cast %110 : vector<18xf32> to vector<18x1xf32>
    %cst_40 = arith.constant 3.200000e+01 : f32
    %112 = vector.broadcast %cst_40 : f32 to vector<18x1xf32>
    %113 = arith.divf %111, %112 : vector<18x1xf32>
    %114 = vector.broadcast %106 : vector<18x1xf32> to vector<18x32xf32>
    %115 = arith.subf %100, %114 : vector<18x32xf32>
    %cst_41 = arith.constant 9.99999974E-6 : f32
    %116 = vector.broadcast %cst_41 : f32 to vector<18x1xf32>
    %117 = arith.addf %113, %116 : vector<18x1xf32>
    %118 = math.rsqrt %117 : vector<18x1xf32>
    %119 = vector.broadcast %118 : vector<18x1xf32> to vector<18x32xf32>
    %120 = arith.mulf %115, %119 : vector<18x32xf32>
    %121 = vector.broadcast %101 : vector<1x32xf32> to vector<18x32xf32>
    %122 = arith.mulf %120, %121 : vector<18x32xf32>
    %123 = vector.broadcast %102 : vector<1x32xf32> to vector<18x32xf32>
    %124 = arith.addf %122, %123 : vector<18x32xf32>
    %c0_42 = arith.constant 0 : index
    %c0_43 = arith.constant 0 : index
    %125 = vector.load %arg9[%c0_42, %c0_43] : memref<1x32xf32, #tpu.memory_space<vmem>>, vector<1x32xf32>
    %c0_44 = arith.constant 0 : index
    %c0_45 = arith.constant 0 : index
    %126 = vector.load %arg10[%c0_44, %c0_45] : memref<1x32xf32, #tpu.memory_space<vmem>>, vector<1x32xf32>
    %cst_46 = arith.constant dense<0.000000e+00> : vector<18xf32>
    %127 = vector.multi_reduction <add>, %124, %cst_46 [1] : vector<18x32xf32> to vector<18xf32>
    %128 = vector.shape_cast %127 : vector<18xf32> to vector<18x1xf32>
    %cst_47 = arith.constant 3.200000e+01 : f32
    %129 = vector.broadcast %cst_47 : f32 to vector<18x1xf32>
    %130 = arith.divf %128, %129 : vector<18x1xf32>
    %131 = vector.broadcast %130 : vector<18x1xf32> to vector<18x32xf32>
    %132 = arith.subf %124, %131 : vector<18x32xf32>
    %133 = arith.mulf %132, %132 : vector<18x32xf32>
    %cst_48 = arith.constant dense<0.000000e+00> : vector<18xf32>
    %134 = vector.multi_reduction <add>, %133, %cst_48 [1] : vector<18x32xf32> to vector<18xf32>
    %135 = vector.shape_cast %134 : vector<18xf32> to vector<18x1xf32>
    %cst_49 = arith.constant 3.200000e+01 : f32
    %136 = vector.broadcast %cst_49 : f32 to vector<18x1xf32>
    %137 = arith.divf %135, %136 : vector<18x1xf32>
    %138 = vector.broadcast %130 : vector<18x1xf32> to vector<18x32xf32>
    %139 = arith.subf %124, %138 : vector<18x32xf32>
    %cst_50 = arith.constant 9.99999974E-6 : f32
    %140 = vector.broadcast %cst_50 : f32 to vector<18x1xf32>
    %141 = arith.addf %137, %140 : vector<18x1xf32>
    %142 = math.rsqrt %141 : vector<18x1xf32>
    %143 = vector.broadcast %142 : vector<18x1xf32> to vector<18x32xf32>
    %144 = arith.mulf %139, %143 : vector<18x32xf32>
    %145 = vector.broadcast %125 : vector<1x32xf32> to vector<18x32xf32>
    %146 = arith.mulf %144, %145 : vector<18x32xf32>
    %147 = vector.broadcast %126 : vector<1x32xf32> to vector<18x32xf32>
    %148 = arith.addf %146, %147 : vector<18x32xf32>
    %c0_51 = arith.constant 0 : index
    %c0_52 = arith.constant 0 : index
    %149 = vector.load %arg11[%c0_51, %c0_52] : memref<32x96xf32, #tpu.memory_space<vmem>>, vector<32x96xf32>
    %cst_53 = arith.constant dense<0.000000e+00> : vector<18x96xf32>
    %150 = tpu.matmul %148, %149, %cst_53 {dimension_numbers = #tpu.dot_dimension_numbers<[1], [0], [0], [1], [0, 0, 1, 1], [], []>} : vector<18x32xf32>, vector<32x96xf32>, vector<18x96xf32> -> vector<18x96xf32>
    %c0_54 = arith.constant 0 : index
    %c0_55 = arith.constant 0 : index
    %151 = vector.load %arg12[%c0_54, %c0_55] : memref<1x96xf32, #tpu.memory_space<vmem>>, vector<1x96xf32>
    %152 = vector.broadcast %151 : vector<1x96xf32> to vector<18x96xf32>
    %153 = arith.addf %150, %152 : vector<18x96xf32>
    %154 = vector.extract_strided_slice %153 {offsets = [0, 0], sizes = [18, 32], strides = [1, 1]} : vector<18x96xf32> to vector<18x32xf32>
    %155 = vector.extract_strided_slice %153 {offsets = [0, 32], sizes = [18, 32], strides = [1, 1]} : vector<18x96xf32> to vector<18x32xf32>
    %156 = vector.extract_strided_slice %153 {offsets = [0, 64], sizes = [18, 32], strides = [1, 1]} : vector<18x96xf32> to vector<18x32xf32>
    %157 = tpu.iota {dimensions = array<i32: 1>} : vector<1x32xi32>
    %c0_56 = arith.constant 0 : index
    %c0_57 = arith.constant 0 : index
    %158 = vector.load %arg2[%c0_56, %c0_57] : memref<2x9xf32, #tpu.memory_space<vmem>>, vector<2x9xf32>
    %159 = vector.extract_strided_slice %154 {offsets = [0, 0], sizes = [9, 32], strides = [1, 1]} : vector<18x32xf32> to vector<9x32xf32>
    %160 = vector.extract_strided_slice %155 {offsets = [0, 0], sizes = [9, 32], strides = [1, 1]} : vector<18x32xf32> to vector<9x32xf32>
    %161 = vector.extract_strided_slice %156 {offsets = [0, 0], sizes = [9, 32], strides = [1, 1]} : vector<18x32xf32> to vector<9x32xf32>
    %162 = vector.extract_strided_slice %158 {offsets = [0, 0], sizes = [1, 9], strides = [1, 1]} : vector<2x9xf32> to vector<1x9xf32>
    %cst_58 = arith.constant 0.000000e+00 : f32
    %163 = vector.broadcast %cst_58 : f32 to vector<9x32xf32>
    %c0_i32 = arith.constant 0 : i32
    %164 = vector.broadcast %c0_i32 : i32 to vector<1x32xi32>
    %165 = arith.cmpi sge, %157, %164 : vector<1x32xi32>
    %c16_i32 = arith.constant 16 : i32
    %166 = vector.broadcast %c16_i32 : i32 to vector<1x32xi32>
    %167 = arith.cmpi slt, %157, %166 : vector<1x32xi32>
    %168 = arith.andi %165, %167 : vector<1x32xi1>
    %169 = arith.extui %168 : vector<1x32xi1> to vector<1x32xi32>
    %170 = arith.sitofp %169 : vector<1x32xi32> to vector<1x32xf32>
    %171 = vector.broadcast %170 : vector<1x32xf32> to vector<9x32xf32>
    %172 = arith.mulf %159, %171 : vector<9x32xf32>
    %cst_59 = arith.constant dense<0.000000e+00> : vector<9x9xf32>
    %173 = tpu.matmul %172, %160, %cst_59 {dimension_numbers = #tpu.dot_dimension_numbers<[1], [1], [0], [0], [0, 0, 1, 0], [], []>} : vector<9x32xf32>, vector<9x32xf32>, vector<9x9xf32> -> vector<9x9xf32>
    %cst_60 = arith.constant 2.500000e-01 : f32
    %174 = vector.broadcast %cst_60 : f32 to vector<9x9xf32>
    %175 = arith.mulf %173, %174 : vector<9x9xf32>
    %176 = vector.broadcast %162 : vector<1x9xf32> to vector<9x9xf32>
    %177 = arith.addf %175, %176 : vector<9x9xf32>
    %cst_61 = arith.constant dense<0xFF800000> : vector<9xf32>
    %178 = vector.multi_reduction <maximumf>, %177, %cst_61 [1] : vector<9x9xf32> to vector<9xf32>
    %179 = vector.shape_cast %178 : vector<9xf32> to vector<9x1xf32>
    %180 = vector.broadcast %179 : vector<9x1xf32> to vector<9x9xf32>
    %181 = arith.subf %177, %180 : vector<9x9xf32>
    %182 = math.exp %181 : vector<9x9xf32>
    %cst_62 = arith.constant dense<0.000000e+00> : vector<9xf32>
    %183 = vector.multi_reduction <add>, %182, %cst_62 [1] : vector<9x9xf32> to vector<9xf32>
    %184 = vector.shape_cast %183 : vector<9xf32> to vector<9x1xf32>
    %185 = tpu.reciprocal %184 {approx = true} : vector<9x1xf32> -> vector<9x1xf32>
    %186 = vector.broadcast %185 : vector<9x1xf32> to vector<9x9xf32>
    %187 = arith.mulf %182, %186 : vector<9x9xf32>
    %188 = vector.broadcast %170 : vector<1x32xf32> to vector<9x32xf32>
    %189 = arith.mulf %161, %188 : vector<9x32xf32>
    %cst_63 = arith.constant dense<0.000000e+00> : vector<9x32xf32>
    %190 = tpu.matmul %187, %189, %cst_63 {dimension_numbers = #tpu.dot_dimension_numbers<[1], [0], [0], [1], [0, 0, 1, 1], [], []>} : vector<9x9xf32>, vector<9x32xf32>, vector<9x32xf32> -> vector<9x32xf32>
    %191 = arith.addf %163, %190 : vector<9x32xf32>
    %c16_i32_64 = arith.constant 16 : i32
    %192 = vector.broadcast %c16_i32_64 : i32 to vector<1x32xi32>
    %193 = arith.cmpi sge, %157, %192 : vector<1x32xi32>
    %c32_i32 = arith.constant 32 : i32
    %194 = vector.broadcast %c32_i32 : i32 to vector<1x32xi32>
    %195 = arith.cmpi slt, %157, %194 : vector<1x32xi32>
    %196 = arith.andi %193, %195 : vector<1x32xi1>
    %197 = arith.extui %196 : vector<1x32xi1> to vector<1x32xi32>
    %198 = arith.sitofp %197 : vector<1x32xi32> to vector<1x32xf32>
    %199 = vector.broadcast %198 : vector<1x32xf32> to vector<9x32xf32>
    %200 = arith.mulf %159, %199 : vector<9x32xf32>
    %cst_65 = arith.constant dense<0.000000e+00> : vector<9x9xf32>
    %201 = tpu.matmul %200, %160, %cst_65 {dimension_numbers = #tpu.dot_dimension_numbers<[1], [1], [0], [0], [0, 0, 1, 0], [], []>} : vector<9x32xf32>, vector<9x32xf32>, vector<9x9xf32> -> vector<9x9xf32>
    %cst_66 = arith.constant 2.500000e-01 : f32
    %202 = vector.broadcast %cst_66 : f32 to vector<9x9xf32>
    %203 = arith.mulf %201, %202 : vector<9x9xf32>
    %204 = vector.broadcast %162 : vector<1x9xf32> to vector<9x9xf32>
    %205 = arith.addf %203, %204 : vector<9x9xf32>
    %cst_67 = arith.constant dense<0xFF800000> : vector<9xf32>
    %206 = vector.multi_reduction <maximumf>, %205, %cst_67 [1] : vector<9x9xf32> to vector<9xf32>
    %207 = vector.shape_cast %206 : vector<9xf32> to vector<9x1xf32>
    %208 = vector.broadcast %207 : vector<9x1xf32> to vector<9x9xf32>
    %209 = arith.subf %205, %208 : vector<9x9xf32>
    %210 = math.exp %209 : vector<9x9xf32>
    %cst_68 = arith.constant dense<0.000000e+00> : vector<9xf32>
    %211 = vector.multi_reduction <add>, %210, %cst_68 [1] : vector<9x9xf32> to vector<9xf32>
    %212 = vector.shape_cast %211 : vector<9xf32> to vector<9x1xf32>
    %213 = tpu.reciprocal %212 {approx = true} : vector<9x1xf32> -> vector<9x1xf32>
    %214 = vector.broadcast %213 : vector<9x1xf32> to vector<9x9xf32>
    %215 = arith.mulf %210, %214 : vector<9x9xf32>
    %216 = vector.broadcast %198 : vector<1x32xf32> to vector<9x32xf32>
    %217 = arith.mulf %161, %216 : vector<9x32xf32>
    %cst_69 = arith.constant dense<0.000000e+00> : vector<9x32xf32>
    %218 = tpu.matmul %215, %217, %cst_69 {dimension_numbers = #tpu.dot_dimension_numbers<[1], [0], [0], [1], [0, 0, 1, 1], [], []>} : vector<9x9xf32>, vector<9x32xf32>, vector<9x32xf32> -> vector<9x32xf32>
    %219 = arith.addf %191, %218 : vector<9x32xf32>
    %220 = vector.extract_strided_slice %154 {offsets = [9, 0], sizes = [9, 32], strides = [1, 1]} : vector<18x32xf32> to vector<9x32xf32>
    %221 = vector.extract_strided_slice %155 {offsets = [9, 0], sizes = [9, 32], strides = [1, 1]} : vector<18x32xf32> to vector<9x32xf32>
    %222 = vector.extract_strided_slice %156 {offsets = [9, 0], sizes = [9, 32], strides = [1, 1]} : vector<18x32xf32> to vector<9x32xf32>
    %223 = vector.extract_strided_slice %158 {offsets = [1, 0], sizes = [1, 9], strides = [1, 1]} : vector<2x9xf32> to vector<1x9xf32>
    %cst_70 = arith.constant 0.000000e+00 : f32
    %224 = vector.broadcast %cst_70 : f32 to vector<9x32xf32>
    %c0_i32_71 = arith.constant 0 : i32
    %225 = vector.broadcast %c0_i32_71 : i32 to vector<1x32xi32>
    %226 = arith.cmpi sge, %157, %225 : vector<1x32xi32>
    %c16_i32_72 = arith.constant 16 : i32
    %227 = vector.broadcast %c16_i32_72 : i32 to vector<1x32xi32>
    %228 = arith.cmpi slt, %157, %227 : vector<1x32xi32>
    %229 = arith.andi %226, %228 : vector<1x32xi1>
    %230 = arith.extui %229 : vector<1x32xi1> to vector<1x32xi32>
    %231 = arith.sitofp %230 : vector<1x32xi32> to vector<1x32xf32>
    %232 = vector.broadcast %231 : vector<1x32xf32> to vector<9x32xf32>
    %233 = arith.mulf %220, %232 : vector<9x32xf32>
    %cst_73 = arith.constant dense<0.000000e+00> : vector<9x9xf32>
    %234 = tpu.matmul %233, %221, %cst_73 {dimension_numbers = #tpu.dot_dimension_numbers<[1], [1], [0], [0], [0, 0, 1, 0], [], []>} : vector<9x32xf32>, vector<9x32xf32>, vector<9x9xf32> -> vector<9x9xf32>
    %cst_74 = arith.constant 2.500000e-01 : f32
    %235 = vector.broadcast %cst_74 : f32 to vector<9x9xf32>
    %236 = arith.mulf %234, %235 : vector<9x9xf32>
    %237 = vector.broadcast %223 : vector<1x9xf32> to vector<9x9xf32>
    %238 = arith.addf %236, %237 : vector<9x9xf32>
    %cst_75 = arith.constant dense<0xFF800000> : vector<9xf32>
    %239 = vector.multi_reduction <maximumf>, %238, %cst_75 [1] : vector<9x9xf32> to vector<9xf32>
    %240 = vector.shape_cast %239 : vector<9xf32> to vector<9x1xf32>
    %241 = vector.broadcast %240 : vector<9x1xf32> to vector<9x9xf32>
    %242 = arith.subf %238, %241 : vector<9x9xf32>
    %243 = math.exp %242 : vector<9x9xf32>
    %cst_76 = arith.constant dense<0.000000e+00> : vector<9xf32>
    %244 = vector.multi_reduction <add>, %243, %cst_76 [1] : vector<9x9xf32> to vector<9xf32>
    %245 = vector.shape_cast %244 : vector<9xf32> to vector<9x1xf32>
    %246 = tpu.reciprocal %245 {approx = true} : vector<9x1xf32> -> vector<9x1xf32>
    %247 = vector.broadcast %246 : vector<9x1xf32> to vector<9x9xf32>
    %248 = arith.mulf %243, %247 : vector<9x9xf32>
    %249 = vector.broadcast %231 : vector<1x32xf32> to vector<9x32xf32>
    %250 = arith.mulf %222, %249 : vector<9x32xf32>
    %cst_77 = arith.constant dense<0.000000e+00> : vector<9x32xf32>
    %251 = tpu.matmul %248, %250, %cst_77 {dimension_numbers = #tpu.dot_dimension_numbers<[1], [0], [0], [1], [0, 0, 1, 1], [], []>} : vector<9x9xf32>, vector<9x32xf32>, vector<9x32xf32> -> vector<9x32xf32>
    %252 = arith.addf %224, %251 : vector<9x32xf32>
    %c16_i32_78 = arith.constant 16 : i32
    %253 = vector.broadcast %c16_i32_78 : i32 to vector<1x32xi32>
    %254 = arith.cmpi sge, %157, %253 : vector<1x32xi32>
    %c32_i32_79 = arith.constant 32 : i32
    %255 = vector.broadcast %c32_i32_79 : i32 to vector<1x32xi32>
    %256 = arith.cmpi slt, %157, %255 : vector<1x32xi32>
    %257 = arith.andi %254, %256 : vector<1x32xi1>
    %258 = arith.extui %257 : vector<1x32xi1> to vector<1x32xi32>
    %259 = arith.sitofp %258 : vector<1x32xi32> to vector<1x32xf32>
    %260 = vector.broadcast %259 : vector<1x32xf32> to vector<9x32xf32>
    %261 = arith.mulf %220, %260 : vector<9x32xf32>
    %cst_80 = arith.constant dense<0.000000e+00> : vector<9x9xf32>
    %262 = tpu.matmul %261, %221, %cst_80 {dimension_numbers = #tpu.dot_dimension_numbers<[1], [1], [0], [0], [0, 0, 1, 0], [], []>} : vector<9x32xf32>, vector<9x32xf32>, vector<9x9xf32> -> vector<9x9xf32>
    %cst_81 = arith.constant 2.500000e-01 : f32
    %263 = vector.broadcast %cst_81 : f32 to vector<9x9xf32>
    %264 = arith.mulf %262, %263 : vector<9x9xf32>
    %265 = vector.broadcast %223 : vector<1x9xf32> to vector<9x9xf32>
    %266 = arith.addf %264, %265 : vector<9x9xf32>
    %cst_82 = arith.constant dense<0xFF800000> : vector<9xf32>
    %267 = vector.multi_reduction <maximumf>, %266, %cst_82 [1] : vector<9x9xf32> to vector<9xf32>
    %268 = vector.shape_cast %267 : vector<9xf32> to vector<9x1xf32>
    %269 = vector.broadcast %268 : vector<9x1xf32> to vector<9x9xf32>
    %270 = arith.subf %266, %269 : vector<9x9xf32>
    %271 = math.exp %270 : vector<9x9xf32>
    %cst_83 = arith.constant dense<0.000000e+00> : vector<9xf32>
    %272 = vector.multi_reduction <add>, %271, %cst_83 [1] : vector<9x9xf32> to vector<9xf32>
    %273 = vector.shape_cast %272 : vector<9xf32> to vector<9x1xf32>
    %274 = tpu.reciprocal %273 {approx = true} : vector<9x1xf32> -> vector<9x1xf32>
    %275 = vector.broadcast %274 : vector<9x1xf32> to vector<9x9xf32>
    %276 = arith.mulf %271, %275 : vector<9x9xf32>
    %277 = vector.broadcast %259 : vector<1x32xf32> to vector<9x32xf32>
    %278 = arith.mulf %222, %277 : vector<9x32xf32>
    %cst_84 = arith.constant dense<0.000000e+00> : vector<9x32xf32>
    %279 = tpu.matmul %276, %278, %cst_84 {dimension_numbers = #tpu.dot_dimension_numbers<[1], [0], [0], [1], [0, 0, 1, 1], [], []>} : vector<9x9xf32>, vector<9x32xf32>, vector<9x32xf32> -> vector<9x32xf32>
    %280 = arith.addf %252, %279 : vector<9x32xf32>
    %281 = tpu.concatenate %219, %280 in 0 : vector<9x32xf32>, vector<9x32xf32> -> vector<18x32xf32>
    %c0_85 = arith.constant 0 : index
    %c0_86 = arith.constant 0 : index
    %282 = vector.load %arg13[%c0_85, %c0_86] : memref<32x32xf32, #tpu.memory_space<vmem>>, vector<32x32xf32>
    %cst_87 = arith.constant dense<0.000000e+00> : vector<18x32xf32>
    %283 = tpu.matmul %281, %282, %cst_87 {dimension_numbers = #tpu.dot_dimension_numbers<[1], [0], [0], [1], [0, 0, 1, 1], [], []>} : vector<18x32xf32>, vector<32x32xf32>, vector<18x32xf32> -> vector<18x32xf32>
    %284 = arith.addf %124, %283 : vector<18x32xf32>
    %c0_88 = arith.constant 0 : index
    %c0_89 = arith.constant 0 : index
    %285 = vector.load %arg14[%c0_88, %c0_89] : memref<1x32xf32, #tpu.memory_space<vmem>>, vector<1x32xf32>
    %286 = vector.broadcast %285 : vector<1x32xf32> to vector<18x32xf32>
    %287 = arith.addf %284, %286 : vector<18x32xf32>
    %c0_90 = arith.constant 0 : index
    %c0_91 = arith.constant 0 : index
    %288 = vector.load %arg15[%c0_90, %c0_91] : memref<1x32xf32, #tpu.memory_space<vmem>>, vector<1x32xf32>
    %c0_92 = arith.constant 0 : index
    %c0_93 = arith.constant 0 : index
    %289 = vector.load %arg16[%c0_92, %c0_93] : memref<1x32xf32, #tpu.memory_space<vmem>>, vector<1x32xf32>
    %cst_94 = arith.constant dense<0.000000e+00> : vector<18xf32>
    %290 = vector.multi_reduction <add>, %287, %cst_94 [1] : vector<18x32xf32> to vector<18xf32>
    %291 = vector.shape_cast %290 : vector<18xf32> to vector<18x1xf32>
    %cst_95 = arith.constant 3.200000e+01 : f32
    %292 = vector.broadcast %cst_95 : f32 to vector<18x1xf32>
    %293 = arith.divf %291, %292 : vector<18x1xf32>
    %294 = vector.broadcast %293 : vector<18x1xf32> to vector<18x32xf32>
    %295 = arith.subf %287, %294 : vector<18x32xf32>
    %296 = arith.mulf %295, %295 : vector<18x32xf32>
    %cst_96 = arith.constant dense<0.000000e+00> : vector<18xf32>
    %297 = vector.multi_reduction <add>, %296, %cst_96 [1] : vector<18x32xf32> to vector<18xf32>
    %298 = vector.shape_cast %297 : vector<18xf32> to vector<18x1xf32>
    %cst_97 = arith.constant 3.200000e+01 : f32
    %299 = vector.broadcast %cst_97 : f32 to vector<18x1xf32>
    %300 = arith.divf %298, %299 : vector<18x1xf32>
    %301 = vector.broadcast %293 : vector<18x1xf32> to vector<18x32xf32>
    %302 = arith.subf %287, %301 : vector<18x32xf32>
    %cst_98 = arith.constant 9.99999974E-6 : f32
    %303 = vector.broadcast %cst_98 : f32 to vector<18x1xf32>
    %304 = arith.addf %300, %303 : vector<18x1xf32>
    %305 = math.rsqrt %304 : vector<18x1xf32>
    %306 = vector.broadcast %305 : vector<18x1xf32> to vector<18x32xf32>
    %307 = arith.mulf %302, %306 : vector<18x32xf32>
    %308 = vector.broadcast %288 : vector<1x32xf32> to vector<18x32xf32>
    %309 = arith.mulf %307, %308 : vector<18x32xf32>
    %310 = vector.broadcast %289 : vector<1x32xf32> to vector<18x32xf32>
    %311 = arith.addf %309, %310 : vector<18x32xf32>
    %c0_99 = arith.constant 0 : index
    %c0_100 = arith.constant 0 : index
    %312 = vector.load %arg17[%c0_99, %c0_100] : memref<32x128xf32, #tpu.memory_space<vmem>>, vector<32x128xf32>
    %cst_101 = arith.constant dense<0.000000e+00> : vector<18x128xf32>
    %313 = tpu.matmul %311, %312, %cst_101 {dimension_numbers = #tpu.dot_dimension_numbers<[1], [0], [0], [1], [0, 0, 1, 1], [], []>} : vector<18x32xf32>, vector<32x128xf32>, vector<18x128xf32> -> vector<18x128xf32>
    %c0_102 = arith.constant 0 : index
    %c0_103 = arith.constant 0 : index
    %314 = vector.load %arg18[%c0_102, %c0_103] : memref<1x128xf32, #tpu.memory_space<vmem>>, vector<1x128xf32>
    %315 = vector.broadcast %314 : vector<1x128xf32> to vector<18x128xf32>
    %316 = arith.addf %313, %315 : vector<18x128xf32>
    %cst_104 = arith.constant 1.702000e+00 : f32
    %317 = vector.broadcast %cst_104 : f32 to vector<18x128xf32>
    %318 = arith.mulf %317, %316 : vector<18x128xf32>
    %319 = arith.negf %318 : vector<18x128xf32>
    %320 = math.exp %319 : vector<18x128xf32>
    %cst_105 = arith.constant 1.000000e+00 : f32
    %321 = vector.broadcast %cst_105 : f32 to vector<18x128xf32>
    %322 = arith.addf %321, %320 : vector<18x128xf32>
    %323 = arith.divf %321, %322 : vector<18x128xf32>
    %324 = arith.mulf %316, %323 : vector<18x128xf32>
    %c0_106 = arith.constant 0 : index
    %c0_107 = arith.constant 0 : index
    %325 = vector.load %arg19[%c0_106, %c0_107] : memref<128x32xf32, #tpu.memory_space<vmem>>, vector<128x32xf32>
    %cst_108 = arith.constant dense<0.000000e+00> : vector<18x32xf32>
    %326 = tpu.matmul %324, %325, %cst_108 {dimension_numbers = #tpu.dot_dimension_numbers<[1], [0], [0], [1], [0, 0, 1, 1], [], []>} : vector<18x128xf32>, vector<128x32xf32>, vector<18x32xf32> -> vector<18x32xf32>
    %327 = arith.addf %287, %326 : vector<18x32xf32>
    %c0_109 = arith.constant 0 : index
    %c0_110 = arith.constant 0 : index
    %328 = vector.load %arg20[%c0_109, %c0_110] : memref<1x32xf32, #tpu.memory_space<vmem>>, vector<1x32xf32>
    %329 = vector.broadcast %328 : vector<1x32xf32> to vector<18x32xf32>
    %330 = arith.addf %327, %329 : vector<18x32xf32>
    %cst_111 = arith.constant 1.702000e+00 : f32
    %331 = vector.broadcast %cst_111 : f32 to vector<18x32xf32>
    %332 = arith.mulf %331, %330 : vector<18x32xf32>
    %333 = arith.negf %332 : vector<18x32xf32>
    %334 = math.exp %333 : vector<18x32xf32>
    %cst_112 = arith.constant 1.000000e+00 : f32
    %335 = vector.broadcast %cst_112 : f32 to vector<18x32xf32>
    %336 = arith.addf %335, %334 : vector<18x32xf32>
    %337 = arith.divf %335, %336 : vector<18x32xf32>
    %338 = arith.mulf %330, %337 : vector<18x32xf32>
    %339 = vector.extract_strided_slice %338 {offsets = [1, 0], sizes = [4, 32], strides = [1, 1]} : vector<18x32xf32> to vector<4x32xf32>
    %340 = vector.extract_strided_slice %338 {offsets = [10, 0], sizes = [4, 32], strides = [1, 1]} : vector<18x32xf32> to vector<4x32xf32>
    %341 = tpu.concatenate %339, %340, %15 in 0 : vector<4x32xf32>, vector<4x32xf32>, vector<128x32xf32> -> vector<136x32xf32>
    %c0_113 = arith.constant 0 : index
    %c0_114 = arith.constant 0 : index
    %342 = vector.load %arg21[%c0_113, %c0_114] : memref<32x128xf32, #tpu.memory_space<vmem>>, vector<32x128xf32>
    %cst_115 = arith.constant dense<0.000000e+00> : vector<136x128xf32>
    %343 = tpu.matmul %341, %342, %cst_115 {dimension_numbers = #tpu.dot_dimension_numbers<[1], [0], [0], [1], [0, 0, 1, 1], [], []>} : vector<136x32xf32>, vector<32x128xf32>, vector<136x128xf32> -> vector<136x128xf32>
    %c0_116 = arith.constant 0 : index
    %c0_117 = arith.constant 0 : index
    %344 = vector.load %arg22[%c0_116, %c0_117] : memref<1x128xf32, #tpu.memory_space<vmem>>, vector<1x128xf32>
    %345 = vector.broadcast %344 : vector<1x128xf32> to vector<136x128xf32>
    %346 = arith.addf %343, %345 : vector<136x128xf32>
    %cst_118 = arith.constant 1.000000e-01 : f32
    %347 = vector.broadcast %cst_118 : f32 to vector<136x128xf32>
    %348 = arith.mulf %347, %346 : vector<136x128xf32>
    %c0_119 = arith.constant 0 : index
    %c0_120 = arith.constant 0 : index
    %349 = vector.load %arg23[%c0_119, %c0_120] : memref<136x128xf32, #tpu.memory_space<vmem>>, vector<136x128xf32>
    tpu.vector_store %arg23[%c0_119, %c0_120], %348 {strides = array<i32>} : memref<136x128xf32, #tpu.memory_space<vmem>>, vector<136x128xf32>,
    return
  }
  func.func @transform_0(%arg0: i32) -> (i32, i32) {
    %c0_i32 = arith.constant 0 : i32
    %c0_i32_0 = arith.constant 0 : i32
    %c0_i32_1 = arith.constant 0 : i32
    return %c0_i32, %c0_i32_0 : i32, i32
  }
  func.func @transform_1(%arg0: i32) -> (i32, i32) {
    %c0_i32 = arith.constant 0 : i32
    %c0_i32_0 = arith.constant 0 : i32
    %c0_i32_1 = arith.constant 0 : i32
    return %c0_i32, %c0_i32_0 : i32, i32
  }
  func.func @transform_2(%arg0: i32) -> (i32, i32) {
    %c0_i32 = arith.constant 0 : i32
    %c0_i32_0 = arith.constant 0 : i32
    %c0_i32_1 = arith.constant 0 : i32
    return %c0_i32, %c0_i32_0 : i32, i32
  }
  func.func @transform_3(%arg0: i32) -> (i32, i32) {
    %c0_i32 = arith.constant 0 : i32
    %c0_i32_0 = arith.constant 0 : i32
    %c0_i32_1 = arith.constant 0 : i32
    return %c0_i32, %c0_i32_0 : i32, i32
  }
  func.func @transform_4(%arg0: i32) -> (i32, i32) {
    %c0_i32 = arith.constant 0 : i32
    %c0_i32_0 = arith.constant 0 : i32
    %c0_i32_1 = arith.constant 0 : i32
    return %c0_i32, %c0_i32_0 : i32, i32
  }
  func.func @transform_5(%arg0: i32) -> (i32, i32) {
    %c0_i32 = arith.constant 0 : i32
    %c0_i32_0 = arith.constant 0 : i32
    %c0_i32_1 = arith.constant 0 : i32
    return %c0_i32, %c0_i32_0 : i32, i32
  }
  func.func @transform_6(%arg0: i32) -> (i32, i32) {
    %c0_i32 = arith.constant 0 : i32
    %c0_i32_0 = arith.constant 0 : i32
    %c0_i32_1 = arith.constant 0 : i32
    return %c0_i32, %c0_i32_0 : i32, i32
  }
  func.func @transform_7(%arg0: i32) -> (i32, i32) {
    %c0_i32 = arith.constant 0 : i32
    %c0_i32_0 = arith.constant 0 : i32
    %c0_i32_1 = arith.constant 0 : i32
    return %c0_i32, %c0_i32_0 : i32, i32
  }
  func.func @transform_8(%arg0: i32) -> (i32, i32) {
    %c0_i32 = arith.constant 0 : i32
    %c0_i32_0 = arith.constant 0 : i32
    %c0_i32_1 = arith.constant 0 : i32
    return %c0_i32, %c0_i32_0 : i32, i32
  }
  func.func @transform_9(%arg0: i32) -> (i32, i32) {
    %c0_i32 = arith.constant 0 : i32
    %c0_i32_0 = arith.constant 0 : i32
    %c0_i32_1 = arith.constant 0 : i32
    return %c0_i32, %c0_i32_0 : i32, i32
  }
  func.func @transform_10(%arg0: i32) -> (i32, i32) {
    %c0_i32 = arith.constant 0 : i32
    %c0_i32_0 = arith.constant 0 : i32
    %c0_i32_1 = arith.constant 0 : i32
    return %c0_i32, %c0_i32_0 : i32, i32
  }
  func.func @transform_11(%arg0: i32) -> (i32, i32) {
    %c0_i32 = arith.constant 0 : i32
    %c0_i32_0 = arith.constant 0 : i32
    %c0_i32_1 = arith.constant 0 : i32
    return %c0_i32, %c0_i32_0 : i32, i32
  }
  func.func @transform_12(%arg0: i32) -> (i32, i32) {
    %c0_i32 = arith.constant 0 : i32
    %c0_i32_0 = arith.constant 0 : i32
    %c0_i32_1 = arith.constant 0 : i32
    return %c0_i32, %c0_i32_0 : i32, i32
  }
  func.func @transform_13(%arg0: i32) -> (i32, i32) {
    %c0_i32 = arith.constant 0 : i32
    %c0_i32_0 = arith.constant 0 : i32
    %c0_i32_1 = arith.constant 0 : i32
    return %c0_i32, %c0_i32_0 : i32, i32
  }
  func.func @transform_14(%arg0: i32) -> (i32, i32) {
    %c0_i32 = arith.constant 0 : i32
    %c0_i32_0 = arith.constant 0 : i32
    %c0_i32_1 = arith.constant 0 : i32
    return %c0_i32, %c0_i32_0 : i32, i32
  }
  func.func @transform_15(%arg0: i32) -> (i32, i32) {
    %c0_i32 = arith.constant 0 : i32
    %c0_i32_0 = arith.constant 0 : i32
    %c0_i32_1 = arith.constant 0 : i32
    return %c0_i32, %c0_i32_0 : i32, i32
  }
  func.func @transform_16(%arg0: i32) -> (i32, i32) {
    %c0_i32 = arith.constant 0 : i32
    %c0_i32_0 = arith.constant 0 : i32
    %c0_i32_1 = arith.constant 0 : i32
    return %c0_i32, %c0_i32_0 : i32, i32
  }
  func.func @transform_17(%arg0: i32) -> (i32, i32) {
    %c0_i32 = arith.constant 0 : i32
    %c0_i32_0 = arith.constant 0 : i32
    %c0_i32_1 = arith.constant 0 : i32
    return %c0_i32, %c0_i32_0 : i32, i32
  }
  func.func @transform_18(%arg0: i32) -> (i32, i32) {
    %c0_i32 = arith.constant 0 : i32
    %c0_i32_0 = arith.constant 0 : i32
    %c0_i32_1 = arith.constant 0 : i32
    return %c0_i32, %c0_i32_0 : i32, i32
  }
  func.func @transform_19(%arg0: i32) -> (i32, i32) {
    %c0_i32 = arith.constant 0 : i32
    %c0_i32_0 = arith.constant 0 : i32
    %c0_i32_1 = arith.constant 0 : i32
    return %c0_i32, %c0_i32_0 : i32, i32
  }
  func.func @transform_20(%arg0: i32) -> (i32, i32) {
    %c0_i32 = arith.constant 0 : i32
    %c0_i32_0 = arith.constant 0 : i32
    %c0_i32_1 = arith.constant 0 : i32
    return %c0_i32, %c0_i32_0 : i32, i32
  }
  func.func @transform_21(%arg0: i32) -> (i32, i32) {
    %c0_i32 = arith.constant 0 : i32
    %c0_i32_0 = arith.constant 0 : i32
    %c0_i32_1 = arith.constant 0 : i32
    return %c0_i32, %c0_i32_0 : i32, i32
  }
  func.func @transform_22(%arg0: i32) -> (i32, i32) {
    %c0_i32 = arith.constant 0 : i32
    %c0_i32_0 = arith.constant 0 : i32
    %c0_i32_1 = arith.constant 0 : i32
    return %c0_i32, %c0_i32_0 : i32, i32
  }
}

</mosaic_0001>

<llo_original>
// kernel: tile.9
$region0: #{tile.9}
  %s0 = inlined_call_operand.vmem [shape: f32[2,2,4], index: 0, kind: input, shape index: {}]
  %s1 = inlined_call_operand.vmem [shape: f32[2,8], index: 1, kind: output, shape index: {}]
  $region1: #{tile.9} parent=0
    #allocation0 [shape = 'u8[4096]{0}', space=vmem, size = 0x1000, scoped, tag = 'scoped mem for output reshape']
    #allocation1 [shape = 'u8[8192]{0}', space=vmem, size = 0x2000, scoped, tag = 'scoped mem for input reshape']
    %s3 = sshll.u32 1, 2
    %s4 = ssub.s32 %s3, 1
    %s5 = scalar_lea.vmem %s0, 2
    %v6 = vld [vmem:[%s5] sm:%s4]
    %s7 = scalar_lea.vmem [#allocation1], 8
    %8 = vst [vmem:[%s7] sm:%s4] %v6
    %v9 = vld [vmem:[%s0] sm:%s4]
    %10 = vst [vmem:[#allocation1] sm:%s4] %v9
    %s11 = smov 3
    %v12 = vld [vmem:[#allocation1] ss:$8 sm:%s11]
    %vm13 = vcmask 31744
    %14 = vst.msk [vmem:[#allocation0] sm:$0x3] %vm13, %v12
    %s15 = scalar_lea.vmem [#allocation1], 1
    %s16 = smov 3
    %v17 = vld [vmem:[%s15] ss:$8 sm:%s16]
    %18 = vrot.lane.b32.xlu0 %v17, 4
    %v19 = vpop.permute.xlu0 %18
    %vm20 = vcmask 64544
    %21 = vst.msk [vmem:[#allocation0] sm:$0x3] %vm20, %v19
    %s23 = sshll.u32 1, 2
    %s24 = ssub.s32 %s23, 1
    %v26 = vld [vmem:[#allocation0] sm:%s24]
    %s27 = sshll.u32 1, 2
    %s28 = ssub.s32 %s27, 1
    %29 = vst [vmem:[%s1] sm:%s28] %v26

// kernel: _lambda_.1
$region0: #{_lambda_.1}
  #allocation0 [shape = 'u32[]', space=smem, size = 0x4, offset = 0x4, fixed_abs, tag = 'smem constant byte address 0x4 - core index']
  #allocation1 [shape = 'u32[144,128]{1,0:T(1,128)}', space=vmem, size = 0x12000, scoped, tag = 'internal scratch']
  %s0 = inlined_call_operand.vmem [shape: f32[136,128], index: 0, kind: input, shape index: {}]
  %s1 = inlined_call_operand.vmem [shape: f32[2,9], index: 1, kind: input, shape index: {}]
  %s2 = inlined_call_operand.vmem [shape: f32[128,32], index: 2, kind: input, shape index: {}]
  %s3 = inlined_call_operand.vmem [shape: f32[1,32], index: 3, kind: input, shape index: {}]
  %s4 = inlined_call_operand.vmem [shape: f32[1,32], index: 4, kind: input, shape index: {}]
  %s5 = inlined_call_operand.vmem [shape: f32[9,32], index: 5, kind: input, shape index: {}]
  %s6 = inlined_call_operand.vmem [shape: f32[1,32], index: 6, kind: input, shape index: {}]
  %s7 = inlined_call_operand.vmem [shape: f32[1,32], index: 7, kind: input, shape index: {}]
  %s8 = inlined_call_operand.vmem [shape: f32[1,32], index: 8, kind: input, shape index: {}]
  %s9 = inlined_call_operand.vmem [shape: f32[1,32], index: 9, kind: input, shape index: {}]
  %s10 = inlined_call_operand.vmem [shape: f32[32,96], index: 10, kind: input, shape index: {}]
  %s11 = inlined_call_operand.vmem [shape: f32[1,96], index: 11, kind: input, shape index: {}]
  %s12 = inlined_call_operand.vmem [shape: f32[32,32], index: 12, kind: input, shape index: {}]
  %s13 = inlined_call_operand.vmem [shape: f32[1,32], index: 13, kind: input, shape index: {}]
  %s14 = inlined_call_operand.vmem [shape: f32[1,32], index: 14, kind: input, shape index: {}]
  %s15 = inlined_call_operand.vmem [shape: f32[1,32], index: 15, kind: input, shape index: {}]
  %s16 = inlined_call_operand.vmem [shape: f32[32,128], index: 16, kind: input, shape index: {}]
  %s17 = inlined_call_operand.vmem [shape: f32[1,128], index: 17, kind: input, shape index: {}]
  %s18 = inlined_call_operand.vmem [shape: f32[128,32], index: 18, kind: input, shape index: {}]
  %s19 = inlined_call_operand.vmem [shape: f32[1,32], index: 19, kind: input, shape index: {}]
  %s20 = inlined_call_operand.vmem [shape: f32[32,128], index: 20, kind: input, shape index: {}]
  %s21 = inlined_call_operand.vmem [shape: f32[1,128], index: 21, kind: input, shape index: {}]
  %s22 = inlined_call_operand.hbm [shape: f32[136,128], index: 22, kind: output, shape index: {}]
  %s23 = sld [smem:[#allocation0]]
  $region98: #{_lambda_.1} parent=0
    _
  %s25 = ssub.s32 1, %s23
  %s26 = scalar_select 0, %s25, %s23
  $region1: #{_lambda_.1} parent=0
    #allocation2 [shape = 'u8[69632]{0}', space=vmem, size = 0x11000, scoped, tag = 'output window, operand 0, single buffered']
    #allocation3 [shape = 's32[1]{0}', space=sflag, size = 0x4, scoped, tag = 'scoped memory for _lambda_.1']
    %27 = vsyncpa [#allocation3], 0
    // Predicated region
    $region2: #{_lambda_.1} parent=1 // pred_check
      _
    $region3: #{_lambda_.1} parent=1 // pred_check_branch
      %29 = sbr.rel (0) target = $region5
    $region4: #{_lambda_.1} parent=1 // pred_region
      _
    $region5: #{_lambda_.1} parent=1 // pred_fallthru
      _
    // Predicated region
    $region6: #{_lambda_.1} parent=1 // pred_check
      _
    $region7: #{_lambda_.1} parent=1 // pred_check_branch
      %31 = sbr.rel (0) target = $region9
    $region8: #{_lambda_.1} parent=1 // pred_region
      _
    $region9: #{_lambda_.1} parent=1 // pred_fallthru
      _
    // Predicated region
    $region10: #{_lambda_.1} parent=1 // pred_check
      _
    $region11: #{_lambda_.1} parent=1 // pred_check_branch
      %33 = sbr.rel (0) target = $region13
    $region12: #{_lambda_.1} parent=1 // pred_region
      _
    $region13: #{_lambda_.1} parent=1 // pred_fallthru
      _
    // Predicated region
    $region14: #{_lambda_.1} parent=1 // pred_check
      _
    $region15: #{_lambda_.1} parent=1 // pred_check_branch
      %35 = sbr.rel (0) target = $region17
    $region16: #{_lambda_.1} parent=1 // pred_region
      _
    $region17: #{_lambda_.1} parent=1 // pred_fallthru
      _
    // Predicated region
    $region18: #{_lambda_.1} parent=1 // pred_check
      _
    $region19: #{_lambda_.1} parent=1 // pred_check_branch
      %37 = sbr.rel (0) target = $region21
    $region20: #{_lambda_.1} parent=1 // pred_region
      _
    $region21: #{_lambda_.1} parent=1 // pred_fallthru
      _
    // Predicated region
    $region22: #{_lambda_.1} parent=1 // pred_check
      _
    $region23: #{_lambda_.1} parent=1 // pred_check_branch
      %39 = sbr.rel (0) target = $region25
    $region24: #{_lambda_.1} parent=1 // pred_region
      _
    $region25: #{_lambda_.1} parent=1 // pred_fallthru
      _
    // Predicated region
    $region26: #{_lambda_.1} parent=1 // pred_check
      _
    $region27: #{_lambda_.1} parent=1 // pred_check_branch
      %41 = sbr.rel (0) target = $region29
    $region28: #{_lambda_.1} parent=1 // pred_region
      _
    $region29: #{_lambda_.1} parent=1 // pred_fallthru
      _
    // Predicated region
    $region30: #{_lambda_.1} parent=1 // pred_check
      _
    $region31: #{_lambda_.1} parent=1 // pred_check_branch
      %43 = sbr.rel (0) target = $region33
    $region32: #{_lambda_.1} parent=1 // pred_region
      _
    $region33: #{_lambda_.1} parent=1 // pred_fallthru
      _
    // Predicated region
    $region34: #{_lambda_.1} parent=1 // pred_check
      _
    $region35: #{_lambda_.1} parent=1 // pred_check_branch
      %45 = sbr.rel (0) target = $region37
    $region36: #{_lambda_.1} parent=1 // pred_region
      _
    $region37: #{_lambda_.1} parent=1 // pred_fallthru
      _
    // Predicated region
    $region38: #{_lambda_.1} parent=1 // pred_check
      _
    $region39: #{_lambda_.1} parent=1 // pred_check_branch
      %47 = sbr.rel (0) target = $region41
    $region40: #{_lambda_.1} parent=1 // pred_region
      _
    $region41: #{_lambda_.1} parent=1 // pred_fallthru
      _
    // Predicated region
    $region42: #{_lambda_.1} parent=1 // pred_check
      _
    $region43: #{_lambda_.1} parent=1 // pred_check_branch
      %49 = sbr.rel (0) target = $region45
    $region44: #{_lambda_.1} parent=1 // pred_region
      _
    $region45: #{_lambda_.1} parent=1 // pred_fallthru
      _
    // Predicated region
    $region46: #{_lambda_.1} parent=1 // pred_check
      _
    $region47: #{_lambda_.1} parent=1 // pred_check_branch
      %51 = sbr.rel (0) target = $region49
    $region48: #{_lambda_.1} parent=1 // pred_region
      _
    $region49: #{_lambda_.1} parent=1 // pred_fallthru
      _
    // Predicated region
    $region50: #{_lambda_.1} parent=1 // pred_check
      _
    $region51: #{_lambda_.1} parent=1 // pred_check_branch
      %53 = sbr.rel (0) target = $region53
    $region52: #{_lambda_.1} parent=1 // pred_region
      _
    $region53: #{_lambda_.1} parent=1 // pred_fallthru
      _
    // Predicated region
    $region54: #{_lambda_.1} parent=1 // pred_check
      _
    $region55: #{_lambda_.1} parent=1 // pred_check_branch
      %55 = sbr.rel (0) target = $region57
    $region56: #{_lambda_.1} parent=1 // pred_region
      _
    $region57: #{_lambda_.1} parent=1 // pred_fallthru
      _
    // Predicated region
    $region58: #{_lambda_.1} parent=1 // pred_check
      _
    $region59: #{_lambda_.1} parent=1 // pred_check_branch
      %57 = sbr.rel (0) target = $region61
    $region60: #{_lambda_.1} parent=1 // pred_region
      _
    $region61: #{_lambda_.1} parent=1 // pred_fallthru
      _
    // Predicated region
    $region62: #{_lambda_.1} parent=1 // pred_check
      _
    $region63: #{_lambda_.1} parent=1 // pred_check_branch
      %59 = sbr.rel (0) target = $region65
    $region64: #{_lambda_.1} parent=1 // pred_region
      _
    $region65: #{_lambda_.1} parent=1 // pred_fallthru
      _
    // Predicated region
    $region66: #{_lambda_.1} parent=1 // pred_check
      _
    $region67: #{_lambda_.1} parent=1 // pred_check_branch
      %61 = sbr.rel (0) target = $region69
    $region68: #{_lambda_.1} parent=1 // pred_region
      _
    $region69: #{_lambda_.1} parent=1 // pred_fallthru
      _
    // Predicated region
    $region70: #{_lambda_.1} parent=1 // pred_check
      _
    $region71: #{_lambda_.1} parent=1 // pred_check_branch
      %63 = sbr.rel (0) target = $region73
    $region72: #{_lambda_.1} parent=1 // pred_region
      _
    $region73: #{_lambda_.1} parent=1 // pred_fallthru
      _
    // Predicated region
    $region74: #{_lambda_.1} parent=1 // pred_check
      _
    $region75: #{_lambda_.1} parent=1 // pred_check_branch
      %65 = sbr.rel (0) target = $region77
    $region76: #{_lambda_.1} parent=1 // pred_region
      _
    $region77: #{_lambda_.1} parent=1 // pred_fallthru
      _
    // Predicated region
    $region78: #{_lambda_.1} parent=1 // pred_check
      _
    $region79: #{_lambda_.1} parent=1 // pred_check_branch
      %67 = sbr.rel (0) target = $region81
    $region80: #{_lambda_.1} parent=1 // pred_region
      _
    $region81: #{_lambda_.1} parent=1 // pred_fallthru
      _
    // Predicated region
    $region82: #{_lambda_.1} parent=1 // pred_check
      _
    $region83: #{_lambda_.1} parent=1 // pred_check_branch
      %69 = sbr.rel (0) target = $region85
    $region84: #{_lambda_.1} parent=1 // pred_region
      _
    $region85: #{_lambda_.1} parent=1 // pred_fallthru
      _
    // Predicated region
    $region86: #{_lambda_.1} parent=1 // pred_check
      _
    $region87: #{_lambda_.1} parent=1 // pred_check_branch
      %71 = sbr.rel (0) target = $region89
    $region88: #{_lambda_.1} parent=1 // pred_region
      _
    $region89: #{_lambda_.1} parent=1 // pred_fallthru
      _
    %v72 = vld [vmem:[%s0] sm:$0xff]
    %v73 = vld [vmem:[%s0 + $0x8] sm:$0xff]
    %v74 = vld [vmem:[%s0 + $0x10] sm:$0xff]
    %v75 = vld [vmem:[%s0 + $0x18] sm:$0xff]
    %v76 = vld [vmem:[%s0 + $0x20] sm:$0xff]
    %v77 = vld [vmem:[%s0 + $0x28] sm:$0xff]
    %v78 = vld [vmem:[%s0 + $0x30] sm:$0xff]
    %v79 = vld [vmem:[%s0 + $0x38] sm:$0xff]
    %v80 = vld [vmem:[%s0 + $0x40] sm:$0xff]
    %v81 = vld [vmem:[%s0 + $0x48] sm:$0xff]
    %v82 = vld [vmem:[%s0 + $0x50] sm:$0xff]
    %v83 = vld [vmem:[%s0 + $0x58] sm:$0xff]
    %v84 = vld [vmem:[%s0 + $0x60] sm:$0xff]
    %v85 = vld [vmem:[%s0 + $0x68] sm:$0xff]
    %v86 = vld [vmem:[%s0 + $0x70] sm:$0xff]
    %v87 = vld [vmem:[%s0 + $0x78] sm:$0xff]
    %v88 = vld [vmem:[%s0 + $0x80] sm:$0xff]
    %v89 = vld [vmem:[%s2] sm:$0xff]
    %v90 = vld [vmem:[%s2 + $0x8] sm:$0xff]
    %v91 = vld [vmem:[%s2 + $0x10] sm:$0xff]
    %v92 = vld [vmem:[%s2 + $0x18] sm:$0xff]
    %v93 = vld [vmem:[%s2 + $0x20] sm:$0xff]
    %v94 = vld [vmem:[%s2 + $0x28] sm:$0xff]
    %v95 = vld [vmem:[%s2 + $0x30] sm:$0xff]
    %v96 = vld [vmem:[%s2 + $0x38] sm:$0xff]
    %v97 = vld [vmem:[%s2 + $0x40] sm:$0xff]
    %v98 = vld [vmem:[%s2 + $0x48] sm:$0xff]
    %v99 = vld [vmem:[%s2 + $0x50] sm:$0xff]
    %v100 = vld [vmem:[%s2 + $0x58] sm:$0xff]
    %v101 = vld [vmem:[%s2 + $0x60] sm:$0xff]
    %v102 = vld [vmem:[%s2 + $0x68] sm:$0xff]
    %v103 = vld [vmem:[%s2 + $0x70] sm:$0xff]
    %v104 = vld [vmem:[%s2 + $0x78] sm:$0xff]
    %v105 = vld [vmem:[%s3] sm:$0x1]
    %v107 = vlaneseq
    %v108 = vshrl.u32 %v107, 7
    %v109 = vsub.s32 0, %v108
    %v110 = vrot.slane %v105, %v109
    %112 = vmatprep.subr.mxu0 0.0
    %113 = vmatpush1.msra.mxu0 %v104
    %114 = vmatprep.subr.mxu0 0.0
    %115 = vmatpush1.msra.mxu0 %v103
    %116 = vmatprep.subr.mxu0 0.0
    %117 = vmatpush1.msra.mxu0 %v102
    %118 = vmatprep.subr.mxu0 0.0
    %119 = vmatpush1.msra.mxu0 %v101
    %120 = vmatprep.subr.mxu0 0.0
    %121 = vmatpush1.msra.mxu0 %v100
    %122 = vmatprep.subr.mxu0 0.0
    %123 = vmatpush1.msra.mxu0 %v99
    %124 = vmatprep.subr.mxu0 0.0
    %125 = vmatpush1.msra.mxu0 %v98
    %126 = vmatprep.subr.mxu0 0.0
    %127 = vmatpush1.msra.mxu0 %v97
    %128 = vmatprep.subr.mxu0 0.0
    %129 = vmatpush1.msra.mxu0 %v96
    %130 = vmatprep.subr.mxu0 0.0
    %131 = vmatpush1.msra.mxu0 %v95
    %132 = vmatprep.subr.mxu0 0.0
    %133 = vmatpush1.msra.mxu0 %v94
    %134 = vmatprep.subr.mxu0 0.0
    %135 = vmatpush1.msra.mxu0 %v93
    %136 = vmatprep.subr.mxu0 0.0
    %137 = vmatpush1.msra.mxu0 %v92
    %138 = vmatprep.subr.mxu0 0.0
    %139 = vmatpush1.msra.mxu0 %v91
    %140 = vmatprep.subr.mxu0 0.0
    %141 = vmatpush1.msra.mxu0 %v90
    %142 = vmatprep.subr.mxu0 0.0
    %143 = vmatpush1.msra.mxu0 %v89
    %144 = vmatprep.subr.mxu0 0.0
    %145 = vmatpush2.msra.mxu0 0.0
    %146 = vmatprep.subr.mxu0 0.0
    %147 = vmatpush2.msra.mxu0 0.0
    %148 = vmatprep.subr.mxu0 0.0
    %149 = vmatpush2.msra.mxu0 0.0
    %150 = vmatprep.subr.mxu0 0.0
    %151 = vmatpush2.msra.mxu0 0.0
    %152 = vmatprep.subr.mxu0 0.0
    %153 = vmatpush2.msra.mxu0 0.0
    %154 = vmatprep.subr.mxu0 0.0
    %155 = vmatpush2.msra.mxu0 0.0
    %156 = vmatprep.subr.mxu0 0.0
    %157 = vmatpush2.msra.mxu0 0.0
    %158 = vmatprep.subr.mxu0 0.0
    %159 = vmatpush2.msra.mxu0 0.0
    %160 = vmatprep.subr.mxu0 0.0
    %161 = vmatpush2.msra.mxu0 0.0
    %162 = vmatprep.subr.mxu0 0.0
    %163 = vmatpush2.msra.mxu0 0.0
    %164 = vmatprep.subr.mxu0 0.0
    %165 = vmatpush2.msra.mxu0 0.0
    %166 = vmatprep.subr.mxu0 0.0
    %167 = vmatpush2.msra.mxu0 0.0
    %168 = vmatprep.subr.mxu0 0.0
    %169 = vmatpush2.msra.mxu0 0.0
    %170 = vmatprep.subr.mxu0 0.0
    %171 = vmatpush2.msra.mxu0 0.0
    %172 = vmatprep.subr.mxu0 0.0
    %173 = vmatpush2.msra.mxu0 0.0
    %174 = vmatprep.subr.mxu0 0.0
    %175 = vmatpush2.msra.mxu0 0.0
    %176 = vmatprep.mubr.f32.mxu0 0.0
    %177 = vmatmul.mubr.f32.gmra.mxu0 %v72
    %v178 = vpop.f32.mrf.mxu0
    %v179 = vadd.f32 %v110, %v178
    %v180 = vpop.f32.mrf.mxu0
    %181 = vmatprep.mubr.f32.mxu0 0.0
    %182 = vmatmul.mubr.f32.gmra.mxu0 %v73
    %v183 = vpop.f32.mrf.mxu0
    %v184 = vadd.f32 %v110, %v183
    %v185 = vpop.f32.mrf.mxu0
    %186 = vmatprep.mubr.f32.mxu0 0.0
    %187 = vmatmul.mubr.f32.gmra.mxu0 %v74
    %v188 = vpop.f32.mrf.mxu0
    %v189 = vadd.f32 %v110, %v188
    %v190 = vpop.f32.mrf.mxu0
    %191 = vmatprep.mubr.f32.mxu0 0.0
    %192 = vmatmul.mubr.f32.gmra.mxu0 %v75
    %v193 = vpop.f32.mrf.mxu0
    %v194 = vadd.f32 %v110, %v193
    %v195 = vpop.f32.mrf.mxu0
    %196 = vmatprep.mubr.f32.mxu0 0.0
    %197 = vmatmul.mubr.f32.gmra.mxu0 %v76
    %v198 = vpop.f32.mrf.mxu0
    %v199 = vadd.f32 %v110, %v198
    %v200 = vpop.f32.mrf.mxu0
    %201 = vmatprep.mubr.f32.mxu0 0.0
    %202 = vmatmul.mubr.f32.gmra.mxu0 %v77
    %v203 = vpop.f32.mrf.mxu0
    %v204 = vadd.f32 %v110, %v203
    %v205 = vpop.f32.mrf.mxu0
    %206 = vmatprep.mubr.f32.mxu0 0.0
    %207 = vmatmul.mubr.f32.gmra.mxu0 %v78
    %v208 = vpop.f32.mrf.mxu0
    %v209 = vadd.f32 %v110, %v208
    %v210 = vpop.f32.mrf.mxu0
    %211 = vmatprep.mubr.f32.mxu0 0.0
    %212 = vmatmul.mubr.f32.gmra.mxu0 %v79
    %v213 = vpop.f32.mrf.mxu0
    %v214 = vadd.f32 %v110, %v213
    %v215 = vpop.f32.mrf.mxu0
    %216 = vmatprep.mubr.f32.mxu0 0.0
    %217 = vmatmul.mubr.f32.gmra.mxu0 %v80
    %v218 = vpop.f32.mrf.mxu0
    %v219 = vadd.f32 %v110, %v218
    %v220 = vpop.f32.mrf.mxu0
    %221 = vmatprep.mubr.f32.mxu0 0.0
    %222 = vmatmul.mubr.f32.gmra.mxu0 %v81
    %v223 = vpop.f32.mrf.mxu0
    %v224 = vadd.f32 %v110, %v223
    %v225 = vpop.f32.mrf.mxu0
    %226 = vmatprep.mubr.f32.mxu0 0.0
    %227 = vmatmul.mubr.f32.gmra.mxu0 %v82
    %v228 = vpop.f32.mrf.mxu0
    %v229 = vadd.f32 %v110, %v228
    %v230 = vpop.f32.mrf.mxu0
    %231 = vmatprep.mubr.f32.mxu0 0.0
    %232 = vmatmul.mubr.f32.gmra.mxu0 %v83
    %v233 = vpop.f32.mrf.mxu0
    %v234 = vadd.f32 %v110, %v233
    %v235 = vpop.f32.mrf.mxu0
    %236 = vmatprep.mubr.f32.mxu0 0.0
    %237 = vmatmul.mubr.f32.gmra.mxu0 %v84
    %v238 = vpop.f32.mrf.mxu0
    %v239 = vadd.f32 %v110, %v238
    %v240 = vpop.f32.mrf.mxu0
    %241 = vmatprep.mubr.f32.mxu0 0.0
    %242 = vmatmul.mubr.f32.gmra.mxu0 %v85
    %v243 = vpop.f32.mrf.mxu0
    %v244 = vadd.f32 %v110, %v243
    %v245 = vpop.f32.mrf.mxu0
    %246 = vmatprep.mubr.f32.mxu0 0.0
    %247 = vmatmul.mubr.f32.gmra.mxu0 %v86
    %v248 = vpop.f32.mrf.mxu0
    %v249 = vadd.f32 %v110, %v248
    %v250 = vpop.f32.mrf.mxu0
    %251 = vmatprep.mubr.f32.mxu0 0.0
    %252 = vmatmul.mubr.f32.gmra.mxu0 %v87
    %v253 = vpop.f32.mrf.mxu0
    %v254 = vadd.f32 %v110, %v253
    %v255 = vpop.f32.mrf.mxu0
    %256 = vmatprep.mubr.f32.mxu0 0.0
    %257 = vmatmul.mubr.f32.gmra.mxu0 %v88
    %v258 = vpop.f32.mrf.mxu0
    %v259 = vadd.f32 %v110, %v258
    %v260 = vpop.f32.mrf.mxu0
    %261 = vdwg.mxu0
    %v262 = vmul.f32 %v179, 1.702
    %v263 = vmul.f32 %v184, 1.702
    %v264 = vmul.f32 %v189, 1.702
    %v265 = vmul.f32 %v194, 1.702
    %v266 = vmul.f32 %v199, 1.702
    %v267 = vmul.f32 %v204, 1.702
    %v268 = vmul.f32 %v209, 1.702
    %v269 = vmul.f32 %v214, 1.702
    %v270 = vmul.f32 %v219, 1.702
    %v271 = vmul.f32 %v224, 1.702
    %v272 = vmul.f32 %v229, 1.702
    %v273 = vmul.f32 %v234, 1.702
    %v274 = vmul.f32 %v239, 1.702
    %v275 = vmul.f32 %v244, 1.702
    %v276 = vmul.f32 %v249, 1.702
    %v277 = vmul.f32 %v254, 1.702
    %v278 = vmul.f32 %v259, 1.702
    %v279 = vxor.u32 %v262, 2147483648
    %v280 = vxor.u32 %v263, 2147483648
    %v281 = vxor.u32 %v264, 2147483648
    %v282 = vxor.u32 %v265, 2147483648
    %v283 = vxor.u32 %v266, 2147483648
    %v284 = vxor.u32 %v267, 2147483648
    %v285 = vxor.u32 %v268, 2147483648
    %v286 = vxor.u32 %v269, 2147483648
    %v287 = vxor.u32 %v270, 2147483648
    %v288 = vxor.u32 %v271, 2147483648
    %v289 = vxor.u32 %v272, 2147483648
    %v290 = vxor.u32 %v273, 2147483648
    %v291 = vxor.u32 %v274, 2147483648
    %v292 = vxor.u32 %v275, 2147483648
    %v293 = vxor.u32 %v276, 2147483648
    %v294 = vxor.u32 %v277, 2147483648
    %v295 = vxor.u32 %v278, 2147483648
    %v296 = vmul.f32 %v279, 1.442695
    %v297 = vpow.pop %v296
    %v298 = vmul.f32 %v280, 1.442695
    %v299 = vpow.pop %v298
    %v300 = vmul.f32 %v281, 1.442695
    %v301 = vpow.pop %v300
    %v302 = vmul.f32 %v282, 1.442695
    %v303 = vpow.pop %v302
    %v304 = vmul.f32 %v283, 1.442695
    %v305 = vpow.pop %v304
    %v306 = vmul.f32 %v284, 1.442695
    %v307 = vpow.pop %v306
    %v308 = vmul.f32 %v285, 1.442695
    %v309 = vpow.pop %v308
    %v310 = vmul.f32 %v286, 1.442695
    %v311 = vpow.pop %v310
    %v312 = vmul.f32 %v287, 1.442695
    %v313 = vpow.pop %v312
    %v314 = vmul.f32 %v288, 1.442695
    %v315 = vpow.pop %v314
    %v316 = vmul.f32 %v289, 1.442695
    %v317 = vpow.pop %v316
    %v318 = vmul.f32 %v290, 1.442695
    %v319 = vpow.pop %v318
    %v320 = vmul.f32 %v291, 1.442695
    %v321 = vpow.pop %v320
    %v322 = vmul.f32 %v292, 1.442695
    %v323 = vpow.pop %v322
    %v324 = vmul.f32 %v293, 1.442695
    %v325 = vpow.pop %v324
    %v326 = vmul.f32 %v294, 1.442695
    %v327 = vpow.pop %v326
    %v328 = vmul.f32 %v295, 1.442695
    %v329 = vpow.pop %v328
    %v330 = vadd.f32 %v297, 1.0
    %v331 = vadd.f32 %v299, 1.0
    %v332 = vadd.f32 %v301, 1.0
    %v333 = vadd.f32 %v303, 1.0
    %v334 = vadd.f32 %v305, 1.0
    %v335 = vadd.f32 %v307, 1.0
    %v336 = vadd.f32 %v309, 1.0
    %v337 = vadd.f32 %v311, 1.0
    %v338 = vadd.f32 %v313, 1.0
    %v339 = vadd.f32 %v315, 1.0
    %v340 = vadd.f32 %v317, 1.0
    %v341 = vadd.f32 %v319, 1.0
    %v342 = vadd.f32 %v321, 1.0
    %v343 = vadd.f32 %v323, 1.0
    %v344 = vadd.f32 %v325, 1.0
    %v345 = vadd.f32 %v327, 1.0
    %v346 = vadd.f32 %v329, 1.0
    %v347 = vrcp.pop %v330
    %v348 = vmul.f32 1.0, %v347
    %v349 = vrcp.pop %v331
    %v350 = vmul.f32 1.0, %v349
    %v351 = vrcp.pop %v332
    %v352 = vmul.f32 1.0, %v351
    %v353 = vrcp.pop %v333
    %v354 = vmul.f32 1.0, %v353
    %v355 = vrcp.pop %v334
    %v356 = vmul.f32 1.0, %v355
    %v357 = vrcp.pop %v335
    %v358 = vmul.f32 1.0, %v357
    %v359 = vrcp.pop %v336
    %v360 = vmul.f32 1.0, %v359
    %v361 = vrcp.pop %v337
    %v362 = vmul.f32 1.0, %v361
    %v363 = vrcp.pop %v338
    %v364 = vmul.f32 1.0, %v363
    %v365 = vrcp.pop %v339
    %v366 = vmul.f32 1.0, %v365
    %v367 = vrcp.pop %v340
    %v368 = vmul.f32 1.0, %v367
    %v369 = vrcp.pop %v341
    %v370 = vmul.f32 1.0, %v369
    %v371 = vrcp.pop %v342
    %v372 = vmul.f32 1.0, %v371
    %v373 = vrcp.pop %v343
    %v374 = vmul.f32 1.0, %v373
    %v375 = vrcp.pop %v344
    %v376 = vmul.f32 1.0, %v375
    %v377 = vrcp.pop %v345
    %v378 = vmul.f32 1.0, %v377
    %v379 = vrcp.pop %v346
    %v380 = vmul.f32 1.0, %v379
    %v381 = vmul.f32 %v179, %v348
    %v382 = vmul.f32 %v184, %v350
    %v383 = vmul.f32 %v189, %v352
    %v384 = vmul.f32 %v194, %v354
    %v385 = vmul.f32 %v199, %v356
    %v386 = vmul.f32 %v204, %v358
    %v387 = vmul.f32 %v209, %v360
    %v388 = vmul.f32 %v214, %v362
    %v389 = vmul.f32 %v219, %v364
    %v390 = vmul.f32 %v224, %v366
    %v391 = vmul.f32 %v229, %v368
    %v392 = vmul.f32 %v234, %v370
    %v393 = vmul.f32 %v239, %v372
    %v394 = vmul.f32 %v244, %v374
    %v395 = vmul.f32 %v249, %v376
    %v396 = vmul.f32 %v254, %v378
    %v397 = vmul.f32 %v259, %v380
    %vm398 = vcmask 261120
    %v399 = vsel %vm398, %v382, 0.0
    %400 = vadd.xlane.f32.xlu0 %v399
    %v401 = vpop.xlane.xlu0 %400
    %v402 = vsel %vm398, %v383, 0.0
    %403 = vadd.xlane.f32.xlu0 %v402
    %v404 = vpop.xlane.xlu0 %403
    %v405 = vsel %vm398, %v384, 0.0
    %406 = vadd.xlane.f32.xlu0 %v405
    %v407 = vpop.xlane.xlu0 %406
    %v408 = vsel %vm398, %v385, 0.0
    %409 = vadd.xlane.f32.xlu0 %v408
    %v410 = vpop.xlane.xlu0 %409
    %v411 = vsel %vm398, %v386, 0.0
    %412 = vadd.xlane.f32.xlu0 %v411
    %v413 = vpop.xlane.xlu0 %412
    %v414 = vsel %vm398, %v387, 0.0
    %415 = vadd.xlane.f32.xlu0 %v414
    %v416 = vpop.xlane.xlu0 %415
    %v417 = vsel %vm398, %v388, 0.0
    %418 = vadd.xlane.f32.xlu0 %v417
    %v419 = vpop.xlane.xlu0 %418
    %v420 = vsel %vm398, %v389, 0.0
    %421 = vadd.xlane.f32.xlu0 %v420
    %v422 = vpop.xlane.xlu0 %421
    %v423 = vsel %vm398, %v390, 0.0
    %424 = vadd.xlane.f32.xlu0 %v423
    %v425 = vpop.xlane.xlu0 %424
    %v426 = vsel %vm398, %v391, 0.0
    %427 = vadd.xlane.f32.xlu0 %v426
    %v428 = vpop.xlane.xlu0 %427
    %v429 = vsel %vm398, %v392, 0.0
    %430 = vadd.xlane.f32.xlu0 %v429
    %v431 = vpop.xlane.xlu0 %430
    %v432 = vsel %vm398, %v393, 0.0
    %433 = vadd.xlane.f32.xlu0 %v432
    %v434 = vpop.xlane.xlu0 %433
    %v435 = vsel %vm398, %v394, 0.0
    %436 = vadd.xlane.f32.xlu0 %v435
    %v437 = vpop.xlane.xlu0 %436
    %v438 = vsel %vm398, %v395, 0.0
    %439 = vadd.xlane.f32.xlu0 %v438
    %v440 = vpop.xlane.xlu0 %439
    %v441 = vsel %vm398, %v396, 0.0
    %442 = vadd.xlane.f32.xlu0 %v441
    %v443 = vpop.xlane.xlu0 %442
    %v444 = vsel %vm398, %v397, 0.0
    %445 = vadd.xlane.f32.xlu0 %v444
    %v446 = vpop.xlane.xlu0 %445
    %v447 = vrcp.pop 32.0
    %v448 = vmul.f32 %v401, %v447
    %v449 = vmul.f32 %v404, %v447
    %v450 = vmul.f32 %v407, %v447
    %v451 = vmul.f32 %v410, %v447
    %v452 = vmul.f32 %v413, %v447
    %v453 = vmul.f32 %v416, %v447
    %v454 = vmul.f32 %v419, %v447
    %v455 = vmul.f32 %v422, %v447
    %v456 = vmul.f32 %v425, %v447
    %v457 = vmul.f32 %v428, %v447
    %v458 = vmul.f32 %v431, %v447
    %v459 = vmul.f32 %v434, %v447
    %v460 = vmul.f32 %v437, %v447
    %v461 = vmul.f32 %v440, %v447
    %v462 = vmul.f32 %v443, %v447
    %v463 = vmul.f32 %v446, %v447
    %v464 = vsub.f32 %v382, %v448
    %v465 = vsub.f32 %v383, %v449
    %v466 = vsub.f32 %v384, %v450
    %v467 = vsub.f32 %v385, %v451
    %v468 = vsub.f32 %v386, %v452
    %v469 = vsub.f32 %v387, %v453
    %v470 = vsub.f32 %v388, %v454
    %v471 = vsub.f32 %v389, %v455
    %v472 = vsub.f32 %v390, %v456
    %v473 = vsub.f32 %v391, %v457
    %v474 = vsub.f32 %v392, %v458
    %v475 = vsub.f32 %v393, %v459
    %v476 = vsub.f32 %v394, %v460
    %v477 = vsub.f32 %v395, %v461
    %v478 = vsub.f32 %v396, %v462
    %v479 = vsub.f32 %v397, %v463
    %v480 = vmul.f32 %v464, 0.25
    %v481 = vmul.f32 %v465, 0.25
    %v482 = vmul.f32 %v466, 0.25
    %v483 = vmul.f32 %v467, 0.25
    %v484 = vmul.f32 %v468, 0.25
    %v485 = vmul.f32 %v469, 0.25
    %v486 = vmul.f32 %v470, 0.25
    %v487 = vmul.f32 %v471, 0.25
    %v488 = vmul.f32 %v472, 0.25
    %v489 = vmul.f32 %v473, 0.25
    %v490 = vmul.f32 %v474, 0.25
    %v491 = vmul.f32 %v475, 0.25
    %v492 = vmul.f32 %v476, 0.25
    %v493 = vmul.f32 %v477, 0.25
    %v494 = vmul.f32 %v478, 0.25
    %v495 = vmul.f32 %v479, 0.25
    %v496 = vsel %vm398, %v480, 0.0
    %v497 = vsel %vm398, %v481, 0.0
    %v498 = vadd.f32 %v496, %v497
    %v499 = vsel %vm398, %v482, 0.0
    %v500 = vadd.f32 %v498, %v499
    %v501 = vsel %vm398, %v483, 0.0
    %v502 = vadd.f32 %v500, %v501
    %v503 = vsel %vm398, %v484, 0.0
    %v504 = vadd.f32 %v502, %v503
    %v505 = vsel %vm398, %v485, 0.0
    %v506 = vadd.f32 %v504, %v505
    %v507 = vsel %vm398, %v486, 0.0
    %v508 = vadd.f32 %v506, %v507
    %v509 = vsel %vm398, %v487, 0.0
    %v510 = vadd.f32 %v508, %v509
    %v511 = vsel %vm398, %v488, 0.0
    %v512 = vadd.f32 %v510, %v511
    %v513 = vsel %vm398, %v489, 0.0
    %v514 = vadd.f32 %v512, %v513
    %v515 = vsel %vm398, %v490, 0.0
    %v516 = vadd.f32 %v514, %v515
    %v517 = vsel %vm398, %v491, 0.0
    %v518 = vadd.f32 %v516, %v517
    %v519 = vsel %vm398, %v492, 0.0
    %v520 = vadd.f32 %v518, %v519
    %v521 = vsel %vm398, %v493, 0.0
    %v522 = vadd.f32 %v520, %v521
    %v523 = vsel %vm398, %v494, 0.0
    %v524 = vadd.f32 %v522, %v523
    %v525 = vsel %vm398, %v495, 0.0
    %v526 = vadd.f32 %v524, %v525
    %v527 = vmul.f32 %v464, %v526
    %v528 = vmul.f32 %v465, %v526
    %v529 = vmul.f32 %v466, %v526
    %v530 = vmul.f32 %v467, %v526
    %v531 = vmul.f32 %v468, %v526
    %v532 = vmul.f32 %v469, %v526
    %v533 = vmul.f32 %v470, %v526
    %v534 = vmul.f32 %v471, %v526
    %v535 = vmul.f32 %v472, %v526
    %v536 = vmul.f32 %v473, %v526
    %v537 = vmul.f32 %v474, %v526
    %v538 = vmul.f32 %v475, %v526
    %v539 = vmul.f32 %v476, %v526
    %v540 = vmul.f32 %v477, %v526
    %v541 = vmul.f32 %v478, %v526
    %v542 = vmul.f32 %v479, %v526
    %v543 = vsel %vm398, %v527, 0.0
    %544 = vadd.xlane.f32.xlu0 %v543
    %v545 = vpop.xlane.xlu0 %544
    %v546 = vsel %vm398, %v528, 0.0
    %547 = vadd.xlane.f32.xlu0 %v546
    %v548 = vpop.xlane.xlu0 %547
    %v549 = vsel %vm398, %v529, 0.0
    %550 = vadd.xlane.f32.xlu0 %v549
    %v551 = vpop.xlane.xlu0 %550
    %v552 = vsel %vm398, %v530, 0.0
    %553 = vadd.xlane.f32.xlu0 %v552
    %v554 = vpop.xlane.xlu0 %553
    %v555 = vsel %vm398, %v531, 0.0
    %556 = vadd.xlane.f32.xlu0 %v555
    %v557 = vpop.xlane.xlu0 %556
    %v558 = vsel %vm398, %v532, 0.0
    %559 = vadd.xlane.f32.xlu0 %v558
    %v560 = vpop.xlane.xlu0 %559
    %v561 = vsel %vm398, %v533, 0.0
    %562 = vadd.xlane.f32.xlu0 %v561
    %v563 = vpop.xlane.xlu0 %562
    %v564 = vsel %vm398, %v534, 0.0
    %565 = vadd.xlane.f32.xlu0 %v564
    %v566 = vpop.xlane.xlu0 %565
    %v567 = vsel %vm398, %v535, 0.0
    %568 = vadd.xlane.f32.xlu0 %v567
    %v569 = vpop.xlane.xlu0 %568
    %v570 = vsel %vm398, %v536, 0.0
    %571 = vadd.xlane.f32.xlu0 %v570
    %v572 = vpop.xlane.xlu0 %571
    %v573 = vsel %vm398, %v537, 0.0
    %574 = vadd.xlane.f32.xlu0 %v573
    %v575 = vpop.xlane.xlu0 %574
    %v576 = vsel %vm398, %v538, 0.0
    %577 = vadd.xlane.f32.xlu0 %v576
    %v578 = vpop.xlane.xlu0 %577
    %v579 = vsel %vm398, %v539, 0.0
    %580 = vadd.xlane.f32.xlu0 %v579
    %v581 = vpop.xlane.xlu0 %580
    %v582 = vsel %vm398, %v540, 0.0
    %583 = vadd.xlane.f32.xlu0 %v582
    %v584 = vpop.xlane.xlu0 %583
    %v585 = vsel %vm398, %v541, 0.0
    %586 = vadd.xlane.f32.xlu0 %v585
    %v587 = vpop.xlane.xlu0 %586
    %v588 = vsel %vm398, %v542, 0.0
    %589 = vadd.xlane.f32.xlu0 %v588
    %v590 = vpop.xlane.xlu0 %589
    %v591 = vmul.f32 %v545, %v545
    %v592 = vmul.f32 %v548, %v548
    %v593 = vmul.f32 %v551, %v551
    %v594 = vmul.f32 %v554, %v554
    %v595 = vmul.f32 %v557, %v557
    %v596 = vmul.f32 %v560, %v560
    %v597 = vmul.f32 %v563, %v563
    %v598 = vmul.f32 %v566, %v566
    %v599 = vmul.f32 %v569, %v569
    %v600 = vmul.f32 %v572, %v572
    %v601 = vmul.f32 %v575, %v575
    %v602 = vmul.f32 %v578, %v578
    %v603 = vmul.f32 %v581, %v581
    %v604 = vmul.f32 %v584, %v584
    %v605 = vmul.f32 %v587, %v587
    %v606 = vmul.f32 %v590, %v590
    %v607 = vadd.f32 %v591, %v592
    %v608 = vadd.f32 %v607, %v593
    %v609 = vadd.f32 %v608, %v594
    %v610 = vadd.f32 %v609, %v595
    %v611 = vadd.f32 %v610, %v596
    %v612 = vadd.f32 %v611, %v597
    %v613 = vadd.f32 %v612, %v598
    %v614 = vadd.f32 %v613, %v599
    %v615 = vadd.f32 %v614, %v600
    %v616 = vadd.f32 %v615, %v601
    %v617 = vadd.f32 %v616, %v602
    %v618 = vadd.f32 %v617, %v603
    %v619 = vadd.f32 %v618, %v604
    %v620 = vadd.f32 %v619, %v605
    %v621 = vadd.f32 %v620, %v606
    %v622 = vadd.f32 %v621, 1e-12
    %v623 = vrsqrt.pop %v622
    %v624 = vmul.f32 %v545, %v623
    %v625 = vmul.f32 %v548, %v623
    %v626 = vmul.f32 %v551, %v623
    %v627 = vmul.f32 %v554, %v623
    %v628 = vmul.f32 %v557, %v623
    %v629 = vmul.f32 %v560, %v623
    %v630 = vmul.f32 %v563, %v623
    %v631 = vmul.f32 %v566, %v623
    %v632 = vmul.f32 %v569, %v623
    %v633 = vmul.f32 %v572, %v623
    %v634 = vmul.f32 %v575, %v623
    %v635 = vmul.f32 %v578, %v623
    %v636 = vmul.f32 %v581, %v623
    %v637 = vmul.f32 %v584, %v623
    %v638 = vmul.f32 %v587, %v623
    %v639 = vmul.f32 %v590, %v623
    %v640 = vmul.f32 %v464, %v624
    %v641 = vmul.f32 %v465, %v625
    %v642 = vmul.f32 %v466, %v626
    %v643 = vmul.f32 %v467, %v627
    %v644 = vmul.f32 %v468, %v628
    %v645 = vmul.f32 %v469, %v629
    %v646 = vmul.f32 %v470, %v630
    %v647 = vmul.f32 %v471, %v631
    %v648 = vmul.f32 %v472, %v632
    %v649 = vmul.f32 %v473, %v633
    %v650 = vmul.f32 %v474, %v634
    %v651 = vmul.f32 %v475, %v635
    %v652 = vmul.f32 %v476, %v636
    %v653 = vmul.f32 %v477, %v637
    %v654 = vmul.f32 %v478, %v638
    %v655 = vmul.f32 %v479, %v639
    %v656 = vsel %vm398, %v640, 0.0
    %v657 = vsel %vm398, %v641, 0.0
    %v658 = vadd.f32 %v656, %v657
    %v659 = vsel %vm398, %v642, 0.0
    %v660 = vadd.f32 %v658, %v659
    %v661 = vsel %vm398, %v643, 0.0
    %v662 = vadd.f32 %v660, %v661
    %v663 = vsel %vm398, %v644, 0.0
    %v664 = vadd.f32 %v662, %v663
    %v665 = vsel %vm398, %v645, 0.0
    %v666 = vadd.f32 %v664, %v665
    %v667 = vsel %vm398, %v646, 0.0
    %v668 = vadd.f32 %v666, %v667
    %v669 = vsel %vm398, %v647, 0.0
    %v670 = vadd.f32 %v668, %v669
    %v671 = vsel %vm398, %v648, 0.0
    %v672 = vadd.f32 %v670, %v671
    %v673 = vsel %vm398, %v649, 0.0
    %v674 = vadd.f32 %v672, %v673
    %v675 = vsel %vm398, %v650, 0.0
    %v676 = vadd.f32 %v674, %v675
    %v677 = vsel %vm398, %v651, 0.0
    %v678 = vadd.f32 %v676, %v677
    %v679 = vsel %vm398, %v652, 0.0
    %v680 = vadd.f32 %v678, %v679
    %v681 = vsel %vm398, %v653, 0.0
    %v682 = vadd.f32 %v680, %v681
    %v683 = vsel %vm398, %v654, 0.0
    %v684 = vadd.f32 %v682, %v683
    %v685 = vsel %vm398, %v655, 0.0
    %v686 = vadd.f32 %v684, %v685
    %v687 = vmul.f32 %v464, %v686
    %v688 = vmul.f32 %v465, %v686
    %v689 = vmul.f32 %v466, %v686
    %v690 = vmul.f32 %v467, %v686
    %v691 = vmul.f32 %v468, %v686
    %v692 = vmul.f32 %v469, %v686
    %v693 = vmul.f32 %v470, %v686
    %v694 = vmul.f32 %v471, %v686
    %v695 = vmul.f32 %v472, %v686
    %v696 = vmul.f32 %v473, %v686
    %v697 = vmul.f32 %v474, %v686
    %v698 = vmul.f32 %v475, %v686
    %v699 = vmul.f32 %v476, %v686
    %v700 = vmul.f32 %v477, %v686
    %v701 = vmul.f32 %v478, %v686
    %v702 = vmul.f32 %v479, %v686
    %v703 = vsel %vm398, %v687, 0.0
    %704 = vadd.xlane.f32.xlu0 %v703
    %v705 = vpop.xlane.xlu0 %704
    %v706 = vsel %vm398, %v688, 0.0
    %707 = vadd.xlane.f32.xlu0 %v706
    %v708 = vpop.xlane.xlu0 %707
    %v709 = vsel %vm398, %v689, 0.0
    %710 = vadd.xlane.f32.xlu0 %v709
    %v711 = vpop.xlane.xlu0 %710
    %v712 = vsel %vm398, %v690, 0.0
    %713 = vadd.xlane.f32.xlu0 %v712
    %v714 = vpop.xlane.xlu0 %713
    %v715 = vsel %vm398, %v691, 0.0
    %716 = vadd.xlane.f32.xlu0 %v715
    %v717 = vpop.xlane.xlu0 %716
    %v718 = vsel %vm398, %v692, 0.0
    %719 = vadd.xlane.f32.xlu0 %v718
    %v720 = vpop.xlane.xlu0 %719
    %v721 = vsel %vm398, %v693, 0.0
    %722 = vadd.xlane.f32.xlu0 %v721
    %v723 = vpop.xlane.xlu0 %722
    %v724 = vsel %vm398, %v694, 0.0
    %725 = vadd.xlane.f32.xlu0 %v724
    %v726 = vpop.xlane.xlu0 %725
    %v727 = vsel %vm398, %v695, 0.0
    %728 = vadd.xlane.f32.xlu0 %v727
    %v729 = vpop.xlane.xlu0 %728
    %v730 = vsel %vm398, %v696, 0.0
    %731 = vadd.xlane.f32.xlu0 %v730
    %v732 = vpop.xlane.xlu0 %731
    %v733 = vsel %vm398, %v697, 0.0
    %734 = vadd.xlane.f32.xlu0 %v733
    %v735 = vpop.xlane.xlu0 %734
    %v736 = vsel %vm398, %v698, 0.0
    %737 = vadd.xlane.f32.xlu0 %v736
    %v738 = vpop.xlane.xlu0 %737
    %v739 = vsel %vm398, %v699, 0.0
    %740 = vadd.xlane.f32.xlu0 %v739
    %v741 = vpop.xlane.xlu0 %740
    %v742 = vsel %vm398, %v700, 0.0
    %743 = vadd.xlane.f32.xlu0 %v742
    %v744 = vpop.xlane.xlu0 %743
    %v745 = vsel %vm398, %v701, 0.0
    %746 = vadd.xlane.f32.xlu0 %v745
    %v747 = vpop.xlane.xlu0 %746
    %v748 = vsel %vm398, %v702, 0.0
    %749 = vadd.xlane.f32.xlu0 %v748
    %v750 = vpop.xlane.xlu0 %749
    %v751 = vmul.f32 %v705, %v705
    %v752 = vmul.f32 %v708, %v708
    %v753 = vmul.f32 %v711, %v711
    %v754 = vmul.f32 %v714, %v714
    %v755 = vmul.f32 %v717, %v717
    %v756 = vmul.f32 %v720, %v720
    %v757 = vmul.f32 %v723, %v723
    %v758 = vmul.f32 %v726, %v726
    %v759 = vmul.f32 %v729, %v729
    %v760 = vmul.f32 %v732, %v732
    %v761 = vmul.f32 %v735, %v735
    %v762 = vmul.f32 %v738, %v738
    %v763 = vmul.f32 %v741, %v741
    %v764 = vmul.f32 %v744, %v744
    %v765 = vmul.f32 %v747, %v747
    %v766 = vmul.f32 %v750, %v750
    %v767 = vadd.f32 %v751, %v752
    %v768 = vadd.f32 %v767, %v753
    %v769 = vadd.f32 %v768, %v754
    %v770 = vadd.f32 %v769, %v755
    %v771 = vadd.f32 %v770, %v756
    %v772 = vadd.f32 %v771, %v757
    %v773 = vadd.f32 %v772, %v758
    %v774 = vadd.f32 %v773, %v759
    %v775 = vadd.f32 %v774, %v760
    %v776 = vadd.f32 %v775, %v761
    %v777 = vadd.f32 %v776, %v762
    %v778 = vadd.f32 %v777, %v763
    %v779 = vadd.f32 %v778, %v764
    %v780 = vadd.f32 %v779, %v765
    %v781 = vadd.f32 %v780, %v766
    %v782 = vadd.f32 %v781, 1e-12
    %v783 = vrsqrt.pop %v782
    %v784 = vmul.f32 %v705, %v783
    %v785 = vmul.f32 %v708, %v783
    %v786 = vmul.f32 %v711, %v783
    %v787 = vmul.f32 %v714, %v783
    %v788 = vmul.f32 %v717, %v783
    %v789 = vmul.f32 %v720, %v783
    %v790 = vmul.f32 %v723, %v783
    %v791 = vmul.f32 %v726, %v783
    %v792 = vmul.f32 %v729, %v783
    %v793 = vmul.f32 %v732, %v783
    %v794 = vmul.f32 %v735, %v783
    %v795 = vmul.f32 %v738, %v783
    %v796 = vmul.f32 %v741, %v783
    %v797 = vmul.f32 %v744, %v783
    %v798 = vmul.f32 %v747, %v783
    %v799 = vmul.f32 %v750, %v783
    %v800 = vmul.f32 %v464, %v784
    %v801 = vmul.f32 %v465, %v785
    %v802 = vmul.f32 %v466, %v786
    %v803 = vmul.f32 %v467, %v787
    %v804 = vmul.f32 %v468, %v788
    %v805 = vmul.f32 %v469, %v789
    %v806 = vmul.f32 %v470, %v790
    %v807 = vmul.f32 %v471, %v791
    %v808 = vmul.f32 %v472, %v792
    %v809 = vmul.f32 %v473, %v793
    %v810 = vmul.f32 %v474, %v794
    %v811 = vmul.f32 %v475, %v795
    %v812 = vmul.f32 %v476, %v796
    %v813 = vmul.f32 %v477, %v797
    %v814 = vmul.f32 %v478, %v798
    %v815 = vmul.f32 %v479, %v799
    %v816 = vsel %vm398, %v800, 0.0
    %v817 = vsel %vm398, %v801, 0.0
    %v818 = vadd.f32 %v816, %v817
    %v819 = vsel %vm398, %v802, 0.0
    %v820 = vadd.f32 %v818, %v819
    %v821 = vsel %vm398, %v803, 0.0
    %v822 = vadd.f32 %v820, %v821
    %v823 = vsel %vm398, %v804, 0.0
    %v824 = vadd.f32 %v822, %v823
    %v825 = vsel %vm398, %v805, 0.0
    %v826 = vadd.f32 %v824, %v825
    %v827 = vsel %vm398, %v806, 0.0
    %v828 = vadd.f32 %v826, %v827
    %v829 = vsel %vm398, %v807, 0.0
    %v830 = vadd.f32 %v828, %v829
    %v831 = vsel %vm398, %v808, 0.0
    %v832 = vadd.f32 %v830, %v831
    %v833 = vsel %vm398, %v809, 0.0
    %v834 = vadd.f32 %v832, %v833
    %v835 = vsel %vm398, %v810, 0.0
    %v836 = vadd.f32 %v834, %v835
    %v837 = vsel %vm398, %v811, 0.0
    %v838 = vadd.f32 %v836, %v837
    %v839 = vsel %vm398, %v812, 0.0
    %v840 = vadd.f32 %v838, %v839
    %v841 = vsel %vm398, %v813, 0.0
    %v842 = vadd.f32 %v840, %v841
    %v843 = vsel %vm398, %v814, 0.0
    %v844 = vadd.f32 %v842, %v843
    %v845 = vsel %vm398, %v815, 0.0
    %v846 = vadd.f32 %v844, %v845
    %v847 = vmul.f32 %v464, %v846
    %v848 = vmul.f32 %v465, %v846
    %v849 = vmul.f32 %v466, %v846
    %v850 = vmul.f32 %v467, %v846
    %v851 = vmul.f32 %v468, %v846
    %v852 = vmul.f32 %v469, %v846
    %v853 = vmul.f32 %v470, %v846
    %v854 = vmul.f32 %v471, %v846
    %v855 = vmul.f32 %v472, %v846
    %v856 = vmul.f32 %v473, %v846
    %v857 = vmul.f32 %v474, %v846
    %v858 = vmul.f32 %v475, %v846
    %v859 = vmul.f32 %v476, %v846
    %v860 = vmul.f32 %v477, %v846
    %v861 = vmul.f32 %v478, %v846
    %v862 = vmul.f32 %v479, %v846
    %v863 = vsel %vm398, %v847, 0.0
    %864 = vadd.xlane.f32.xlu0 %v863
    %v865 = vpop.xlane.xlu0 %864
    %v866 = vsel %vm398, %v848, 0.0
    %867 = vadd.xlane.f32.xlu0 %v866
    %v868 = vpop.xlane.xlu0 %867
    %v869 = vsel %vm398, %v849, 0.0
    %870 = vadd.xlane.f32.xlu0 %v869
    %v871 = vpop.xlane.xlu0 %870
    %v872 = vsel %vm398, %v850, 0.0
    %873 = vadd.xlane.f32.xlu0 %v872
    %v874 = vpop.xlane.xlu0 %873
    %v875 = vsel %vm398, %v851, 0.0
    %876 = vadd.xlane.f32.xlu0 %v875
    %v877 = vpop.xlane.xlu0 %876
    %v878 = vsel %vm398, %v852, 0.0
    %879 = vadd.xlane.f32.xlu0 %v878
    %v880 = vpop.xlane.xlu0 %879
    %v881 = vsel %vm398, %v853, 0.0
    %882 = vadd.xlane.f32.xlu0 %v881
    %v883 = vpop.xlane.xlu0 %882
    %v884 = vsel %vm398, %v854, 0.0
    %885 = vadd.xlane.f32.xlu0 %v884
    %v886 = vpop.xlane.xlu0 %885
    %v887 = vsel %vm398, %v855, 0.0
    %888 = vadd.xlane.f32.xlu0 %v887
    %v889 = vpop.xlane.xlu0 %888
    %v890 = vsel %vm398, %v856, 0.0
    %891 = vadd.xlane.f32.xlu0 %v890
    %v892 = vpop.xlane.xlu0 %891
    %v893 = vsel %vm398, %v857, 0.0
    %894 = vadd.xlane.f32.xlu0 %v893
    %v895 = vpop.xlane.xlu0 %894
    %v896 = vsel %vm398, %v858, 0.0
    %897 = vadd.xlane.f32.xlu0 %v896
    %v898 = vpop.xlane.xlu0 %897
    %v899 = vsel %vm398, %v859, 0.0
    %900 = vadd.xlane.f32.xlu0 %v899
    %v901 = vpop.xlane.xlu0 %900
    %v902 = vsel %vm398, %v860, 0.0
    %903 = vadd.xlane.f32.xlu0 %v902
    %v904 = vpop.xlane.xlu0 %903
    %v905 = vsel %vm398, %v861, 0.0
    %906 = vadd.xlane.f32.xlu0 %v905
    %v907 = vpop.xlane.xlu0 %906
    %v908 = vsel %vm398, %v862, 0.0
    %909 = vadd.xlane.f32.xlu0 %v908
    %v910 = vpop.xlane.xlu0 %909
    %v911 = vmul.f32 %v865, %v865
    %v912 = vmul.f32 %v868, %v868
    %v913 = vmul.f32 %v871, %v871
    %v914 = vmul.f32 %v874, %v874
    %v915 = vmul.f32 %v877, %v877
    %v916 = vmul.f32 %v880, %v880
    %v917 = vmul.f32 %v883, %v883
    %v918 = vmul.f32 %v886, %v886
    %v919 = vmul.f32 %v889, %v889
    %v920 = vmul.f32 %v892, %v892
    %v921 = vmul.f32 %v895, %v895
    %v922 = vmul.f32 %v898, %v898
    %v923 = vmul.f32 %v901, %v901
    %v924 = vmul.f32 %v904, %v904
    %v925 = vmul.f32 %v907, %v907
    %v926 = vmul.f32 %v910, %v910
    %v927 = vadd.f32 %v911, %v912
    %v928 = vadd.f32 %v927, %v913
    %v929 = vadd.f32 %v928, %v914
    %v930 = vadd.f32 %v929, %v915
    %v931 = vadd.f32 %v930, %v916
    %v932 = vadd.f32 %v931, %v917
    %v933 = vadd.f32 %v932, %v918
    %v934 = vadd.f32 %v933, %v919
    %v935 = vadd.f32 %v934, %v920
    %v936 = vadd.f32 %v935, %v921
    %v937 = vadd.f32 %v936, %v922
    %v938 = vadd.f32 %v937, %v923
    %v939 = vadd.f32 %v938, %v924
    %v940 = vadd.f32 %v939, %v925
    %v941 = vadd.f32 %v940, %v926
    %v942 = vadd.f32 %v941, 1e-12
    %v943 = vrsqrt.pop %v942
    %v944 = vmul.f32 %v865, %v943
    %v945 = vmul.f32 %v868, %v943
    %v946 = vmul.f32 %v871, %v943
    %v947 = vmul.f32 %v874, %v943
    %v948 = vmul.f32 %v877, %v943
    %v949 = vmul.f32 %v880, %v943
    %v950 = vmul.f32 %v883, %v943
    %v951 = vmul.f32 %v886, %v943
    %v952 = vmul.f32 %v889, %v943
    %v953 = vmul.f32 %v892, %v943
    %v954 = vmul.f32 %v895, %v943
    %v955 = vmul.f32 %v898, %v943
    %v956 = vmul.f32 %v901, %v943
    %v957 = vmul.f32 %v904, %v943
    %v958 = vmul.f32 %v907, %v943
    %v959 = vmul.f32 %v910, %v943
    %v960 = vmul.f32 %v464, %v944
    %v961 = vmul.f32 %v465, %v945
    %v962 = vmul.f32 %v466, %v946
    %v963 = vmul.f32 %v467, %v947
    %v964 = vmul.f32 %v468, %v948
    %v965 = vmul.f32 %v469, %v949
    %v966 = vmul.f32 %v470, %v950
    %v967 = vmul.f32 %v471, %v951
    %v968 = vmul.f32 %v472, %v952
    %v969 = vmul.f32 %v473, %v953
    %v970 = vmul.f32 %v474, %v954
    %v971 = vmul.f32 %v475, %v955
    %v972 = vmul.f32 %v476, %v956
    %v973 = vmul.f32 %v477, %v957
    %v974 = vmul.f32 %v478, %v958
    %v975 = vmul.f32 %v479, %v959
    %v976 = vsel %vm398, %v960, 0.0
    %v977 = vsel %vm398, %v961, 0.0
    %v978 = vadd.f32 %v976, %v977
    %v979 = vsel %vm398, %v962, 0.0
    %v980 = vadd.f32 %v978, %v979
    %v981 = vsel %vm398, %v963, 0.0
    %v982 = vadd.f32 %v980, %v981
    %v983 = vsel %vm398, %v964, 0.0
    %v984 = vadd.f32 %v982, %v983
    %v985 = vsel %vm398, %v965, 0.0
    %v986 = vadd.f32 %v984, %v985
    %v987 = vsel %vm398, %v966, 0.0
    %v988 = vadd.f32 %v986, %v987
    %v989 = vsel %vm398, %v967, 0.0
    %v990 = vadd.f32 %v988, %v989
    %v991 = vsel %vm398, %v968, 0.0
    %v992 = vadd.f32 %v990, %v991
    %v993 = vsel %vm398, %v969, 0.0
    %v994 = vadd.f32 %v992, %v993
    %v995 = vsel %vm398, %v970, 0.0
    %v996 = vadd.f32 %v994, %v995
    %v997 = vsel %vm398, %v971, 0.0
    %v998 = vadd.f32 %v996, %v997
    %v999 = vsel %vm398, %v972, 0.0
    %v1000 = vadd.f32 %v998, %v999
    %v1001 = vsel %vm398, %v973, 0.0
    %v1002 = vadd.f32 %v1000, %v1001
    %v1003 = vsel %vm398, %v974, 0.0
    %v1004 = vadd.f32 %v1002, %v1003
    %v1005 = vsel %vm398, %v975, 0.0
    %v1006 = vadd.f32 %v1004, %v1005
    %v1007 = vmul.f32 %v464, %v1006
    %v1008 = vmul.f32 %v465, %v1006
    %v1009 = vmul.f32 %v466, %v1006
    %v1010 = vmul.f32 %v467, %v1006
    %v1011 = vmul.f32 %v468, %v1006
    %v1012 = vmul.f32 %v469, %v1006
    %v1013 = vmul.f32 %v470, %v1006
    %v1014 = vmul.f32 %v471, %v1006
    %v1015 = vmul.f32 %v472, %v1006
    %v1016 = vmul.f32 %v473, %v1006
    %v1017 = vmul.f32 %v474, %v1006
    %v1018 = vmul.f32 %v475, %v1006
    %v1019 = vmul.f32 %v476, %v1006
    %v1020 = vmul.f32 %v477, %v1006
    %v1021 = vmul.f32 %v478, %v1006
    %v1022 = vmul.f32 %v479, %v1006
    %v1023 = vsel %vm398, %v1007, 0.0
    %1024 = vadd.xlane.f32.xlu0 %v1023
    %v1025 = vpop.xlane.xlu0 %1024
    %v1026 = vsel %vm398, %v1008, 0.0
    %1027 = vadd.xlane.f32.xlu0 %v1026
    %v1028 = vpop.xlane.xlu0 %1027
    %v1029 = vsel %vm398, %v1009, 0.0
    %1030 = vadd.xlane.f32.xlu0 %v1029
    %v1031 = vpop.xlane.xlu0 %1030
    %v1032 = vsel %vm398, %v1010, 0.0
    %1033 = vadd.xlane.f32.xlu0 %v1032
    %v1034 = vpop.xlane.xlu0 %1033
    %v1035 = vsel %vm398, %v1011, 0.0
    %1036 = vadd.xlane.f32.xlu0 %v1035
    %v1037 = vpop.xlane.xlu0 %1036
    %v1038 = vsel %vm398, %v1012, 0.0
    %1039 = vadd.xlane.f32.xlu0 %v1038
    %v1040 = vpop.xlane.xlu0 %1039
    %v1041 = vsel %vm398, %v1013, 0.0
    %1042 = vadd.xlane.f32.xlu0 %v1041
    %v1043 = vpop.xlane.xlu0 %1042
    %v1044 = vsel %vm398, %v1014, 0.0
    %1045 = vadd.xlane.f32.xlu0 %v1044
    %v1046 = vpop.xlane.xlu0 %1045
    %v1047 = vsel %vm398, %v1015, 0.0
    %1048 = vadd.xlane.f32.xlu0 %v1047
    %v1049 = vpop.xlane.xlu0 %1048
    %v1050 = vsel %vm398, %v1016, 0.0
    %1051 = vadd.xlane.f32.xlu0 %v1050
    %v1052 = vpop.xlane.xlu0 %1051
    %v1053 = vsel %vm398, %v1017, 0.0
    %1054 = vadd.xlane.f32.xlu0 %v1053
    %v1055 = vpop.xlane.xlu0 %1054
    %v1056 = vsel %vm398, %v1018, 0.0
    %1057 = vadd.xlane.f32.xlu0 %v1056
    %v1058 = vpop.xlane.xlu0 %1057
    %v1059 = vsel %vm398, %v1019, 0.0
    %1060 = vadd.xlane.f32.xlu0 %v1059
    %v1061 = vpop.xlane.xlu0 %1060
    %v1062 = vsel %vm398, %v1020, 0.0
    %1063 = vadd.xlane.f32.xlu0 %v1062
    %v1064 = vpop.xlane.xlu0 %1063
    %v1065 = vsel %vm398, %v1021, 0.0
    %1066 = vadd.xlane.f32.xlu0 %v1065
    %v1067 = vpop.xlane.xlu0 %1066
    %v1068 = vsel %vm398, %v1022, 0.0
    %1069 = vadd.xlane.f32.xlu0 %v1068
    %v1070 = vpop.xlane.xlu0 %1069
    %v1071 = vmul.f32 %v1025, %v1025
    %v1072 = vmul.f32 %v1028, %v1028
    %v1073 = vmul.f32 %v1031, %v1031
    %v1074 = vmul.f32 %v1034, %v1034
    %v1075 = vmul.f32 %v1037, %v1037
    %v1076 = vmul.f32 %v1040, %v1040
    %v1077 = vmul.f32 %v1043, %v1043
    %v1078 = vmul.f32 %v1046, %v1046
    %v1079 = vmul.f32 %v1049, %v1049
    %v1080 = vmul.f32 %v1052, %v1052
    %v1081 = vmul.f32 %v1055, %v1055
    %v1082 = vmul.f32 %v1058, %v1058
    %v1083 = vmul.f32 %v1061, %v1061
    %v1084 = vmul.f32 %v1064, %v1064
    %v1085 = vmul.f32 %v1067, %v1067
    %v1086 = vmul.f32 %v1070, %v1070
    %v1087 = vadd.f32 %v1071, %v1072
    %v1088 = vadd.f32 %v1087, %v1073
    %v1089 = vadd.f32 %v1088, %v1074
    %v1090 = vadd.f32 %v1089, %v1075
    %v1091 = vadd.f32 %v1090, %v1076
    %v1092 = vadd.f32 %v1091, %v1077
    %v1093 = vadd.f32 %v1092, %v1078
    %v1094 = vadd.f32 %v1093, %v1079
    %v1095 = vadd.f32 %v1094, %v1080
    %v1096 = vadd.f32 %v1095, %v1081
    %v1097 = vadd.f32 %v1096, %v1082
    %v1098 = vadd.f32 %v1097, %v1083
    %v1099 = vadd.f32 %v1098, %v1084
    %v1100 = vadd.f32 %v1099, %v1085
    %v1101 = vadd.f32 %v1100, %v1086
    %v1102 = vadd.f32 %v1101, 1e-12
    %v1103 = vrsqrt.pop %v1102
    %v1104 = vmul.f32 %v1025, %v1103
    %v1105 = vmul.f32 %v1028, %v1103
    %v1106 = vmul.f32 %v1031, %v1103
    %v1107 = vmul.f32 %v1034, %v1103
    %v1108 = vmul.f32 %v1037, %v1103
    %v1109 = vmul.f32 %v1040, %v1103
    %v1110 = vmul.f32 %v1043, %v1103
    %v1111 = vmul.f32 %v1046, %v1103
    %v1112 = vmul.f32 %v1049, %v1103
    %v1113 = vmul.f32 %v1052, %v1103
    %v1114 = vmul.f32 %v1055, %v1103
    %v1115 = vmul.f32 %v1058, %v1103
    %v1116 = vmul.f32 %v1061, %v1103
    %v1117 = vmul.f32 %v1064, %v1103
    %v1118 = vmul.f32 %v1067, %v1103
    %v1119 = vmul.f32 %v1070, %v1103
    %v1120 = vmul.f32 %v382, %v1104
    %v1121 = vmul.f32 %v383, %v1105
    %v1122 = vmul.f32 %v384, %v1106
    %v1123 = vmul.f32 %v385, %v1107
    %v1124 = vmul.f32 %v386, %v1108
    %v1125 = vmul.f32 %v387, %v1109
    %v1126 = vmul.f32 %v388, %v1110
    %v1127 = vmul.f32 %v389, %v1111
    %v1128 = vmul.f32 %v390, %v1112
    %v1129 = vmul.f32 %v391, %v1113
    %v1130 = vmul.f32 %v392, %v1114
    %v1131 = vmul.f32 %v393, %v1115
    %v1132 = vmul.f32 %v394, %v1116
    %v1133 = vmul.f32 %v395, %v1117
    %v1134 = vmul.f32 %v396, %v1118
    %v1135 = vmul.f32 %v397, %v1119
    %v1136 = vsel %vm398, %v1120, 0.0
    %v1137 = vsel %vm398, %v1121, 0.0
    %v1138 = vadd.f32 %v1136, %v1137
    %v1139 = vsel %vm398, %v1122, 0.0
    %v1140 = vadd.f32 %v1138, %v1139
    %v1141 = vsel %vm398, %v1123, 0.0
    %v1142 = vadd.f32 %v1140, %v1141
    %v1143 = vsel %vm398, %v1124, 0.0
    %v1144 = vadd.f32 %v1142, %v1143
    %v1145 = vsel %vm398, %v1125, 0.0
    %v1146 = vadd.f32 %v1144, %v1145
    %v1147 = vsel %vm398, %v1126, 0.0
    %v1148 = vadd.f32 %v1146, %v1147
    %v1149 = vsel %vm398, %v1127, 0.0
    %v1150 = vadd.f32 %v1148, %v1149
    %v1151 = vsel %vm398, %v1128, 0.0
    %v1152 = vadd.f32 %v1150, %v1151
    %v1153 = vsel %vm398, %v1129, 0.0
    %v1154 = vadd.f32 %v1152, %v1153
    %v1155 = vsel %vm398, %v1130, 0.0
    %v1156 = vadd.f32 %v1154, %v1155
    %v1157 = vsel %vm398, %v1131, 0.0
    %v1158 = vadd.f32 %v1156, %v1157
    %v1159 = vsel %vm398, %v1132, 0.0
    %v1160 = vadd.f32 %v1158, %v1159
    %v1161 = vsel %vm398, %v1133, 0.0
    %v1162 = vadd.f32 %v1160, %v1161
    %v1163 = vsel %vm398, %v1134, 0.0
    %v1164 = vadd.f32 %v1162, %v1163
    %v1165 = vsel %vm398, %v1135, 0.0
    %v1166 = vadd.f32 %v1164, %v1165
    %v1167 = vld [vmem:[%s4] sm:$0x1]
    %v1169 = vrot.slane %v381, 7
    %v1172 = vrot.slane %v1166, 3
    %v1175 = vlaneseq
    %v1176 = vshrl.u32 %v1175, 7
    %v1177 = vsub.s32 0, %v1176
    %v1178 = vrot.slane %v1167, %v1177
    %v1180 = vrot.slane %v381, 2
    %v1182 = vrot.slane %v1166, 6
    %vm1184 = vcmask 1040384
    %v1185 = vsel %vm1184, %v1167, %v1169
    %vm1186 = vcmask 1044480
    %v1187 = vsel %vm1186, %v1185, %v1172
    %v1188 = vsel %vm1184, %v1172, %v1178
    %vm1189 = vcmask 1041408
    %v1190 = vsel %vm1189, %v1188, %v1180
    %vm1191 = vcmask 1045504
    %v1192 = vsel %vm1191, %v1190, %v1182
    %v1193 = vld [vmem:[%s5] sm:$0xff]
    %v1194 = vld [vmem:[%s5 + $0x8] sm:$0x1]
    %v1197 = vrot.slane %v1193, 7
    %v1198 = vrot.slane %v1194, 7
    %v1199 = vsel %vm1184, %v1197, %v1198
    %v1202 = vsel %vm1184, %v1194, %v1197
    %v1203 = vadd.f32 %v1187, %v1193
    %v1204 = vadd.f32 %v1192, %v1202
    %v1205 = vadd.f32 %v1182, %v1199
    %v1206 = vld [vmem:[%s6] sm:$0x1]
    %v1207 = vld [vmem:[%s7] sm:$0x1]
    %v1208 = vsel %vm398, %v1203, 0.0
    %1209 = vadd.xlane.f32.xlu0 %v1208
    %v1210 = vpop.xlane.xlu0 %1209
    %v1211 = vsel %vm398, %v1204, 0.0
    %1212 = vadd.xlane.f32.xlu0 %v1211
    %v1213 = vpop.xlane.xlu0 %1212
    %vm1214 = vcmask 254976
    %v1215 = vsel %vm1214, %v1205, 0.0
    %1216 = vadd.xlane.f32.xlu0 %v1215
    %v1217 = vpop.xlane.xlu0 %1216
    %v1218 = vmul.f32 %v1210, %v447
    %v1219 = vmul.f32 %v1213, %v447
    %v1220 = vmul.f32 %v1217, %v447
    %v1221 = vsub.f32 %v1203, %v1218
    %v1222 = vsub.f32 %v1204, %v1219
    %v1223 = vsub.f32 %v1205, %v1220
    %v1224 = vmul.f32 %v1221, %v1221
    %v1225 = vmul.f32 %v1222, %v1222
    %v1226 = vmul.f32 %v1223, %v1223
    %v1227 = vsel %vm398, %v1224, 0.0
    %1228 = vadd.xlane.f32.xlu0 %v1227
    %v1229 = vpop.xlane.xlu0 %1228
    %v1230 = vsel %vm398, %v1225, 0.0
    %1231 = vadd.xlane.f32.xlu0 %v1230
    %v1232 = vpop.xlane.xlu0 %1231
    %v1233 = vsel %vm1214, %v1226, 0.0
    %1234 = vadd.xlane.f32.xlu0 %v1233
    %v1235 = vpop.xlane.xlu0 %1234
    %v1236 = vmul.f32 %v1229, %v447
    %v1237 = vmul.f32 %v1232, %v447
    %v1238 = vmul.f32 %v1235, %v447
    %v1239 = vadd.f32 %v1236, 1e-05
    %v1240 = vadd.f32 %v1237, 1e-05
    %v1241 = vadd.f32 %v1238, 1e-05
    %v1242 = vrsqrt.pop %v1239
    %v1243 = vrsqrt.pop %v1240
    %v1244 = vrsqrt.pop %v1241
    %v1245 = vmul.f32 %v1221, %v1242
    %v1246 = vmul.f32 %v1222, %v1243
    %v1247 = vmul.f32 %v1223, %v1244
    %v1249 = vlaneseq
    %v1250 = vshrl.u32 %v1249, 7
    %v1251 = vsub.s32 0, %v1250
    %v1252 = vrot.slane %v1206, %v1251
    %v1254 = vmul.f32 %v1245, %v1252
    %v1255 = vmul.f32 %v1246, %v1252
    %v1256 = vmul.f32 %v1247, %v1252
    %v1258 = vlaneseq
    %v1259 = vshrl.u32 %v1258, 7
    %v1260 = vsub.s32 0, %v1259
    %v1261 = vrot.slane %v1207, %v1260
    %v1263 = vadd.f32 %v1254, %v1261
    %v1264 = vadd.f32 %v1255, %v1261
    %v1265 = vadd.f32 %v1256, %v1261
    %v1266 = vld [vmem:[%s8] sm:$0x1]
    %v1267 = vld [vmem:[%s9] sm:$0x1]
    %v1268 = vsel %vm398, %v1263, 0.0
    %1269 = vadd.xlane.f32.xlu0 %v1268
    %v1270 = vpop.xlane.xlu0 %1269
    %v1271 = vsel %vm398, %v1264, 0.0
    %1272 = vadd.xlane.f32.xlu0 %v1271
    %v1273 = vpop.xlane.xlu0 %1272
    %v1274 = vsel %vm1214, %v1265, 0.0
    %1275 = vadd.xlane.f32.xlu0 %v1274
    %v1276 = vpop.xlane.xlu0 %1275
    %v1277 = vmul.f32 %v1270, %v447
    %v1278 = vmul.f32 %v1273, %v447
    %v1279 = vmul.f32 %v1276, %v447
    %v1280 = vsub.f32 %v1263, %v1277
    %v1281 = vsub.f32 %v1264, %v1278
    %v1282 = vsub.f32 %v1265, %v1279
    %v1283 = vmul.f32 %v1280, %v1280
    %v1284 = vmul.f32 %v1281, %v1281
    %v1285 = vmul.f32 %v1282, %v1282
    %v1286 = vsel %vm398, %v1283, 0.0
    %1287 = vadd.xlane.f32.xlu0 %v1286
    %v1288 = vpop.xlane.xlu0 %1287
    %v1289 = vsel %vm398, %v1284, 0.0
    %1290 = vadd.xlane.f32.xlu0 %v1289
    %v1291 = vpop.xlane.xlu0 %1290
    %v1292 = vsel %vm1214, %v1285, 0.0
    %1293 = vadd.xlane.f32.xlu0 %v1292
    %v1294 = vpop.xlane.xlu0 %1293
    %v1295 = vmul.f32 %v1288, %v447
    %v1296 = vmul.f32 %v1291, %v447
    %v1297 = vmul.f32 %v1294, %v447
    %v1298 = vadd.f32 %v1295, 1e-05
    %v1299 = vadd.f32 %v1296, 1e-05
    %v1300 = vadd.f32 %v1297, 1e-05
    %v1301 = vrsqrt.pop %v1298
    %v1302 = vrsqrt.pop %v1299
    %v1303 = vrsqrt.pop %v1300
    %v1304 = vmul.f32 %v1280, %v1301
    %v1305 = vmul.f32 %v1281, %v1302
    %v1306 = vmul.f32 %v1282, %v1303
    %v1308 = vlaneseq
    %v1309 = vshrl.u32 %v1308, 7
    %v1310 = vsub.s32 0, %v1309
    %v1311 = vrot.slane %v1266, %v1310
    %v1313 = vmul.f32 %v1304, %v1311
    %v1314 = vmul.f32 %v1305, %v1311
    %v1315 = vmul.f32 %v1306, %v1311
    %v1317 = vlaneseq
    %v1318 = vshrl.u32 %v1317, 7
    %v1319 = vsub.s32 0, %v1318
    %v1320 = vrot.slane %v1267, %v1319
    %v1322 = vadd.f32 %v1313, %v1320
    %v1323 = vadd.f32 %v1314, %v1320
    %v1324 = vadd.f32 %v1315, %v1320
    %v1325 = vld [vmem:[%s10] sm:$0xff]
    %v1326 = vld [vmem:[%s10 + $0x8] sm:$0xff]
    %v1327 = vld [vmem:[%s10 + $0x10] sm:$0xff]
    %v1328 = vld [vmem:[%s10 + $0x18] sm:$0xff]
    %v1329 = vld [vmem:[%s11] sm:$0x1]
    %v1331 = vlaneseq
    %v1332 = vshrl.u32 %v1331, 7
    %v1333 = vsub.s32 0, %v1332
    %v1334 = vrot.slane %v1329, %v1333
    %v1337 = vsel %vm398, %v1322, 0
    %v1340 = vsel %vm398, %v1323, 0
    %v1343 = vsel %vm398, %v1324, 0
    %1345 = vmatprep.subr.mxu0 0.0
    %1346 = vmatpush1.msra.mxu0 0.0
    %1347 = vmatprep.subr.mxu0 0.0
    %1348 = vmatpush1.msra.mxu0 0.0
    %1349 = vmatprep.subr.mxu0 0.0
    %1350 = vmatpush1.msra.mxu0 0.0
    %1351 = vmatprep.subr.mxu0 0.0
    %1352 = vmatpush1.msra.mxu0 0.0
    %1353 = vmatprep.subr.mxu0 0.0
    %1354 = vmatpush1.msra.mxu0 0.0
    %1355 = vmatprep.subr.mxu0 0.0
    %1356 = vmatpush1.msra.mxu0 0.0
    %1357 = vmatprep.subr.mxu0 0.0
    %1358 = vmatpush1.msra.mxu0 0.0
    %1359 = vmatprep.subr.mxu0 0.0
    %1360 = vmatpush1.msra.mxu0 0.0
    %1361 = vmatprep.subr.mxu0 0.0
    %1362 = vmatpush1.msra.mxu0 0.0
    %1363 = vmatprep.subr.mxu0 0.0
    %1364 = vmatpush1.msra.mxu0 0.0
    %1365 = vmatprep.subr.mxu0 0.0
    %1366 = vmatpush1.msra.mxu0 0.0
    %1367 = vmatprep.subr.mxu0 0.0
    %1368 = vmatpush1.msra.mxu0 0.0
    %1369 = vmatprep.subr.mxu0 0.0
    %1370 = vmatpush1.msra.mxu0 %v1328
    %1371 = vmatprep.subr.mxu0 0.0
    %1372 = vmatpush1.msra.mxu0 %v1327
    %1373 = vmatprep.subr.mxu0 0.0
    %1374 = vmatpush1.msra.mxu0 %v1326
    %1375 = vmatprep.subr.mxu0 0.0
    %1376 = vmatpush1.msra.mxu0 %v1325
    %1377 = vmatprep.subr.mxu0 0.0
    %1378 = vmatpush2.msra.mxu0 0.0
    %1379 = vmatprep.subr.mxu0 0.0
    %1380 = vmatpush2.msra.mxu0 0.0
    %1381 = vmatprep.subr.mxu0 0.0
    %1382 = vmatpush2.msra.mxu0 0.0
    %1383 = vmatprep.subr.mxu0 0.0
    %1384 = vmatpush2.msra.mxu0 0.0
    %1385 = vmatprep.subr.mxu0 0.0
    %1386 = vmatpush2.msra.mxu0 0.0
    %1387 = vmatprep.subr.mxu0 0.0
    %1388 = vmatpush2.msra.mxu0 0.0
    %1389 = vmatprep.subr.mxu0 0.0
    %1390 = vmatpush2.msra.mxu0 0.0
    %1391 = vmatprep.subr.mxu0 0.0
    %1392 = vmatpush2.msra.mxu0 0.0
    %1393 = vmatprep.subr.mxu0 0.0
    %1394 = vmatpush2.msra.mxu0 0.0
    %1395 = vmatprep.subr.mxu0 0.0
    %1396 = vmatpush2.msra.mxu0 0.0
    %1397 = vmatprep.subr.mxu0 0.0
    %1398 = vmatpush2.msra.mxu0 0.0
    %1399 = vmatprep.subr.mxu0 0.0
    %1400 = vmatpush2.msra.mxu0 0.0
    %1401 = vmatprep.subr.mxu0 0.0
    %1402 = vmatpush2.msra.mxu0 0.0
    %1403 = vmatprep.subr.mxu0 0.0
    %1404 = vmatpush2.msra.mxu0 0.0
    %1405 = vmatprep.subr.mxu0 0.0
    %1406 = vmatpush2.msra.mxu0 0.0
    %1407 = vmatprep.subr.mxu0 0.0
    %1408 = vmatpush2.msra.mxu0 0.0
    %1409 = vmatprep.mubr.f32.mxu0 0.0
    %1410 = vmatmul.mubr.f32.gmra.mxu0 %v1337
    %v1411 = vpop.f32.mrf.mxu0
    %v1412 = vadd.f32 %v1334, %v1411
    %v1413 = vpop.f32.mrf.mxu0
    %1414 = vmatprep.mubr.f32.mxu0 0.0
    %1415 = vmatmul.mubr.f32.gmra.mxu0 %v1340
    %v1416 = vpop.f32.mrf.mxu0
    %v1417 = vadd.f32 %v1334, %v1416
    %v1418 = vpop.f32.mrf.mxu0
    %1419 = vmatprep.mubr.f32.mxu0 0.0
    %1420 = vmatmul.mubr.f32.gmra.mxu0 %v1343
    %v1421 = vpop.f32.mrf.mxu0
    %v1422 = vadd.f32 %v1334, %v1421
    %v1423 = vpop.f32.mrf.mxu0
    %1424 = vdwg.mxu0
    %v1425 = vlaneseq
    %v1426 = vand.u32 %v1425, 127
    %v1427 = vld [vmem:[%s1] sm:$0x3]
    %vm1428 = vcmp.ge.s32.totalorder %v1426, 0
    %vm1429 = vcmp.lt.s32.totalorder %v1426, 16
    %vm1430 = vmand %vm1428, %vm1429
    %v1431 = vsel %vm1430, 1, 0
    %v1432 = vcvt.s32.f32 %v1431
    %v1433 = vmul.f32 %v1412, %v1432
    %v1434 = vmul.f32 %v1417, %v1432
    %1437 = vrot.lane.b32.xlu0 %v1412, 96
    %v1438 = vpop.permute.xlu0 %1437
    %1439 = vrot.lane.b32.xlu0 %v1417, 96
    %v1440 = vpop.permute.xlu0 %1439
    %v1442 = vsel %vm398, %v1433, 0
    %v1445 = vsel %vm398, %v1434, 0
    %v1447 = vsel %vm398, %v1438, 0
    %v1449 = vsel %vm398, %v1440, 0
    %1451 = vmatprep.subr.mxu0 0.0
    %1452 = vmatpush1.xpose.msra.mxu0 0.0
    %1453 = vmatprep.subr.mxu0 0.0
    %1454 = vmatpush1.xpose.msra.mxu0 0.0
    %1455 = vmatprep.subr.mxu0 0.0
    %1456 = vmatpush1.xpose.msra.mxu0 0.0
    %1457 = vmatprep.subr.mxu0 0.0
    %1458 = vmatpush1.xpose.msra.mxu0 0.0
    %1459 = vmatprep.subr.mxu0 0.0
    %1460 = vmatpush1.xpose.msra.mxu0 0.0
    %1461 = vmatprep.subr.mxu0 0.0
    %1462 = vmatpush1.xpose.msra.mxu0 0.0
    %1463 = vmatprep.subr.mxu0 0.0
    %1464 = vmatpush1.xpose.msra.mxu0 0.0
    %1465 = vmatprep.subr.mxu0 0.0
    %1466 = vmatpush1.xpose.msra.mxu0 0.0
    %1467 = vmatprep.subr.mxu0 0.0
    %1468 = vmatpush1.xpose.msra.mxu0 0.0
    %1469 = vmatprep.subr.mxu0 0.0
    %1470 = vmatpush1.xpose.msra.mxu0 0.0
    %1471 = vmatprep.subr.mxu0 0.0
    %1472 = vmatpush1.xpose.msra.mxu0 0.0
    %1473 = vmatprep.subr.mxu0 0.0
    %1474 = vmatpush1.xpose.msra.mxu0 0.0
    %1475 = vmatprep.subr.mxu0 0.0
    %1476 = vmatpush1.xpose.msra.mxu0 0.0
    %1477 = vmatprep.subr.mxu0 0.0
    %1478 = vmatpush1.xpose.msra.mxu0 0.0
    %1479 = vmatprep.subr.mxu0 0.0
    %1480 = vmatpush1.xpose.msra.mxu0 %v1449
    %1481 = vmatprep.subr.mxu0 0.0
    %1482 = vmatpush1.xpose.msra.mxu0 %v1447
    %1483 = vmatprep.subr.mxu0 0.0
    %1484 = vmatpush2.xpose.msra.mxu0 0.0
    %1485 = vmatprep.subr.mxu0 0.0
    %1486 = vmatpush2.xpose.msra.mxu0 0.0
    %1487 = vmatprep.subr.mxu0 0.0
    %1488 = vmatpush2.xpose.msra.mxu0 0.0
    %1489 = vmatprep.subr.mxu0 0.0
    %1490 = vmatpush2.xpose.msra.mxu0 0.0
    %1491 = vmatprep.subr.mxu0 0.0
    %1492 = vmatpush2.xpose.msra.mxu0 0.0
    %1493 = vmatprep.subr.mxu0 0.0
    %1494 = vmatpush2.xpose.msra.mxu0 0.0
    %1495 = vmatprep.subr.mxu0 0.0
    %1496 = vmatpush2.xpose.msra.mxu0 0.0
    %1497 = vmatprep.subr.mxu0 0.0
    %1498 = vmatpush2.xpose.msra.mxu0 0.0
    %1499 = vmatprep.subr.mxu0 0.0
    %1500 = vmatpush2.xpose.msra.mxu0 0.0
    %1501 = vmatprep.subr.mxu0 0.0
    %1502 = vmatpush2.xpose.msra.mxu0 0.0
    %1503 = vmatprep.subr.mxu0 0.0
    %1504 = vmatpush2.xpose.msra.mxu0 0.0
    %1505 = vmatprep.subr.mxu0 0.0
    %1506 = vmatpush2.xpose.msra.mxu0 0.0
    %1507 = vmatprep.subr.mxu0 0.0
    %1508 = vmatpush2.xpose.msra.mxu0 0.0
    %1509 = vmatprep.subr.mxu0 0.0
    %1510 = vmatpush2.xpose.msra.mxu0 0.0
    %1511 = vmatprep.subr.mxu0 0.0
    %1512 = vmatpush2.xpose.msra.mxu0 0.0
    %1513 = vmatprep.subr.mxu0 0.0
    %1514 = vmatpush2.xpose.msra.mxu0 0.0
    %1515 = vmatprep.mubr.f32.mxu0 0.0
    %1516 = vmatmul.mubr.f32.gmra.mxu0 %v1442
    %v1517 = vpop.f32.mrf.mxu0
    %v1518 = vadd.f32 0.0, %v1517
    %v1519 = vpop.f32.mrf.mxu0
    %1520 = vmatprep.mubr.f32.mxu0 0.0
    %1521 = vmatmul.mubr.f32.gmra.mxu0 %v1445
    %v1522 = vpop.f32.mrf.mxu0
    %v1523 = vadd.f32 0.0, %v1522
    %v1524 = vpop.f32.mrf.mxu0
    %1525 = vdwg.mxu0
    %v1526 = vmul.f32 %v1518, 0.25
    %v1527 = vmul.f32 %v1523, 0.25
    %v1528 = vlaneseq
    %v1529 = vshrl.u32 %v1528, 7
    %v1530 = vsub.s32 0, %v1529
    %v1531 = vrot.slane %v1427, %v1530
    %v1532 = vadd.f32 %v1526, %v1531
    %v1533 = vadd.f32 %v1527, %v1531
    %vm1534 = vcmask 72704
    %v1535 = vsel %vm1534, %v1532, -inf
    %1536 = vmax.xlane.f32.xlu0 %v1535
    %v1537 = vpop.xlane.xlu0 %1536
    %vm1538 = vcmask 65536
    %v1539 = vsel %vm1538, %v1533, -inf
    %1540 = vmax.xlane.f32.xlu0 %v1539
    %v1541 = vpop.xlane.xlu0 %1540
    %v1542 = vsub.f32 %v1532, %v1537
    %v1543 = vsub.f32 %v1533, %v1541
    %v1544 = vmul.f32 %v1542, 1.442695
    %v1545 = vpow.pop %v1544
    %v1546 = vmul.f32 %v1543, 1.442695
    %v1547 = vpow.pop %v1546
    %v1548 = vsel %vm1534, %v1545, 0.0
    %1549 = vadd.xlane.f32.xlu0 %v1548
    %v1550 = vpop.xlane.xlu0 %1549
    %v1551 = vsel %vm1538, %v1547, 0.0
    %1552 = vadd.xlane.f32.xlu0 %v1551
    %v1553 = vpop.xlane.xlu0 %1552
    %v1554 = vrcp.pop %v1550
    %v1555 = vrcp.pop %v1553
    %v1556 = vmul.f32 %v1545, %v1554
    %v1557 = vmul.f32 %v1547, %v1555
    %1559 = vrot.lane.b32.xlu0 %v1432, 64
    %v1560 = vpop.permute.xlu0 %1559
    %v1562 = vmul.f32 %v1412, %v1560
    %v1563 = vmul.f32 %v1417, %v1560
    %vm1564 = vcmp.ge.s32.totalorder %v1426, 16
    %vm1565 = vcmp.lt.s32.totalorder %v1426, 32
    %vm1566 = vmand %vm1564, %vm1565
    %v1567 = vsel %vm1566, 1, 0
    %v1568 = vcvt.s32.f32 %v1567
    %v1569 = vmul.f32 %v1412, %v1568
    %v1570 = vmul.f32 %v1417, %v1568
    %v1572 = vsel %vm398, %v1569, 0
    %v1575 = vsel %vm398, %v1570, 0
    %1577 = vmatprep.subr.mxu0 0.0
    %1578 = vmatpush1.xpose.msra.mxu0 0.0
    %1579 = vmatprep.subr.mxu0 0.0
    %1580 = vmatpush1.xpose.msra.mxu0 0.0
    %1581 = vmatprep.subr.mxu0 0.0
    %1582 = vmatpush1.xpose.msra.mxu0 0.0
    %1583 = vmatprep.subr.mxu0 0.0
    %1584 = vmatpush1.xpose.msra.mxu0 0.0
    %1585 = vmatprep.subr.mxu0 0.0
    %1586 = vmatpush1.xpose.msra.mxu0 0.0
    %1587 = vmatprep.subr.mxu0 0.0
    %1588 = vmatpush1.xpose.msra.mxu0 0.0
    %1589 = vmatprep.subr.mxu0 0.0
    %1590 = vmatpush1.xpose.msra.mxu0 0.0
    %1591 = vmatprep.subr.mxu0 0.0
    %1592 = vmatpush1.xpose.msra.mxu0 0.0
    %1593 = vmatprep.subr.mxu0 0.0
    %1594 = vmatpush1.xpose.msra.mxu0 0.0
    %1595 = vmatprep.subr.mxu0 0.0
    %1596 = vmatpush1.xpose.msra.mxu0 0.0
    %1597 = vmatprep.subr.mxu0 0.0
    %1598 = vmatpush1.xpose.msra.mxu0 0.0
    %1599 = vmatprep.subr.mxu0 0.0
    %1600 = vmatpush1.xpose.msra.mxu0 0.0
    %1601 = vmatprep.subr.mxu0 0.0
    %1602 = vmatpush1.xpose.msra.mxu0 0.0
    %1603 = vmatprep.subr.mxu0 0.0
    %1604 = vmatpush1.xpose.msra.mxu0 0.0
    %1605 = vmatprep.subr.mxu0 0.0
    %1606 = vmatpush1.xpose.msra.mxu0 %v1449
    %1607 = vmatprep.subr.mxu0 0.0
    %1608 = vmatpush1.xpose.msra.mxu0 %v1447
    %1609 = vmatprep.subr.mxu0 0.0
    %1610 = vmatpush2.xpose.msra.mxu0 0.0
    %1611 = vmatprep.subr.mxu0 0.0
    %1612 = vmatpush2.xpose.msra.mxu0 0.0
    %1613 = vmatprep.subr.mxu0 0.0
    %1614 = vmatpush2.xpose.msra.mxu0 0.0
    %1615 = vmatprep.subr.mxu0 0.0
    %1616 = vmatpush2.xpose.msra.mxu0 0.0
    %1617 = vmatprep.subr.mxu0 0.0
    %1618 = vmatpush2.xpose.msra.mxu0 0.0
    %1619 = vmatprep.subr.mxu0 0.0
    %1620 = vmatpush2.xpose.msra.mxu0 0.0
    %1621 = vmatprep.subr.mxu0 0.0
    %1622 = vmatpush2.xpose.msra.mxu0 0.0
    %1623 = vmatprep.subr.mxu0 0.0
    %1624 = vmatpush2.xpose.msra.mxu0 0.0
    %1625 = vmatprep.subr.mxu0 0.0
    %1626 = vmatpush2.xpose.msra.mxu0 0.0
    %1627 = vmatprep.subr.mxu0 0.0
    %1628 = vmatpush2.xpose.msra.mxu0 0.0
    %1629 = vmatprep.subr.mxu0 0.0
    %1630 = vmatpush2.xpose.msra.mxu0 0.0
    %1631 = vmatprep.subr.mxu0 0.0
    %1632 = vmatpush2.xpose.msra.mxu0 0.0
    %1633 = vmatprep.subr.mxu0 0.0
    %1634 = vmatpush2.xpose.msra.mxu0 0.0
    %1635 = vmatprep.subr.mxu0 0.0
    %1636 = vmatpush2.xpose.msra.mxu0 0.0
    %1637 = vmatprep.subr.mxu0 0.0
    %1638 = vmatpush2.xpose.msra.mxu0 0.0
    %1639 = vmatprep.subr.mxu0 0.0
    %1640 = vmatpush2.xpose.msra.mxu0 0.0
    %1641 = vmatprep.mubr.f32.mxu0 0.0
    %1642 = vmatmul.mubr.f32.gmra.mxu0 %v1572
    %v1643 = vpop.f32.mrf.mxu0
    %v1644 = vadd.f32 0.0, %v1643
    %v1645 = vpop.f32.mrf.mxu0
    %1646 = vmatprep.mubr.f32.mxu0 0.0
    %1647 = vmatmul.mubr.f32.gmra.mxu0 %v1575
    %v1648 = vpop.f32.mrf.mxu0
    %v1649 = vadd.f32 0.0, %v1648
    %v1650 = vpop.f32.mrf.mxu0
    %1651 = vdwg.mxu0
    %v1652 = vmul.f32 %v1644, 0.25
    %v1653 = vmul.f32 %v1649, 0.25
    %v1654 = vadd.f32 %v1652, %v1531
    %v1655 = vadd.f32 %v1653, %v1531
    %v1656 = vsel %vm1534, %v1654, -inf
    %1657 = vmax.xlane.f32.xlu0 %v1656
    %v1658 = vpop.xlane.xlu0 %1657
    %v1659 = vsel %vm1538, %v1655, -inf
    %1660 = vmax.xlane.f32.xlu0 %v1659
    %v1661 = vpop.xlane.xlu0 %1660
    %v1662 = vsub.f32 %v1654, %v1658
    %v1663 = vsub.f32 %v1655, %v1661
    %v1664 = vmul.f32 %v1662, 1.442695
    %v1665 = vpow.pop %v1664
    %v1666 = vmul.f32 %v1663, 1.442695
    %v1667 = vpow.pop %v1666
    %v1668 = vsel %vm1534, %v1665, 0.0
    %1669 = vadd.xlane.f32.xlu0 %v1668
    %v1670 = vpop.xlane.xlu0 %1669
    %v1671 = vsel %vm1538, %v1667, 0.0
    %1672 = vadd.xlane.f32.xlu0 %v1671
    %v1673 = vpop.xlane.xlu0 %1672
    %v1674 = vrcp.pop %v1670
    %v1675 = vrcp.pop %v1673
    %v1676 = vmul.f32 %v1665, %v1674
    %v1677 = vmul.f32 %v1667, %v1675
    %1679 = vrot.lane.b32.xlu0 %v1568, 64
    %v1680 = vpop.permute.xlu0 %1679
    %v1682 = vmul.f32 %v1412, %v1680
    %v1683 = vmul.f32 %v1417, %v1680
    %1686 = vrot.lane.b32.xlu0 %v1682, 64
    %v1687 = vpop.permute.xlu0 %1686
    %1688 = vrot.lane.b32.xlu0 %v1683, 64
    %v1689 = vpop.permute.xlu0 %1688
    %v1692 = vsel %vm1534, %v1676, 0
    %v1695 = vsel %vm1534, %v1677, 0
    %v1697 = vsel %vm1184, %v1689, 0
    %1699 = vmatprep.subr.mxu0 0.0
    %1700 = vmatpush1.msra.mxu0 0.0
    %1701 = vmatprep.subr.mxu0 0.0
    %1702 = vmatpush1.msra.mxu0 0.0
    %1703 = vmatprep.subr.mxu0 0.0
    %1704 = vmatpush1.msra.mxu0 0.0
    %1705 = vmatprep.subr.mxu0 0.0
    %1706 = vmatpush1.msra.mxu0 0.0
    %1707 = vmatprep.subr.mxu0 0.0
    %1708 = vmatpush1.msra.mxu0 0.0
    %1709 = vmatprep.subr.mxu0 0.0
    %1710 = vmatpush1.msra.mxu0 0.0
    %1711 = vmatprep.subr.mxu0 0.0
    %1712 = vmatpush1.msra.mxu0 0.0
    %1713 = vmatprep.subr.mxu0 0.0
    %1714 = vmatpush1.msra.mxu0 0.0
    %1715 = vmatprep.subr.mxu0 0.0
    %1716 = vmatpush1.msra.mxu0 0.0
    %1717 = vmatprep.subr.mxu0 0.0
    %1718 = vmatpush1.msra.mxu0 0.0
    %1719 = vmatprep.subr.mxu0 0.0
    %1720 = vmatpush1.msra.mxu0 0.0
    %1721 = vmatprep.subr.mxu0 0.0
    %1722 = vmatpush1.msra.mxu0 0.0
    %1723 = vmatprep.subr.mxu0 0.0
    %1724 = vmatpush1.msra.mxu0 0.0
    %1725 = vmatprep.subr.mxu0 0.0
    %1726 = vmatpush1.msra.mxu0 0.0
    %1727 = vmatprep.subr.mxu0 0.0
    %1728 = vmatpush1.msra.mxu0 %v1697
    %1729 = vmatprep.subr.mxu0 0.0
    %1730 = vmatpush1.msra.mxu0 %v1687
    %1731 = vmatprep.subr.mxu0 0.0
    %1732 = vmatpush2.msra.mxu0 0.0
    %1733 = vmatprep.subr.mxu0 0.0
    %1734 = vmatpush2.msra.mxu0 0.0
    %1735 = vmatprep.subr.mxu0 0.0
    %1736 = vmatpush2.msra.mxu0 0.0
    %1737 = vmatprep.subr.mxu0 0.0
    %1738 = vmatpush2.msra.mxu0 0.0
    %1739 = vmatprep.subr.mxu0 0.0
    %1740 = vmatpush2.msra.mxu0 0.0
    %1741 = vmatprep.subr.mxu0 0.0
    %1742 = vmatpush2.msra.mxu0 0.0
    %1743 = vmatprep.subr.mxu0 0.0
    %1744 = vmatpush2.msra.mxu0 0.0
    %1745 = vmatprep.subr.mxu0 0.0
    %1746 = vmatpush2.msra.mxu0 0.0
    %1747 = vmatprep.subr.mxu0 0.0
    %1748 = vmatpush2.msra.mxu0 0.0
    %1749 = vmatprep.subr.mxu0 0.0
    %1750 = vmatpush2.msra.mxu0 0.0
    %1751 = vmatprep.subr.mxu0 0.0
    %1752 = vmatpush2.msra.mxu0 0.0
    %1753 = vmatprep.subr.mxu0 0.0
    %1754 = vmatpush2.msra.mxu0 0.0
    %1755 = vmatprep.subr.mxu0 0.0
    %1756 = vmatpush2.msra.mxu0 0.0
    %1757 = vmatprep.subr.mxu0 0.0
    %1758 = vmatpush2.msra.mxu0 0.0
    %1759 = vmatprep.subr.mxu0 0.0
    %1760 = vmatpush2.msra.mxu0 0.0
    %1761 = vmatprep.subr.mxu0 0.0
    %1762 = vmatpush2.msra.mxu0 0.0
    %1763 = vmatprep.mubr.f32.mxu0 0.0
    %1764 = vmatmul.mubr.f32.gmra.mxu0 %v1692
    %v1765 = vpop.f32.mrf.mxu0
    %v1766 = vadd.f32 0.0, %v1765
    %v1767 = vpop.f32.mrf.mxu0
    %1768 = vmatprep.mubr.f32.mxu0 0.0
    %1769 = vmatmul.mubr.f32.gmra.mxu0 %v1695
    %v1770 = vpop.f32.mrf.mxu0
    %v1771 = vadd.f32 0.0, %v1770
    %v1772 = vpop.f32.mrf.mxu0
    %1773 = vdwg.mxu0
    %1776 = vrot.lane.b32.xlu0 %v1562, 64
    %v1777 = vpop.permute.xlu0 %1776
    %1778 = vrot.lane.b32.xlu0 %v1563, 64
    %v1779 = vpop.permute.xlu0 %1778
    %v1782 = vsel %vm1534, %v1556, 0
    %v1785 = vsel %vm1534, %v1557, 0
    %v1787 = vsel %vm1184, %v1779, 0
    %1789 = vmatprep.subr.mxu0 0.0
    %1790 = vmatpush1.msra.mxu0 0.0
    %1791 = vmatprep.subr.mxu0 0.0
    %1792 = vmatpush1.msra.mxu0 0.0
    %1793 = vmatprep.subr.mxu0 0.0
    %1794 = vmatpush1.msra.mxu0 0.0
    %1795 = vmatprep.subr.mxu0 0.0
    %1796 = vmatpush1.msra.mxu0 0.0
    %1797 = vmatprep.subr.mxu0 0.0
    %1798 = vmatpush1.msra.mxu0 0.0
    %1799 = vmatprep.subr.mxu0 0.0
    %1800 = vmatpush1.msra.mxu0 0.0
    %1801 = vmatprep.subr.mxu0 0.0
    %1802 = vmatpush1.msra.mxu0 0.0
    %1803 = vmatprep.subr.mxu0 0.0
    %1804 = vmatpush1.msra.mxu0 0.0
    %1805 = vmatprep.subr.mxu0 0.0
    %1806 = vmatpush1.msra.mxu0 0.0
    %1807 = vmatprep.subr.mxu0 0.0
    %1808 = vmatpush1.msra.mxu0 0.0
    %1809 = vmatprep.subr.mxu0 0.0
    %1810 = vmatpush1.msra.mxu0 0.0
    %1811 = vmatprep.subr.mxu0 0.0
    %1812 = vmatpush1.msra.mxu0 0.0
    %1813 = vmatprep.subr.mxu0 0.0
    %1814 = vmatpush1.msra.mxu0 0.0
    %1815 = vmatprep.subr.mxu0 0.0
    %1816 = vmatpush1.msra.mxu0 0.0
    %1817 = vmatprep.subr.mxu0 0.0
    %1818 = vmatpush1.msra.mxu0 %v1787
    %1819 = vmatprep.subr.mxu0 0.0
    %1820 = vmatpush1.msra.mxu0 %v1777
    %1821 = vmatprep.subr.mxu0 0.0
    %1822 = vmatpush2.msra.mxu0 0.0
    %1823 = vmatprep.subr.mxu0 0.0
    %1824 = vmatpush2.msra.mxu0 0.0
    %1825 = vmatprep.subr.mxu0 0.0
    %1826 = vmatpush2.msra.mxu0 0.0
    %1827 = vmatprep.subr.mxu0 0.0
    %1828 = vmatpush2.msra.mxu0 0.0
    %1829 = vmatprep.subr.mxu0 0.0
    %1830 = vmatpush2.msra.mxu0 0.0
    %1831 = vmatprep.subr.mxu0 0.0
    %1832 = vmatpush2.msra.mxu0 0.0
    %1833 = vmatprep.subr.mxu0 0.0
    %1834 = vmatpush2.msra.mxu0 0.0
    %1835 = vmatprep.subr.mxu0 0.0
    %1836 = vmatpush2.msra.mxu0 0.0
    %1837 = vmatprep.subr.mxu0 0.0
    %1838 = vmatpush2.msra.mxu0 0.0
    %1839 = vmatprep.subr.mxu0 0.0
    %1840 = vmatpush2.msra.mxu0 0.0
    %1841 = vmatprep.subr.mxu0 0.0
    %1842 = vmatpush2.msra.mxu0 0.0
    %1843 = vmatprep.subr.mxu0 0.0
    %1844 = vmatpush2.msra.mxu0 0.0
    %1845 = vmatprep.subr.mxu0 0.0
    %1846 = vmatpush2.msra.mxu0 0.0
    %1847 = vmatprep.subr.mxu0 0.0
    %1848 = vmatpush2.msra.mxu0 0.0
    %1849 = vmatprep.subr.mxu0 0.0
    %1850 = vmatpush2.msra.mxu0 0.0
    %1851 = vmatprep.subr.mxu0 0.0
    %1852 = vmatpush2.msra.mxu0 0.0
    %1853 = vmatprep.mubr.f32.mxu0 0.0
    %1854 = vmatmul.mubr.f32.gmra.mxu0 %v1782
    %v1855 = vpop.f32.mrf.mxu0
    %v1856 = vadd.f32 %v1766, %v1855
    %v1857 = vpop.f32.mrf.mxu0
    %1858 = vmatprep.mubr.f32.mxu0 0.0
    %1859 = vmatmul.mubr.f32.gmra.mxu0 %v1785
    %v1860 = vpop.f32.mrf.mxu0
    %v1861 = vadd.f32 %v1771, %v1860
    %v1862 = vpop.f32.mrf.mxu0
    %1863 = vdwg.mxu0
    %v1864 = vmul.f32 %v1422, %v1432
    %vm1866 = vcmask 1046528
    %v1867 = vrot.slane %v1434, 1
    %v1868 = vrot.slane %v1864, 1
    %v1869 = vsel %vm1866, %v1867, %v1868
    %v1871 = vrot.slane %v1417, 1
    %v1872 = vrot.slane %v1422, 1
    %v1873 = vsel %vm1866, %v1871, %v1872
    %1874 = vrot.lane.b32.xlu0 %v1873, 96
    %v1875 = vpop.permute.xlu0 %1874
    %1876 = vrot.lane.b32.xlu0 %v1872, 96
    %v1877 = vpop.permute.xlu0 %1876
    %v1878 = vsel %vm398, %v1869, 0
    %v1880 = vsel %vm398, %v1868, 0
    %v1882 = vsel %vm398, %v1875, 0
    %v1884 = vsel %vm398, %v1877, 0
    %1886 = vmatprep.subr.mxu0 0.0
    %1887 = vmatpush1.xpose.msra.mxu0 0.0
    %1888 = vmatprep.subr.mxu0 0.0
    %1889 = vmatpush1.xpose.msra.mxu0 0.0
    %1890 = vmatprep.subr.mxu0 0.0
    %1891 = vmatpush1.xpose.msra.mxu0 0.0
    %1892 = vmatprep.subr.mxu0 0.0
    %1893 = vmatpush1.xpose.msra.mxu0 0.0
    %1894 = vmatprep.subr.mxu0 0.0
    %1895 = vmatpush1.xpose.msra.mxu0 0.0
    %1896 = vmatprep.subr.mxu0 0.0
    %1897 = vmatpush1.xpose.msra.mxu0 0.0
    %1898 = vmatprep.subr.mxu0 0.0
    %1899 = vmatpush1.xpose.msra.mxu0 0.0
    %1900 = vmatprep.subr.mxu0 0.0
    %1901 = vmatpush1.xpose.msra.mxu0 0.0
    %1902 = vmatprep.subr.mxu0 0.0
    %1903 = vmatpush1.xpose.msra.mxu0 0.0
    %1904 = vmatprep.subr.mxu0 0.0
    %1905 = vmatpush1.xpose.msra.mxu0 0.0
    %1906 = vmatprep.subr.mxu0 0.0
    %1907 = vmatpush1.xpose.msra.mxu0 0.0
    %1908 = vmatprep.subr.mxu0 0.0
    %1909 = vmatpush1.xpose.msra.mxu0 0.0
    %1910 = vmatprep.subr.mxu0 0.0
    %1911 = vmatpush1.xpose.msra.mxu0 0.0
    %1912 = vmatprep.subr.mxu0 0.0
    %1913 = vmatpush1.xpose.msra.mxu0 0.0
    %1914 = vmatprep.subr.mxu0 0.0
    %1915 = vmatpush1.xpose.msra.mxu0 %v1884
    %1916 = vmatprep.subr.mxu0 0.0
    %1917 = vmatpush1.xpose.msra.mxu0 %v1882
    %1918 = vmatprep.subr.mxu0 0.0
    %1919 = vmatpush2.xpose.msra.mxu0 0.0
    %1920 = vmatprep.subr.mxu0 0.0
    %1921 = vmatpush2.xpose.msra.mxu0 0.0
    %1922 = vmatprep.subr.mxu0 0.0
    %1923 = vmatpush2.xpose.msra.mxu0 0.0
    %1924 = vmatprep.subr.mxu0 0.0
    %1925 = vmatpush2.xpose.msra.mxu0 0.0
    %1926 = vmatprep.subr.mxu0 0.0
    %1927 = vmatpush2.xpose.msra.mxu0 0.0
    %1928 = vmatprep.subr.mxu0 0.0
    %1929 = vmatpush2.xpose.msra.mxu0 0.0
    %1930 = vmatprep.subr.mxu0 0.0
    %1931 = vmatpush2.xpose.msra.mxu0 0.0
    %1932 = vmatprep.subr.mxu0 0.0
    %1933 = vmatpush2.xpose.msra.mxu0 0.0
    %1934 = vmatprep.subr.mxu0 0.0
    %1935 = vmatpush2.xpose.msra.mxu0 0.0
    %1936 = vmatprep.subr.mxu0 0.0
    %1937 = vmatpush2.xpose.msra.mxu0 0.0
    %1938 = vmatprep.subr.mxu0 0.0
    %1939 = vmatpush2.xpose.msra.mxu0 0.0
    %1940 = vmatprep.subr.mxu0 0.0
    %1941 = vmatpush2.xpose.msra.mxu0 0.0
    %1942 = vmatprep.subr.mxu0 0.0
    %1943 = vmatpush2.xpose.msra.mxu0 0.0
    %1944 = vmatprep.subr.mxu0 0.0
    %1945 = vmatpush2.xpose.msra.mxu0 0.0
    %1946 = vmatprep.subr.mxu0 0.0
    %1947 = vmatpush2.xpose.msra.mxu0 0.0
    %1948 = vmatprep.subr.mxu0 0.0
    %1949 = vmatpush2.xpose.msra.mxu0 0.0
    %1950 = vmatprep.mubr.f32.mxu0 0.0
    %1951 = vmatmul.mubr.f32.gmra.mxu0 %v1878
    %v1952 = vpop.f32.mrf.mxu0
    %v1953 = vadd.f32 0.0, %v1952
    %v1954 = vpop.f32.mrf.mxu0
    %1955 = vmatprep.mubr.f32.mxu0 0.0
    %1956 = vmatmul.mubr.f32.gmra.mxu0 %v1880
    %v1957 = vpop.f32.mrf.mxu0
    %v1958 = vadd.f32 0.0, %v1957
    %v1959 = vpop.f32.mrf.mxu0
    %1960 = vdwg.mxu0
    %v1961 = vmul.f32 %v1953, 0.25
    %v1962 = vmul.f32 %v1958, 0.25
    %v1963 = vlaneseq
    %v1964 = vshrl.u32 %v1963, 7
    %v1965 = vsub.s32 1, %v1964
    %v1966 = vrot.slane %v1427, %v1965
    %v1967 = vadd.f32 %v1961, %v1966
    %v1968 = vadd.f32 %v1962, %v1966
    %v1969 = vsel %vm1534, %v1967, -inf
    %1970 = vmax.xlane.f32.xlu0 %v1969
    %v1971 = vpop.xlane.xlu0 %1970
    %v1972 = vsel %vm1538, %v1968, -inf
    %1973 = vmax.xlane.f32.xlu0 %v1972
    %v1974 = vpop.xlane.xlu0 %1973
    %v1975 = vsub.f32 %v1967, %v1971
    %v1976 = vsub.f32 %v1968, %v1974
    %v1977 = vmul.f32 %v1975, 1.442695
    %v1978 = vpow.pop %v1977
    %v1979 = vmul.f32 %v1976, 1.442695
    %v1980 = vpow.pop %v1979
    %v1981 = vsel %vm1534, %v1978, 0.0
    %1982 = vadd.xlane.f32.xlu0 %v1981
    %v1983 = vpop.xlane.xlu0 %1982
    %v1984 = vsel %vm1538, %v1980, 0.0
    %1985 = vadd.xlane.f32.xlu0 %v1984
    %v1986 = vpop.xlane.xlu0 %1985
    %v1987 = vrcp.pop %v1983
    %v1988 = vrcp.pop %v1986
    %v1989 = vmul.f32 %v1978, %v1987
    %v1990 = vmul.f32 %v1980, %v1988
    %v1991 = vmul.f32 %v1422, %v1560
    %v1992 = vmul.f32 %v1422, %v1568
    %v1994 = vrot.slane %v1570, 1
    %v1995 = vrot.slane %v1992, 1
    %v1996 = vsel %vm1866, %v1994, %v1995
    %v1997 = vsel %vm398, %v1996, 0
    %v1999 = vsel %vm398, %v1995, 0
    %2001 = vmatprep.subr.mxu0 0.0
    %2002 = vmatpush1.xpose.msra.mxu0 0.0
    %2003 = vmatprep.subr.mxu0 0.0
    %2004 = vmatpush1.xpose.msra.mxu0 0.0
    %2005 = vmatprep.subr.mxu0 0.0
    %2006 = vmatpush1.xpose.msra.mxu0 0.0
    %2007 = vmatprep.subr.mxu0 0.0
    %2008 = vmatpush1.xpose.msra.mxu0 0.0
    %2009 = vmatprep.subr.mxu0 0.0
    %2010 = vmatpush1.xpose.msra.mxu0 0.0
    %2011 = vmatprep.subr.mxu0 0.0
    %2012 = vmatpush1.xpose.msra.mxu0 0.0
    %2013 = vmatprep.subr.mxu0 0.0
    %2014 = vmatpush1.xpose.msra.mxu0 0.0
    %2015 = vmatprep.subr.mxu0 0.0
    %2016 = vmatpush1.xpose.msra.mxu0 0.0
    %2017 = vmatprep.subr.mxu0 0.0
    %2018 = vmatpush1.xpose.msra.mxu0 0.0
    %2019 = vmatprep.subr.mxu0 0.0
    %2020 = vmatpush1.xpose.msra.mxu0 0.0
    %2021 = vmatprep.subr.mxu0 0.0
    %2022 = vmatpush1.xpose.msra.mxu0 0.0
    %2023 = vmatprep.subr.mxu0 0.0
    %2024 = vmatpush1.xpose.msra.mxu0 0.0
    %2025 = vmatprep.subr.mxu0 0.0
    %2026 = vmatpush1.xpose.msra.mxu0 0.0
    %2027 = vmatprep.subr.mxu0 0.0
    %2028 = vmatpush1.xpose.msra.mxu0 0.0
    %2029 = vmatprep.subr.mxu0 0.0
    %2030 = vmatpush1.xpose.msra.mxu0 %v1884
    %2031 = vmatprep.subr.mxu0 0.0
    %2032 = vmatpush1.xpose.msra.mxu0 %v1882
    %2033 = vmatprep.subr.mxu0 0.0
    %2034 = vmatpush2.xpose.msra.mxu0 0.0
    %2035 = vmatprep.subr.mxu0 0.0
    %2036 = vmatpush2.xpose.msra.mxu0 0.0
    %2037 = vmatprep.subr.mxu0 0.0
    %2038 = vmatpush2.xpose.msra.mxu0 0.0
    %2039 = vmatprep.subr.mxu0 0.0
    %2040 = vmatpush2.xpose.msra.mxu0 0.0
    %2041 = vmatprep.subr.mxu0 0.0
    %2042 = vmatpush2.xpose.msra.mxu0 0.0
    %2043 = vmatprep.subr.mxu0 0.0
    %2044 = vmatpush2.xpose.msra.mxu0 0.0
    %2045 = vmatprep.subr.mxu0 0.0
    %2046 = vmatpush2.xpose.msra.mxu0 0.0
    %2047 = vmatprep.subr.mxu0 0.0
    %2048 = vmatpush2.xpose.msra.mxu0 0.0
    %2049 = vmatprep.subr.mxu0 0.0
    %2050 = vmatpush2.xpose.msra.mxu0 0.0
    %2051 = vmatprep.subr.mxu0 0.0
    %2052 = vmatpush2.xpose.msra.mxu0 0.0
    %2053 = vmatprep.subr.mxu0 0.0
    %2054 = vmatpush2.xpose.msra.mxu0 0.0
    %2055 = vmatprep.subr.mxu0 0.0
    %2056 = vmatpush2.xpose.msra.mxu0 0.0
    %2057 = vmatprep.subr.mxu0 0.0
    %2058 = vmatpush2.xpose.msra.mxu0 0.0
    %2059 = vmatprep.subr.mxu0 0.0
    %2060 = vmatpush2.xpose.msra.mxu0 0.0
    %2061 = vmatprep.subr.mxu0 0.0
    %2062 = vmatpush2.xpose.msra.mxu0 0.0
    %2063 = vmatprep.subr.mxu0 0.0
    %2064 = vmatpush2.xpose.msra.mxu0 0.0
    %2065 = vmatprep.mubr.f32.mxu0 0.0
    %2066 = vmatmul.mubr.f32.gmra.mxu0 %v1997
    %v2067 = vpop.f32.mrf.mxu0
    %v2068 = vadd.f32 0.0, %v2067
    %v2069 = vpop.f32.mrf.mxu0
    %2070 = vmatprep.mubr.f32.mxu0 0.0
    %2071 = vmatmul.mubr.f32.gmra.mxu0 %v1999
    %v2072 = vpop.f32.mrf.mxu0
    %v2073 = vadd.f32 0.0, %v2072
    %v2074 = vpop.f32.mrf.mxu0
    %2075 = vdwg.mxu0
    %v2076 = vmul.f32 %v2068, 0.25
    %v2077 = vmul.f32 %v2073, 0.25
    %v2078 = vadd.f32 %v2076, %v1966
    %v2079 = vadd.f32 %v2077, %v1966
    %v2080 = vsel %vm1534, %v2078, -inf
    %2081 = vmax.xlane.f32.xlu0 %v2080
    %v2082 = vpop.xlane.xlu0 %2081
    %v2083 = vsel %vm1538, %v2079, -inf
    %2084 = vmax.xlane.f32.xlu0 %v2083
    %v2085 = vpop.xlane.xlu0 %2084
    %v2086 = vsub.f32 %v2078, %v2082
    %v2087 = vsub.f32 %v2079, %v2085
    %v2088 = vmul.f32 %v2086, 1.442695
    %v2089 = vpow.pop %v2088
    %v2090 = vmul.f32 %v2087, 1.442695
    %v2091 = vpow.pop %v2090
    %v2092 = vsel %vm1534, %v2089, 0.0
    %2093 = vadd.xlane.f32.xlu0 %v2092
    %v2094 = vpop.xlane.xlu0 %2093
    %v2095 = vsel %vm1538, %v2091, 0.0
    %2096 = vadd.xlane.f32.xlu0 %v2095
    %v2097 = vpop.xlane.xlu0 %2096
    %v2098 = vrcp.pop %v2094
    %v2099 = vrcp.pop %v2097
    %v2100 = vmul.f32 %v2089, %v2098
    %v2101 = vmul.f32 %v2091, %v2099
    %v2102 = vmul.f32 %v1422, %v1680
    %v2104 = vrot.slane %v1683, 1
    %v2105 = vrot.slane %v2102, 1
    %v2106 = vsel %vm1866, %v2104, %v2105
    %2107 = vrot.lane.b32.xlu0 %v2106, 64
    %v2108 = vpop.permute.xlu0 %2107
    %2109 = vrot.lane.b32.xlu0 %v2105, 64
    %v2110 = vpop.permute.xlu0 %2109
    %v2113 = vsel %vm1534, %v2100, 0
    %v2116 = vsel %vm1534, %v2101, 0
    %v2118 = vsel %vm1184, %v2110, 0
    %2120 = vmatprep.subr.mxu0 0.0
    %2121 = vmatpush1.msra.mxu0 0.0
    %2122 = vmatprep.subr.mxu0 0.0
    %2123 = vmatpush1.msra.mxu0 0.0
    %2124 = vmatprep.subr.mxu0 0.0
    %2125 = vmatpush1.msra.mxu0 0.0
    %2126 = vmatprep.subr.mxu0 0.0
    %2127 = vmatpush1.msra.mxu0 0.0
    %2128 = vmatprep.subr.mxu0 0.0
    %2129 = vmatpush1.msra.mxu0 0.0
    %2130 = vmatprep.subr.mxu0 0.0
    %2131 = vmatpush1.msra.mxu0 0.0
    %2132 = vmatprep.subr.mxu0 0.0
    %2133 = vmatpush1.msra.mxu0 0.0
    %2134 = vmatprep.subr.mxu0 0.0
    %2135 = vmatpush1.msra.mxu0 0.0
    %2136 = vmatprep.subr.mxu0 0.0
    %2137 = vmatpush1.msra.mxu0 0.0
    %2138 = vmatprep.subr.mxu0 0.0
    %2139 = vmatpush1.msra.mxu0 0.0
    %2140 = vmatprep.subr.mxu0 0.0
    %2141 = vmatpush1.msra.mxu0 0.0
    %2142 = vmatprep.subr.mxu0 0.0
    %2143 = vmatpush1.msra.mxu0 0.0
    %2144 = vmatprep.subr.mxu0 0.0
    %2145 = vmatpush1.msra.mxu0 0.0
    %2146 = vmatprep.subr.mxu0 0.0
    %2147 = vmatpush1.msra.mxu0 0.0
    %2148 = vmatprep.subr.mxu0 0.0
    %2149 = vmatpush1.msra.mxu0 %v2118
    %2150 = vmatprep.subr.mxu0 0.0
    %2151 = vmatpush1.msra.mxu0 %v2108
    %2152 = vmatprep.subr.mxu0 0.0
    %2153 = vmatpush2.msra.mxu0 0.0
    %2154 = vmatprep.subr.mxu0 0.0
    %2155 = vmatpush2.msra.mxu0 0.0
    %2156 = vmatprep.subr.mxu0 0.0
    %2157 = vmatpush2.msra.mxu0 0.0
    %2158 = vmatprep.subr.mxu0 0.0
    %2159 = vmatpush2.msra.mxu0 0.0
    %2160 = vmatprep.subr.mxu0 0.0
    %2161 = vmatpush2.msra.mxu0 0.0
    %2162 = vmatprep.subr.mxu0 0.0
    %2163 = vmatpush2.msra.mxu0 0.0
    %2164 = vmatprep.subr.mxu0 0.0
    %2165 = vmatpush2.msra.mxu0 0.0
    %2166 = vmatprep.subr.mxu0 0.0
    %2167 = vmatpush2.msra.mxu0 0.0
    %2168 = vmatprep.subr.mxu0 0.0
    %2169 = vmatpush2.msra.mxu0 0.0
    %2170 = vmatprep.subr.mxu0 0.0
    %2171 = vmatpush2.msra.mxu0 0.0
    %2172 = vmatprep.subr.mxu0 0.0
    %2173 = vmatpush2.msra.mxu0 0.0
    %2174 = vmatprep.subr.mxu0 0.0
    %2175 = vmatpush2.msra.mxu0 0.0
    %2176 = vmatprep.subr.mxu0 0.0
    %2177 = vmatpush2.msra.mxu0 0.0
    %2178 = vmatprep.subr.mxu0 0.0
    %2179 = vmatpush2.msra.mxu0 0.0
    %2180 = vmatprep.subr.mxu0 0.0
    %2181 = vmatpush2.msra.mxu0 0.0
    %2182 = vmatprep.subr.mxu0 0.0
    %2183 = vmatpush2.msra.mxu0 0.0
    %2184 = vmatprep.mubr.f32.mxu0 0.0
    %2185 = vmatmul.mubr.f32.gmra.mxu0 %v2113
    %v2186 = vpop.f32.mrf.mxu0
    %v2187 = vadd.f32 0.0, %v2186
    %v2188 = vpop.f32.mrf.mxu0
    %2189 = vmatprep.mubr.f32.mxu0 0.0
    %2190 = vmatmul.mubr.f32.gmra.mxu0 %v2116
    %v2191 = vpop.f32.mrf.mxu0
    %v2192 = vadd.f32 0.0, %v2191
    %v2193 = vpop.f32.mrf.mxu0
    %2194 = vdwg.mxu0
    %v2196 = vrot.slane %v1563, 1
    %v2197 = vrot.slane %v1991, 1
    %v2198 = vsel %vm1866, %v2196, %v2197
    %2199 = vrot.lane.b32.xlu0 %v2198, 64
    %v2200 = vpop.permute.xlu0 %2199
    %2201 = vrot.lane.b32.xlu0 %v2197, 64
    %v2202 = vpop.permute.xlu0 %2201
    %v2205 = vsel %vm1534, %v1989, 0
    %v2208 = vsel %vm1534, %v1990, 0
    %v2210 = vsel %vm1184, %v2202, 0
    %2212 = vmatprep.subr.mxu0 0.0
    %2213 = vmatpush1.msra.mxu0 0.0
    %2214 = vmatprep.subr.mxu0 0.0
    %2215 = vmatpush1.msra.mxu0 0.0
    %2216 = vmatprep.subr.mxu0 0.0
    %2217 = vmatpush1.msra.mxu0 0.0
    %2218 = vmatprep.subr.mxu0 0.0
    %2219 = vmatpush1.msra.mxu0 0.0
    %2220 = vmatprep.subr.mxu0 0.0
    %2221 = vmatpush1.msra.mxu0 0.0
    %2222 = vmatprep.subr.mxu0 0.0
    %2223 = vmatpush1.msra.mxu0 0.0
    %2224 = vmatprep.subr.mxu0 0.0
    %2225 = vmatpush1.msra.mxu0 0.0
    %2226 = vmatprep.subr.mxu0 0.0
    %2227 = vmatpush1.msra.mxu0 0.0
    %2228 = vmatprep.subr.mxu0 0.0
    %2229 = vmatpush1.msra.mxu0 0.0
    %2230 = vmatprep.subr.mxu0 0.0
    %2231 = vmatpush1.msra.mxu0 0.0
    %2232 = vmatprep.subr.mxu0 0.0
    %2233 = vmatpush1.msra.mxu0 0.0
    %2234 = vmatprep.subr.mxu0 0.0
    %2235 = vmatpush1.msra.mxu0 0.0
    %2236 = vmatprep.subr.mxu0 0.0
    %2237 = vmatpush1.msra.mxu0 0.0
    %2238 = vmatprep.subr.mxu0 0.0
    %2239 = vmatpush1.msra.mxu0 0.0
    %2240 = vmatprep.subr.mxu0 0.0
    %2241 = vmatpush1.msra.mxu0 %v2210
    %2242 = vmatprep.subr.mxu0 0.0
    %2243 = vmatpush1.msra.mxu0 %v2200
    %2244 = vmatprep.subr.mxu0 0.0
    %2245 = vmatpush2.msra.mxu0 0.0
    %2246 = vmatprep.subr.mxu0 0.0
    %2247 = vmatpush2.msra.mxu0 0.0
    %2248 = vmatprep.subr.mxu0 0.0
    %2249 = vmatpush2.msra.mxu0 0.0
    %2250 = vmatprep.subr.mxu0 0.0
    %2251 = vmatpush2.msra.mxu0 0.0
    %2252 = vmatprep.subr.mxu0 0.0
    %2253 = vmatpush2.msra.mxu0 0.0
    %2254 = vmatprep.subr.mxu0 0.0
    %2255 = vmatpush2.msra.mxu0 0.0
    %2256 = vmatprep.subr.mxu0 0.0
    %2257 = vmatpush2.msra.mxu0 0.0
    %2258 = vmatprep.subr.mxu0 0.0
    %2259 = vmatpush2.msra.mxu0 0.0
    %2260 = vmatprep.subr.mxu0 0.0
    %2261 = vmatpush2.msra.mxu0 0.0
    %2262 = vmatprep.subr.mxu0 0.0
    %2263 = vmatpush2.msra.mxu0 0.0
    %2264 = vmatprep.subr.mxu0 0.0
    %2265 = vmatpush2.msra.mxu0 0.0
    %2266 = vmatprep.subr.mxu0 0.0
    %2267 = vmatpush2.msra.mxu0 0.0
    %2268 = vmatprep.subr.mxu0 0.0
    %2269 = vmatpush2.msra.mxu0 0.0
    %2270 = vmatprep.subr.mxu0 0.0
    %2271 = vmatpush2.msra.mxu0 0.0
    %2272 = vmatprep.subr.mxu0 0.0
    %2273 = vmatpush2.msra.mxu0 0.0
    %2274 = vmatprep.subr.mxu0 0.0
    %2275 = vmatpush2.msra.mxu0 0.0
    %2276 = vmatprep.mubr.f32.mxu0 0.0
    %2277 = vmatmul.mubr.f32.gmra.mxu0 %v2205
    %v2278 = vpop.f32.mrf.mxu0
    %v2279 = vadd.f32 %v2187, %v2278
    %v2280 = vpop.f32.mrf.mxu0
    %2281 = vmatprep.mubr.f32.mxu0 0.0
    %2282 = vmatmul.mubr.f32.gmra.mxu0 %v2208
    %v2283 = vpop.f32.mrf.mxu0
    %v2284 = vadd.f32 %v2192, %v2283
    %v2285 = vpop.f32.mrf.mxu0
    %2286 = vdwg.mxu0
    %v2289 = vrot.slane %v2279, 7
    %v2290 = vrot.slane %v2284, 7
    %v2291 = vsel %vm1184, %v2289, %v2290
    %v2293 = vsel %vm1184, %v1861, %v2289
    %v2294 = vld [vmem:[%s12] sm:$0xff]
    %v2295 = vld [vmem:[%s12 + $0x8] sm:$0xff]
    %v2296 = vld [vmem:[%s12 + $0x10] sm:$0xff]
    %v2297 = vld [vmem:[%s12 + $0x18] sm:$0xff]
    %v2299 = vsel %vm398, %v1856, 0
    %v2302 = vsel %vm398, %v2293, 0
    %v2304 = vsel %vm398, %v2291, 0
    %2306 = vmatprep.subr.mxu0 0.0
    %2307 = vmatpush1.msra.mxu0 0.0
    %2308 = vmatprep.subr.mxu0 0.0
    %2309 = vmatpush1.msra.mxu0 0.0
    %2310 = vmatprep.subr.mxu0 0.0
    %2311 = vmatpush1.msra.mxu0 0.0
    %2312 = vmatprep.subr.mxu0 0.0
    %2313 = vmatpush1.msra.mxu0 0.0
    %2314 = vmatprep.subr.mxu0 0.0
    %2315 = vmatpush1.msra.mxu0 0.0
    %2316 = vmatprep.subr.mxu0 0.0
    %2317 = vmatpush1.msra.mxu0 0.0
    %2318 = vmatprep.subr.mxu0 0.0
    %2319 = vmatpush1.msra.mxu0 0.0
    %2320 = vmatprep.subr.mxu0 0.0
    %2321 = vmatpush1.msra.mxu0 0.0
    %2322 = vmatprep.subr.mxu0 0.0
    %2323 = vmatpush1.msra.mxu0 0.0
    %2324 = vmatprep.subr.mxu0 0.0
    %2325 = vmatpush1.msra.mxu0 0.0
    %2326 = vmatprep.subr.mxu0 0.0
    %2327 = vmatpush1.msra.mxu0 0.0
    %2328 = vmatprep.subr.mxu0 0.0
    %2329 = vmatpush1.msra.mxu0 0.0
    %2330 = vmatprep.subr.mxu0 0.0
    %2331 = vmatpush1.msra.mxu0 %v2297
    %2332 = vmatprep.subr.mxu0 0.0
    %2333 = vmatpush1.msra.mxu0 %v2296
    %2334 = vmatprep.subr.mxu0 0.0
    %2335 = vmatpush1.msra.mxu0 %v2295
    %2336 = vmatprep.subr.mxu0 0.0
    %2337 = vmatpush1.msra.mxu0 %v2294
    %2338 = vmatprep.subr.mxu0 0.0
    %2339 = vmatpush2.msra.mxu0 0.0
    %2340 = vmatprep.subr.mxu0 0.0
    %2341 = vmatpush2.msra.mxu0 0.0
    %2342 = vmatprep.subr.mxu0 0.0
    %2343 = vmatpush2.msra.mxu0 0.0
    %2344 = vmatprep.subr.mxu0 0.0
    %2345 = vmatpush2.msra.mxu0 0.0
    %2346 = vmatprep.subr.mxu0 0.0
    %2347 = vmatpush2.msra.mxu0 0.0
    %2348 = vmatprep.subr.mxu0 0.0
    %2349 = vmatpush2.msra.mxu0 0.0
    %2350 = vmatprep.subr.mxu0 0.0
    %2351 = vmatpush2.msra.mxu0 0.0
    %2352 = vmatprep.subr.mxu0 0.0
    %2353 = vmatpush2.msra.mxu0 0.0
    %2354 = vmatprep.subr.mxu0 0.0
    %2355 = vmatpush2.msra.mxu0 0.0
    %2356 = vmatprep.subr.mxu0 0.0
    %2357 = vmatpush2.msra.mxu0 0.0
    %2358 = vmatprep.subr.mxu0 0.0
    %2359 = vmatpush2.msra.mxu0 0.0
    %2360 = vmatprep.subr.mxu0 0.0
    %2361 = vmatpush2.msra.mxu0 0.0
    %2362 = vmatprep.subr.mxu0 0.0
    %2363 = vmatpush2.msra.mxu0 0.0
    %2364 = vmatprep.subr.mxu0 0.0
    %2365 = vmatpush2.msra.mxu0 0.0
    %2366 = vmatprep.subr.mxu0 0.0
    %2367 = vmatpush2.msra.mxu0 0.0
    %2368 = vmatprep.subr.mxu0 0.0
    %2369 = vmatpush2.msra.mxu0 0.0
    %2370 = vmatprep.mubr.f32.mxu0 0.0
    %2371 = vmatmul.mubr.f32.gmra.mxu0 %v2299
    %v2372 = vpop.f32.mrf.mxu0
    %v2373 = vadd.f32 0.0, %v2372
    %v2374 = vpop.f32.mrf.mxu0
    %2375 = vmatprep.mubr.f32.mxu0 0.0
    %2376 = vmatmul.mubr.f32.gmra.mxu0 %v2302
    %v2377 = vpop.f32.mrf.mxu0
    %v2378 = vadd.f32 0.0, %v2377
    %v2379 = vpop.f32.mrf.mxu0
    %2380 = vmatprep.mubr.f32.mxu0 0.0
    %2381 = vmatmul.mubr.f32.gmra.mxu0 %v2304
    %v2382 = vpop.f32.mrf.mxu0
    %v2383 = vadd.f32 0.0, %v2382
    %v2384 = vpop.f32.mrf.mxu0
    %2385 = vdwg.mxu0
    %v2386 = vadd.f32 %v1263, %v2373
    %v2387 = vadd.f32 %v1264, %v2378
    %v2388 = vadd.f32 %v1265, %v2383
    %v2389 = vld [vmem:[%s13] sm:$0x1]
    %v2391 = vlaneseq
    %v2392 = vshrl.u32 %v2391, 7
    %v2393 = vsub.s32 0, %v2392
    %v2394 = vrot.slane %v2389, %v2393
    %v2396 = vadd.f32 %v2386, %v2394
    %v2397 = vadd.f32 %v2387, %v2394
    %v2398 = vadd.f32 %v2388, %v2394
    %v2399 = vld [vmem:[%s14] sm:$0x1]
    %v2400 = vld [vmem:[%s15] sm:$0x1]
    %v2401 = vsel %vm398, %v2396, 0.0
    %2402 = vadd.xlane.f32.xlu0 %v2401
    %v2403 = vpop.xlane.xlu0 %2402
    %v2404 = vsel %vm398, %v2397, 0.0
    %2405 = vadd.xlane.f32.xlu0 %v2404
    %v2406 = vpop.xlane.xlu0 %2405
    %v2407 = vsel %vm1214, %v2398, 0.0
    %2408 = vadd.xlane.f32.xlu0 %v2407
    %v2409 = vpop.xlane.xlu0 %2408
    %v2410 = vmul.f32 %v2403, %v447
    %v2411 = vmul.f32 %v2406, %v447
    %v2412 = vmul.f32 %v2409, %v447
    %v2413 = vsub.f32 %v2396, %v2410
    %v2414 = vsub.f32 %v2397, %v2411
    %v2415 = vsub.f32 %v2398, %v2412
    %v2416 = vmul.f32 %v2413, %v2413
    %v2417 = vmul.f32 %v2414, %v2414
    %v2418 = vmul.f32 %v2415, %v2415
    %v2419 = vsel %vm398, %v2416, 0.0
    %2420 = vadd.xlane.f32.xlu0 %v2419
    %v2421 = vpop.xlane.xlu0 %2420
    %v2422 = vsel %vm398, %v2417, 0.0
    %2423 = vadd.xlane.f32.xlu0 %v2422
    %v2424 = vpop.xlane.xlu0 %2423
    %v2425 = vsel %vm1214, %v2418, 0.0
    %2426 = vadd.xlane.f32.xlu0 %v2425
    %v2427 = vpop.xlane.xlu0 %2426
    %v2428 = vmul.f32 %v2421, %v447
    %v2429 = vmul.f32 %v2424, %v447
    %v2430 = vmul.f32 %v2427, %v447
    %v2431 = vadd.f32 %v2428, 1e-05
    %v2432 = vadd.f32 %v2429, 1e-05
    %v2433 = vadd.f32 %v2430, 1e-05
    %v2434 = vrsqrt.pop %v2431
    %v2435 = vrsqrt.pop %v2432
    %v2436 = vrsqrt.pop %v2433
    %v2437 = vmul.f32 %v2413, %v2434
    %v2438 = vmul.f32 %v2414, %v2435
    %v2439 = vmul.f32 %v2415, %v2436
    %v2441 = vlaneseq
    %v2442 = vshrl.u32 %v2441, 7
    %v2443 = vsub.s32 0, %v2442
    %v2444 = vrot.slane %v2399, %v2443
    %v2446 = vmul.f32 %v2437, %v2444
    %v2447 = vmul.f32 %v2438, %v2444
    %v2448 = vmul.f32 %v2439, %v2444
    %v2450 = vlaneseq
    %v2451 = vshrl.u32 %v2450, 7
    %v2452 = vsub.s32 0, %v2451
    %v2453 = vrot.slane %v2400, %v2452
    %v2455 = vadd.f32 %v2446, %v2453
    %v2456 = vadd.f32 %v2447, %v2453
    %v2457 = vadd.f32 %v2448, %v2453
    %v2458 = vld [vmem:[%s16] sm:$0xff]
    %v2459 = vld [vmem:[%s16 + $0x8] sm:$0xff]
    %v2460 = vld [vmem:[%s16 + $0x10] sm:$0xff]
    %v2461 = vld [vmem:[%s16 + $0x18] sm:$0xff]
    %v2462 = vld [vmem:[%s17] sm:$0x1]
    %v2464 = vlaneseq
    %v2465 = vshrl.u32 %v2464, 7
    %v2466 = vsub.s32 0, %v2465
    %v2467 = vrot.slane %v2462, %v2466
    %v2470 = vsel %vm398, %v2455, 0
    %v2473 = vsel %vm398, %v2456, 0
    %v2476 = vsel %vm398, %v2457, 0
    %2478 = vmatprep.subr.mxu0 0.0
    %2479 = vmatpush1.msra.mxu0 0.0
    %2480 = vmatprep.subr.mxu0 0.0
    %2481 = vmatpush1.msra.mxu0 0.0
    %2482 = vmatprep.subr.mxu0 0.0
    %2483 = vmatpush1.msra.mxu0 0.0
    %2484 = vmatprep.subr.mxu0 0.0
    %2485 = vmatpush1.msra.mxu0 0.0
    %2486 = vmatprep.subr.mxu0 0.0
    %2487 = vmatpush1.msra.mxu0 0.0
    %2488 = vmatprep.subr.mxu0 0.0
    %2489 = vmatpush1.msra.mxu0 0.0
    %2490 = vmatprep.subr.mxu0 0.0
    %2491 = vmatpush1.msra.mxu0 0.0
    %2492 = vmatprep.subr.mxu0 0.0
    %2493 = vmatpush1.msra.mxu0 0.0
    %2494 = vmatprep.subr.mxu0 0.0
    %2495 = vmatpush1.msra.mxu0 0.0
    %2496 = vmatprep.subr.mxu0 0.0
    %2497 = vmatpush1.msra.mxu0 0.0
    %2498 = vmatprep.subr.mxu0 0.0
    %2499 = vmatpush1.msra.mxu0 0.0
    %2500 = vmatprep.subr.mxu0 0.0
    %2501 = vmatpush1.msra.mxu0 0.0
    %2502 = vmatprep.subr.mxu0 0.0
    %2503 = vmatpush1.msra.mxu0 %v2461
    %2504 = vmatprep.subr.mxu0 0.0
    %2505 = vmatpush1.msra.mxu0 %v2460
    %2506 = vmatprep.subr.mxu0 0.0
    %2507 = vmatpush1.msra.mxu0 %v2459
    %2508 = vmatprep.subr.mxu0 0.0
    %2509 = vmatpush1.msra.mxu0 %v2458
    %2510 = vmatprep.subr.mxu0 0.0
    %2511 = vmatpush2.msra.mxu0 0.0
    %2512 = vmatprep.subr.mxu0 0.0
    %2513 = vmatpush2.msra.mxu0 0.0
    %2514 = vmatprep.subr.mxu0 0.0
    %2515 = vmatpush2.msra.mxu0 0.0
    %2516 = vmatprep.subr.mxu0 0.0
    %2517 = vmatpush2.msra.mxu0 0.0
    %2518 = vmatprep.subr.mxu0 0.0
    %2519 = vmatpush2.msra.mxu0 0.0
    %2520 = vmatprep.subr.mxu0 0.0
    %2521 = vmatpush2.msra.mxu0 0.0
    %2522 = vmatprep.subr.mxu0 0.0
    %2523 = vmatpush2.msra.mxu0 0.0
    %2524 = vmatprep.subr.mxu0 0.0
    %2525 = vmatpush2.msra.mxu0 0.0
    %2526 = vmatprep.subr.mxu0 0.0
    %2527 = vmatpush2.msra.mxu0 0.0
    %2528 = vmatprep.subr.mxu0 0.0
    %2529 = vmatpush2.msra.mxu0 0.0
    %2530 = vmatprep.subr.mxu0 0.0
    %2531 = vmatpush2.msra.mxu0 0.0
    %2532 = vmatprep.subr.mxu0 0.0
    %2533 = vmatpush2.msra.mxu0 0.0
    %2534 = vmatprep.subr.mxu0 0.0
    %2535 = vmatpush2.msra.mxu0 0.0
    %2536 = vmatprep.subr.mxu0 0.0
    %2537 = vmatpush2.msra.mxu0 0.0
    %2538 = vmatprep.subr.mxu0 0.0
    %2539 = vmatpush2.msra.mxu0 0.0
    %2540 = vmatprep.subr.mxu0 0.0
    %2541 = vmatpush2.msra.mxu0 0.0
    %2542 = vmatprep.mubr.f32.mxu0 0.0
    %2543 = vmatmul.mubr.f32.gmra.mxu0 %v2470
    %v2544 = vpop.f32.mrf.mxu0
    %v2545 = vadd.f32 %v2467, %v2544
    %v2546 = vpop.f32.mrf.mxu0
    %2547 = vmatprep.mubr.f32.mxu0 0.0
    %2548 = vmatmul.mubr.f32.gmra.mxu0 %v2473
    %v2549 = vpop.f32.mrf.mxu0
    %v2550 = vadd.f32 %v2467, %v2549
    %v2551 = vpop.f32.mrf.mxu0
    %2552 = vmatprep.mubr.f32.mxu0 0.0
    %2553 = vmatmul.mubr.f32.gmra.mxu0 %v2476
    %v2554 = vpop.f32.mrf.mxu0
    %v2555 = vadd.f32 %v2467, %v2554
    %v2556 = vpop.f32.mrf.mxu0
    %2557 = vdwg.mxu0
    %v2558 = vmul.f32 %v2545, 1.702
    %v2559 = vmul.f32 %v2550, 1.702
    %v2560 = vmul.f32 %v2555, 1.702
    %v2561 = vxor.u32 %v2558, 2147483648
    %v2562 = vxor.u32 %v2559, 2147483648
    %v2563 = vxor.u32 %v2560, 2147483648
    %v2564 = vmul.f32 %v2561, 1.442695
    %v2565 = vpow.pop %v2564
    %v2566 = vmul.f32 %v2562, 1.442695
    %v2567 = vpow.pop %v2566
    %v2568 = vmul.f32 %v2563, 1.442695
    %v2569 = vpow.pop %v2568
    %v2570 = vadd.f32 %v2565, 1.0
    %v2571 = vadd.f32 %v2567, 1.0
    %v2572 = vadd.f32 %v2569, 1.0
    %v2573 = vrcp.pop %v2570
    %v2574 = vmul.f32 1.0, %v2573
    %v2575 = vrcp.pop %v2571
    %v2576 = vmul.f32 1.0, %v2575
    %v2577 = vrcp.pop %v2572
    %v2578 = vmul.f32 1.0, %v2577
    %v2579 = vmul.f32 %v2545, %v2574
    %v2580 = vmul.f32 %v2550, %v2576
    %v2581 = vmul.f32 %v2555, %v2578
    %v2582 = vld [vmem:[%s18] sm:$0xff]
    %v2583 = vld [vmem:[%s18 + $0x8] sm:$0xff]
    %v2584 = vld [vmem:[%s18 + $0x10] sm:$0xff]
    %v2585 = vld [vmem:[%s18 + $0x18] sm:$0xff]
    %v2586 = vld [vmem:[%s18 + $0x20] sm:$0xff]
    %v2587 = vld [vmem:[%s18 + $0x28] sm:$0xff]
    %v2588 = vld [vmem:[%s18 + $0x30] sm:$0xff]
    %v2589 = vld [vmem:[%s18 + $0x38] sm:$0xff]
    %v2590 = vld [vmem:[%s18 + $0x40] sm:$0xff]
    %v2591 = vld [vmem:[%s18 + $0x48] sm:$0xff]
    %v2592 = vld [vmem:[%s18 + $0x50] sm:$0xff]
    %v2593 = vld [vmem:[%s18 + $0x58] sm:$0xff]
    %v2594 = vld [vmem:[%s18 + $0x60] sm:$0xff]
    %v2595 = vld [vmem:[%s18 + $0x68] sm:$0xff]
    %v2596 = vld [vmem:[%s18 + $0x70] sm:$0xff]
    %v2597 = vld [vmem:[%s18 + $0x78] sm:$0xff]
    %2598 = vmatprep.subr.mxu0 0.0
    %2599 = vmatpush1.msra.mxu0 %v2597
    %2600 = vmatprep.subr.mxu0 0.0
    %2601 = vmatpush1.msra.mxu0 %v2596
    %2602 = vmatprep.subr.mxu0 0.0
    %2603 = vmatpush1.msra.mxu0 %v2595
    %2604 = vmatprep.subr.mxu0 0.0
    %2605 = vmatpush1.msra.mxu0 %v2594
    %2606 = vmatprep.subr.mxu0 0.0
    %2607 = vmatpush1.msra.mxu0 %v2593
    %2608 = vmatprep.subr.mxu0 0.0
    %2609 = vmatpush1.msra.mxu0 %v2592
    %2610 = vmatprep.subr.mxu0 0.0
    %2611 = vmatpush1.msra.mxu0 %v2591
    %2612 = vmatprep.subr.mxu0 0.0
    %2613 = vmatpush1.msra.mxu0 %v2590
    %2614 = vmatprep.subr.mxu0 0.0
    %2615 = vmatpush1.msra.mxu0 %v2589
    %2616 = vmatprep.subr.mxu0 0.0
    %2617 = vmatpush1.msra.mxu0 %v2588
    %2618 = vmatprep.subr.mxu0 0.0
    %2619 = vmatpush1.msra.mxu0 %v2587
    %2620 = vmatprep.subr.mxu0 0.0
    %2621 = vmatpush1.msra.mxu0 %v2586
    %2622 = vmatprep.subr.mxu0 0.0
    %2623 = vmatpush1.msra.mxu0 %v2585
    %2624 = vmatprep.subr.mxu0 0.0
    %2625 = vmatpush1.msra.mxu0 %v2584
    %2626 = vmatprep.subr.mxu0 0.0
    %2627 = vmatpush1.msra.mxu0 %v2583
    %2628 = vmatprep.subr.mxu0 0.0
    %2629 = vmatpush1.msra.mxu0 %v2582
    %2630 = vmatprep.subr.mxu0 0.0
    %2631 = vmatpush2.msra.mxu0 0.0
    %2632 = vmatprep.subr.mxu0 0.0
    %2633 = vmatpush2.msra.mxu0 0.0
    %2634 = vmatprep.subr.mxu0 0.0
    %2635 = vmatpush2.msra.mxu0 0.0
    %2636 = vmatprep.subr.mxu0 0.0
    %2637 = vmatpush2.msra.mxu0 0.0
    %2638 = vmatprep.subr.mxu0 0.0
    %2639 = vmatpush2.msra.mxu0 0.0
    %2640 = vmatprep.subr.mxu0 0.0
    %2641 = vmatpush2.msra.mxu0 0.0
    %2642 = vmatprep.subr.mxu0 0.0
    %2643 = vmatpush2.msra.mxu0 0.0
    %2644 = vmatprep.subr.mxu0 0.0
    %2645 = vmatpush2.msra.mxu0 0.0
    %2646 = vmatprep.subr.mxu0 0.0
    %2647 = vmatpush2.msra.mxu0 0.0
    %2648 = vmatprep.subr.mxu0 0.0
    %2649 = vmatpush2.msra.mxu0 0.0
    %2650 = vmatprep.subr.mxu0 0.0
    %2651 = vmatpush2.msra.mxu0 0.0
    %2652 = vmatprep.subr.mxu0 0.0
    %2653 = vmatpush2.msra.mxu0 0.0
    %2654 = vmatprep.subr.mxu0 0.0
    %2655 = vmatpush2.msra.mxu0 0.0
    %2656 = vmatprep.subr.mxu0 0.0
    %2657 = vmatpush2.msra.mxu0 0.0
    %2658 = vmatprep.subr.mxu0 0.0
    %2659 = vmatpush2.msra.mxu0 0.0
    %2660 = vmatprep.subr.mxu0 0.0
    %2661 = vmatpush2.msra.mxu0 0.0
    %2662 = vmatprep.mubr.f32.mxu0 0.0
    %2663 = vmatmul.mubr.f32.gmra.mxu0 %v2579
    %v2664 = vpop.f32.mrf.mxu0
    %v2665 = vadd.f32 0.0, %v2664
    %v2666 = vpop.f32.mrf.mxu0
    %2667 = vmatprep.mubr.f32.mxu0 0.0
    %2668 = vmatmul.mubr.f32.gmra.mxu0 %v2580
    %v2669 = vpop.f32.mrf.mxu0
    %v2670 = vadd.f32 0.0, %v2669
    %v2671 = vpop.f32.mrf.mxu0
    %2672 = vmatprep.mubr.f32.mxu0 0.0
    %2673 = vmatmul.mubr.f32.gmra.mxu0 %v2581
    %v2674 = vpop.f32.mrf.mxu0
    %v2675 = vpop.f32.mrf.mxu0
    %2676 = vdwg.mxu0
    %v2677 = vadd.f32 %v2396, %v2665
    %v2678 = vadd.f32 %v2397, %v2670
    %v2679 = vld [vmem:[%s19] sm:$0x1]
    %v2681 = vlaneseq
    %v2682 = vshrl.u32 %v2681, 7
    %v2683 = vsub.s32 0, %v2682
    %v2684 = vrot.slane %v2679, %v2683
    %v2686 = vadd.f32 %v2677, %v2684
    %v2687 = vadd.f32 %v2678, %v2684
    %v2688 = vmul.f32 %v2686, 1.702
    %v2689 = vmul.f32 %v2687, 1.702
    %v2690 = vxor.u32 %v2688, 2147483648
    %v2691 = vxor.u32 %v2689, 2147483648
    %v2692 = vmul.f32 %v2690, 1.442695
    %v2693 = vpow.pop %v2692
    %v2694 = vmul.f32 %v2691, 1.442695
    %v2695 = vpow.pop %v2694
    %v2696 = vadd.f32 %v2693, 1.0
    %v2697 = vadd.f32 %v2695, 1.0
    %v2698 = vrcp.pop %v2696
    %v2699 = vmul.f32 1.0, %v2698
    %v2700 = vrcp.pop %v2697
    %v2701 = vmul.f32 1.0, %v2700
    %v2702 = vmul.f32 %v2686, %v2699
    %v2703 = vmul.f32 %v2687, %v2701
    %v2705 = vrot.slane %v2702, 1
    %v2708 = vrot.slane %v2703, 6
    %vm2710 = vcmask 1043456
    %v2711 = vsel %vm2710, %v2705, %v2708
    %v2712 = vld [vmem:[%s20] sm:$0xff]
    %v2713 = vld [vmem:[%s20 + $0x8] sm:$0xff]
    %v2714 = vld [vmem:[%s20 + $0x10] sm:$0xff]
    %v2715 = vld [vmem:[%s20 + $0x18] sm:$0xff]
    %v2716 = vld [vmem:[%s21] sm:$0x1]
    %v2718 = vlaneseq
    %v2719 = vshrl.u32 %v2718, 7
    %v2720 = vsub.s32 0, %v2719
    %v2721 = vrot.slane %v2716, %v2720
    %v2724 = vsel %vm398, %v2711, 0
    %v2727 = vsel %vm398, %v382, 0
    %v2730 = vsel %vm398, %v383, 0
    %v2733 = vsel %vm398, %v384, 0
    %v2736 = vsel %vm398, %v385, 0
    %v2739 = vsel %vm398, %v386, 0
    %v2742 = vsel %vm398, %v387, 0
    %v2745 = vsel %vm398, %v388, 0
    %v2748 = vsel %vm398, %v389, 0
    %v2751 = vsel %vm398, %v390, 0
    %v2754 = vsel %vm398, %v391, 0
    %v2757 = vsel %vm398, %v392, 0
    %v2760 = vsel %vm398, %v393, 0
    %v2763 = vsel %vm398, %v394, 0
    %v2766 = vsel %vm398, %v395, 0
    %v2769 = vsel %vm398, %v396, 0
    %v2772 = vsel %vm398, %v397, 0
    %2774 = vmatprep.subr.mxu0 0.0
    %2775 = vmatpush1.msra.mxu0 0.0
    %2776 = vmatprep.subr.mxu0 0.0
    %2777 = vmatpush1.msra.mxu0 0.0
    %2778 = vmatprep.subr.mxu0 0.0
    %2779 = vmatpush1.msra.mxu0 0.0
    %2780 = vmatprep.subr.mxu0 0.0
    %2781 = vmatpush1.msra.mxu0 0.0
    %2782 = vmatprep.subr.mxu0 0.0
    %2783 = vmatpush1.msra.mxu0 0.0
    %2784 = vmatprep.subr.mxu0 0.0
    %2785 = vmatpush1.msra.mxu0 0.0
    %2786 = vmatprep.subr.mxu0 0.0
    %2787 = vmatpush1.msra.mxu0 0.0
    %2788 = vmatprep.subr.mxu0 0.0
    %2789 = vmatpush1.msra.mxu0 0.0
    %2790 = vmatprep.subr.mxu0 0.0
    %2791 = vmatpush1.msra.mxu0 0.0
    %2792 = vmatprep.subr.mxu0 0.0
    %2793 = vmatpush1.msra.mxu0 0.0
    %2794 = vmatprep.subr.mxu0 0.0
    %2795 = vmatpush1.msra.mxu0 0.0
    %2796 = vmatprep.subr.mxu0 0.0
    %2797 = vmatpush1.msra.mxu0 0.0
    %2798 = vmatprep.subr.mxu0 0.0
    %2799 = vmatpush1.msra.mxu0 %v2715
    %2800 = vmatprep.subr.mxu0 0.0
    %2801 = vmatpush1.msra.mxu0 %v2714
    %2802 = vmatprep.subr.mxu0 0.0
    %2803 = vmatpush1.msra.mxu0 %v2713
    %2804 = vmatprep.subr.mxu0 0.0
    %2805 = vmatpush1.msra.mxu0 %v2712
    %2806 = vmatprep.subr.mxu0 0.0
    %2807 = vmatpush2.msra.mxu0 0.0
    %2808 = vmatprep.subr.mxu0 0.0
    %2809 = vmatpush2.msra.mxu0 0.0
    %2810 = vmatprep.subr.mxu0 0.0
    %2811 = vmatpush2.msra.mxu0 0.0
    %2812 = vmatprep.subr.mxu0 0.0
    %2813 = vmatpush2.msra.mxu0 0.0
    %2814 = vmatprep.subr.mxu0 0.0
    %2815 = vmatpush2.msra.mxu0 0.0
    %2816 = vmatprep.subr.mxu0 0.0
    %2817 = vmatpush2.msra.mxu0 0.0
    %2818 = vmatprep.subr.mxu0 0.0
    %2819 = vmatpush2.msra.mxu0 0.0
    %2820 = vmatprep.subr.mxu0 0.0
    %2821 = vmatpush2.msra.mxu0 0.0
    %2822 = vmatprep.subr.mxu0 0.0
    %2823 = vmatpush2.msra.mxu0 0.0
    %2824 = vmatprep.subr.mxu0 0.0
    %2825 = vmatpush2.msra.mxu0 0.0
    %2826 = vmatprep.subr.mxu0 0.0
    %2827 = vmatpush2.msra.mxu0 0.0
    %2828 = vmatprep.subr.mxu0 0.0
    %2829 = vmatpush2.msra.mxu0 0.0
    %2830 = vmatprep.subr.mxu0 0.0
    %2831 = vmatpush2.msra.mxu0 0.0
    %2832 = vmatprep.subr.mxu0 0.0
    %2833 = vmatpush2.msra.mxu0 0.0
    %2834 = vmatprep.subr.mxu0 0.0
    %2835 = vmatpush2.msra.mxu0 0.0
    %2836 = vmatprep.subr.mxu0 0.0
    %2837 = vmatpush2.msra.mxu0 0.0
    %2838 = vmatprep.mubr.f32.mxu0 0.0
    %2839 = vmatmul.mubr.f32.gmra.mxu0 %v2724
    %v2840 = vpop.f32.mrf.mxu0
    %v2841 = vadd.f32 %v2721, %v2840
    %v2842 = vpop.f32.mrf.mxu0
    %2843 = vmatprep.mubr.f32.mxu0 0.0
    %2844 = vmatmul.mubr.f32.gmra.mxu0 %v2727
    %v2845 = vpop.f32.mrf.mxu0
    %v2846 = vadd.f32 %v2721, %v2845
    %v2847 = vpop.f32.mrf.mxu0
    %2848 = vmatprep.mubr.f32.mxu0 0.0
    %2849 = vmatmul.mubr.f32.gmra.mxu0 %v2730
    %v2850 = vpop.f32.mrf.mxu0
    %v2851 = vadd.f32 %v2721, %v2850
    %v2852 = vpop.f32.mrf.mxu0
    %2853 = vmatprep.mubr.f32.mxu0 0.0
    %2854 = vmatmul.mubr.f32.gmra.mxu0 %v2733
    %v2855 = vpop.f32.mrf.mxu0
    %v2856 = vadd.f32 %v2721, %v2855
    %v2857 = vpop.f32.mrf.mxu0
    %2858 = vmatprep.mubr.f32.mxu0 0.0
    %2859 = vmatmul.mubr.f32.gmra.mxu0 %v2736
    %v2860 = vpop.f32.mrf.mxu0
    %v2861 = vadd.f32 %v2721, %v2860
    %v2862 = vpop.f32.mrf.mxu0
    %2863 = vmatprep.mubr.f32.mxu0 0.0
    %2864 = vmatmul.mubr.f32.gmra.mxu0 %v2739
    %v2865 = vpop.f32.mrf.mxu0
    %v2866 = vadd.f32 %v2721, %v2865
    %v2867 = vpop.f32.mrf.mxu0
    %2868 = vmatprep.mubr.f32.mxu0 0.0
    %2869 = vmatmul.mubr.f32.gmra.mxu0 %v2742
    %v2870 = vpop.f32.mrf.mxu0
    %v2871 = vadd.f32 %v2721, %v2870
    %v2872 = vpop.f32.mrf.mxu0
    %2873 = vmatprep.mubr.f32.mxu0 0.0
    %2874 = vmatmul.mubr.f32.gmra.mxu0 %v2745
    %v2875 = vpop.f32.mrf.mxu0
    %v2876 = vadd.f32 %v2721, %v2875
    %v2877 = vpop.f32.mrf.mxu0
    %2878 = vmatprep.mubr.f32.mxu0 0.0
    %2879 = vmatmul.mubr.f32.gmra.mxu0 %v2748
    %v2880 = vpop.f32.mrf.mxu0
    %v2881 = vadd.f32 %v2721, %v2880
    %v2882 = vpop.f32.mrf.mxu0
    %2883 = vmatprep.mubr.f32.mxu0 0.0
    %2884 = vmatmul.mubr.f32.gmra.mxu0 %v2751
    %v2885 = vpop.f32.mrf.mxu0
    %v2886 = vadd.f32 %v2721, %v2885
    %v2887 = vpop.f32.mrf.mxu0
    %2888 = vmatprep.mubr.f32.mxu0 0.0
    %2889 = vmatmul.mubr.f32.gmra.mxu0 %v2754
    %v2890 = vpop.f32.mrf.mxu0
    %v2891 = vadd.f32 %v2721, %v2890
    %v2892 = vpop.f32.mrf.mxu0
    %2893 = vmatprep.mubr.f32.mxu0 0.0
    %2894 = vmatmul.mubr.f32.gmra.mxu0 %v2757
    %v2895 = vpop.f32.mrf.mxu0
    %v2896 = vadd.f32 %v2721, %v2895
    %v2897 = vpop.f32.mrf.mxu0
    %2898 = vmatprep.mubr.f32.mxu0 0.0
    %2899 = vmatmul.mubr.f32.gmra.mxu0 %v2760
    %v2900 = vpop.f32.mrf.mxu0
    %v2901 = vadd.f32 %v2721, %v2900
    %v2902 = vpop.f32.mrf.mxu0
    %2903 = vmatprep.mubr.f32.mxu0 0.0
    %2904 = vmatmul.mubr.f32.gmra.mxu0 %v2763
    %v2905 = vpop.f32.mrf.mxu0
    %v2906 = vadd.f32 %v2721, %v2905
    %v2907 = vpop.f32.mrf.mxu0
    %2908 = vmatprep.mubr.f32.mxu0 0.0
    %2909 = vmatmul.mubr.f32.gmra.mxu0 %v2766
    %v2910 = vpop.f32.mrf.mxu0
    %v2911 = vadd.f32 %v2721, %v2910
    %v2912 = vpop.f32.mrf.mxu0
    %2913 = vmatprep.mubr.f32.mxu0 0.0
    %2914 = vmatmul.mubr.f32.gmra.mxu0 %v2769
    %v2915 = vpop.f32.mrf.mxu0
    %v2916 = vadd.f32 %v2721, %v2915
    %v2917 = vpop.f32.mrf.mxu0
    %2918 = vmatprep.mubr.f32.mxu0 0.0
    %2919 = vmatmul.mubr.f32.gmra.mxu0 %v2772
    %v2920 = vpop.f32.mrf.mxu0
    %v2921 = vadd.f32 %v2721, %v2920
    %v2922 = vpop.f32.mrf.mxu0
    %2923 = vdwg.mxu0
    %v2924 = vmul.f32 %v2841, 0.1
    %v2925 = vmul.f32 %v2846, 0.1
    %v2926 = vmul.f32 %v2851, 0.1
    %v2927 = vmul.f32 %v2856, 0.1
    %v2928 = vmul.f32 %v2861, 0.1
    %v2929 = vmul.f32 %v2866, 0.1
    %v2930 = vmul.f32 %v2871, 0.1
    %v2931 = vmul.f32 %v2876, 0.1
    %v2932 = vmul.f32 %v2881, 0.1
    %v2933 = vmul.f32 %v2886, 0.1
    %v2934 = vmul.f32 %v2891, 0.1
    %v2935 = vmul.f32 %v2896, 0.1
    %v2936 = vmul.f32 %v2901, 0.1
    %v2937 = vmul.f32 %v2906, 0.1
    %v2938 = vmul.f32 %v2911, 0.1
    %v2939 = vmul.f32 %v2916, 0.1
    %v2940 = vmul.f32 %v2921, 0.1
    %2941 = vst [vmem:[#allocation2] sm:$0xff] %v2924
    %2942 = vst [vmem:[#allocation2 + $0x8] sm:$0xff] %v2925
    %2943 = vst [vmem:[#allocation2 + $0x10] sm:$0xff] %v2926
    %2944 = vst [vmem:[#allocation2 + $0x18] sm:$0xff] %v2927
    %2945 = vst [vmem:[#allocation2 + $0x20] sm:$0xff] %v2928
    %2946 = vst [vmem:[#allocation2 + $0x28] sm:$0xff] %v2929
    %2947 = vst [vmem:[#allocation2 + $0x30] sm:$0xff] %v2930
    %2948 = vst [vmem:[#allocation2 + $0x38] sm:$0xff] %v2931
    %2949 = vst [vmem:[#allocation2 + $0x40] sm:$0xff] %v2932
    %2950 = vst [vmem:[#allocation2 + $0x48] sm:$0xff] %v2933
    %2951 = vst [vmem:[#allocation2 + $0x50] sm:$0xff] %v2934
    %2952 = vst [vmem:[#allocation2 + $0x58] sm:$0xff] %v2935
    %2953 = vst [vmem:[#allocation2 + $0x60] sm:$0xff] %v2936
    %2954 = vst [vmem:[#allocation2 + $0x68] sm:$0xff] %v2937
    %2955 = vst [vmem:[#allocation2 + $0x70] sm:$0xff] %v2938
    %2956 = vst [vmem:[#allocation2 + $0x78] sm:$0xff] %v2939
    %2957 = vst [vmem:[#allocation2 + $0x80] sm:$0xff] %v2940
    // Predicated region
    $region90: #{_lambda_.1} parent=1 // pred_check
      _
    $region91: #{_lambda_.1} parent=1 // pred_check_branch
      %2959 = sbr.rel (0) target = $region93
    $region92: #{_lambda_.1} parent=1 // pred_region
      %s2961 = ssub.s32 2176, 2176
      %2962 = vsyncadd [#allocation3], %s2961
      %s2963 = sshll.u32 [#allocation2], 4
      %s2964 = int_to_ptr.vmem [resolvable:$true] %s2963
      %2969 = dma.vmem_to_hbm [thread:$0]  %s2964, 2176, %s22, [#allocation3], 128, 128, 8
    $region93: #{_lambda_.1} parent=1 // pred_fallthru
      _
    // Predicated region
    $region94: #{_lambda_.1} parent=1 // pred_check
      _
    $region95: #{_lambda_.1} parent=1 // pred_check_branch
      %2971 = sbr.rel (0) target = $region97
    $region96: #{_lambda_.1} parent=1 // pred_region
      %2972 = dma.done [#allocation3], 2176
    $region97: #{_lambda_.1} parent=1 // pred_fallthru
      _
    %2973 = vsyncpa [#allocation3], 1

</llo_original>
